<compile_context>
chip_gen: v7x
topology: tpu7x:2x2x1
jax: 0.10.0
libtpu: 0.0.40
codegen_flags: <defaults>
</compile_context>

<pallas_src>
import functools
import math

import jax
import jax.numpy as jnp
from jax.experimental import pallas as pl
from jax.experimental.pallas import tpu as pltpu


LAYERS_CFG = ((64, 3, 1), (128, 4, 2), (256, 23, 2), (512, 3, 2))  # resnet101
_VMEM_LIMIT = 48 * 1024 * 1024   # headroom on v7x (64 MiB physical VMEM)


def _pick(full, cands):
    """Largest candidate tile that divides `full`, else the full extent."""
    if full <= cands[0]:
        return full
    for t in cands:
        if full % t == 0:
            return t
    return full


# ----------------------------- Pallas kernels ------------------------------

def _mm_kernel(x_ref, w_ref, b_ref, o_ref, acc_ref, *, relu):
    # (TM,TK)@(TK,TN) bf16 on the MXU, f32 accumulator, fused bias (+ReLU).
    k = pl.program_id(2)

    @pl.when(k == 0)
    def _():
        acc_ref[...] = jnp.zeros_like(acc_ref)

    acc_ref[...] += jnp.dot(x_ref[...], w_ref[...],
                            preferred_element_type=jnp.float32)

    @pl.when(k == pl.num_programs(2) - 1)
    def _():
        out = acc_ref[...] + b_ref[...]
        if relu:
            out = jnp.maximum(out, 0.0)
        o_ref[...] = out.astype(o_ref.dtype)


def _mm_res_kernel(x_ref, w_ref, b_ref, r_ref, o_ref, acc_ref):
    # Bottleneck tail: conv3 matmul + bias + residual add + ReLU, fused.
    k = pl.program_id(2)

    @pl.when(k == 0)
    def _():
        acc_ref[...] = jnp.zeros_like(acc_ref)

    acc_ref[...] += jnp.dot(x_ref[...], w_ref[...],
                            preferred_element_type=jnp.float32)

    @pl.when(k == pl.num_programs(2) - 1)
    def _():
        out = acc_ref[...] + b_ref[...] + r_ref[...].astype(jnp.float32)
        o_ref[...] = jnp.maximum(out, 0.0).astype(o_ref.dtype)


def _conv3x3_kernel(x_ref, w_ref, b_ref, o_ref, *, offsets, rows):
    # Stride-1 3x3 conv for one image: the padded activation is flattened to
    # (Hp*Wp, C) rows; tap (di,dj) is a static flat row-shift di*Wp+dj, so each
    # tap contribution is a contiguous row-slice matmul.  Output is "wide"
    # (rows = OH*Wp); the 2 junk columns per row are cropped by the wrapper.
    acc = jnp.zeros((rows, o_ref.shape[2]), jnp.float32)
    for t, off in enumerate(offsets):
        acc = acc + jnp.dot(x_ref[0, off:off + rows, :], w_ref[t],
                            preferred_element_type=jnp.float32)
    acc = acc + b_ref[...]
    o_ref[0] = jnp.maximum(acc, 0.0).astype(o_ref.dtype)


def _maxpool_kernel(x_ref, o_ref):
    # x_ref: (9, TM, C) stacked window taps -> elementwise max over axis 0.
    o_ref[...] = jnp.max(x_ref[...], axis=0)


# ------------------------------ kernel wrappers ------------------------------

def matmul_bias(x2d, w2d, bias, *, relu, residual=None):
    """bf16 (M,K)@(K,Cout) + bias [+ residual] [ReLU] -> bf16, tiled M/N/K."""
    M, K = x2d.shape
    Cout = w2d.shape[1]
    TM = _pick(M, (256, 128, 64, 32, 16, 8))
    TN = _pick(Cout, (256, 128))
    TK = _pick(K, (1024, 768, 512, 384, 256, 128))
    grid = (M // TM, Cout // TN, K // TK)

    in_specs = [
        pl.BlockSpec((TM, TK), lambda m, n, k: (m, k)),
        pl.BlockSpec((TK, TN), lambda m, n, k: (k, n)),
        pl.BlockSpec((1, TN), lambda m, n, k: (0, n)),
    ]
    args = [x2d, w2d, bias.reshape(1, Cout)]

    if residual is None:
        kernel = functools.partial(_mm_kernel, relu=relu)
    else:
        kernel = _mm_res_kernel
        in_specs.append(pl.BlockSpec((TM, TN), lambda m, n, k: (m, n)))
        args.append(residual)

    return pl.pallas_call(
        kernel,
        out_shape=jax.ShapeDtypeStruct((M, Cout), jnp.bfloat16),
        grid=grid,
        in_specs=in_specs,
        out_specs=pl.BlockSpec((TM, TN), lambda m, n, k: (m, n)),
        scratch_shapes=[pltpu.VMEM((TM, TN), jnp.float32)],
        compiler_params=pltpu.CompilerParams(
            dimension_semantics=("parallel", "parallel", "arbitrary"),
            vmem_limit_bytes=_VMEM_LIMIT,
        ),
    )(*args)


def conv3x3_bn_relu(x, w9, bias):
    """Stride-1 'same' 3x3 conv + bias + ReLU without HBM im2col."""
    N, H, W, C = x.shape
    Cout = w9.shape[2]
    Wp = W + 2
    rows = H * Wp                       # "wide" output rows (junk cols cropped)
    # pad 1 top / 2 bottom rows: the extra row keeps tap-shifted flat reads of
    # the junk columns in bounds (valid outputs never read it).
    xp = jnp.pad(x, ((0, 0), (1, 2), (1, 1), (0, 0)))
    L = (H + 3) * Wp
    xf = xp.reshape(N, L, C)
    offsets = tuple(di * Wp + dj for di in range(3) for dj in range(3))
    TN = _pick(Cout, (128,))

    out = pl.pallas_call(
        functools.partial(_conv3x3_kernel, offsets=offsets, rows=rows),
        out_shape=jax.ShapeDtypeStruct((N, rows, Cout), jnp.bfloat16),
        grid=(N, Cout // TN),
        in_specs=[
            pl.BlockSpec((1, L, C), lambda n, j: (n, 0, 0)),   # resident across j
            pl.BlockSpec((9, C, TN), lambda n, j: (0, 0, j)),
            pl.BlockSpec((1, TN), lambda n, j: (0, j)),
        ],
        out_specs=pl.BlockSpec((1, rows, TN), lambda n, j: (n, 0, j)),
        compiler_params=pltpu.CompilerParams(
            dimension_semantics=("parallel", "parallel"),
            vmem_limit_bytes=_VMEM_LIMIT,
        ),
    )(xf, w9, bias.reshape(1, Cout))

    # each wide row has Wp columns; keep only the OW = W valid ones.
    return out.reshape(N, H, Wp, Cout)[:, :, :W, :]


def _extract_patches(x, kh, kw, stride, pad):
    """im2col for NHWC x -> (N*OH*OW, kh*kw*C), patch ordering (kh, kw, c)."""
    N, H, W, C = x.shape
    if pad > 0:
        x = jnp.pad(x, ((0, 0), (pad, pad), (pad, pad), (0, 0)))
    OH = (H + 2 * pad - kh) // stride + 1
    OW = (W + 2 * pad - kw) // stride + 1
    cols = []
    for i in range(kh):
        for j in range(kw):
            cols.append(x[:, i:i + stride * OH:stride, j:j + stride * OW:stride, :])
    patches = jnp.concatenate(cols, axis=-1)
    return patches.reshape(N * OH * OW, kh * kw * C), (N, OH, OW)


def conv_im2col(x, w2d, bias, *, kh, kw, stride, pad, relu):
    patches, (N, OH, OW) = _extract_patches(x, kh, kw, stride, pad)
    out = matmul_bias(patches, w2d, bias, relu=relu)
    return out.reshape(N, OH, OW, w2d.shape[1])


def conv1x1_bn(x, w2d, bias, *, relu, stride=1, residual=None):
    if stride > 1:
        x = x[:, ::stride, ::stride, :]
    N, H, W, C = x.shape
    x2d = x.reshape(N * H * W, C)
    r2d = None if residual is None else residual.reshape(N * H * W, -1)
    out = matmul_bias(x2d, w2d, bias, relu=relu, residual=r2d)
    return out.reshape(N, H, W, w2d.shape[1])


def maxpool3x3_s2_p1(x):
    # TODO(synk): the 9 shifted taps are still stacked once in HBM (tiny for
    # this op); the reduction itself is gridded so VMEM stays bounded.
    N, H, W, C = x.shape
    xp = jnp.pad(x, ((0, 0), (1, 1), (1, 1), (0, 0)), constant_values=-jnp.inf)
    OH = (H + 2 - 3) // 2 + 1
    OW = (W + 2 - 3) // 2 + 1
    cols = [xp[:, i:i + 2 * OH:2, j:j + 2 * OW:2, :]
            for i in range(3) for j in range(3)]
    M = N * OH * OW
    stacked = jnp.stack(cols, axis=0).reshape(9, M, C)
    TM = _pick(M, (256, 128, 64, 32, 16, 8))
    out = pl.pallas_call(
        _maxpool_kernel,
        out_shape=jax.ShapeDtypeStruct((M, C), x.dtype),
        grid=(M // TM,),
        in_specs=[pl.BlockSpec((9, TM, C), lambda i: (0, i, 0))],
        out_specs=pl.BlockSpec((TM, C), lambda i: (i, 0)),
        compiler_params=pltpu.CompilerParams(
            dimension_semantics=("parallel",),
            vmem_limit_bytes=_VMEM_LIMIT,
        ),
    )(stacked)
    return out.reshape(N, OH, OW, C)


# --------------------------- parameter generation ---------------------------

class _ParamGen:
    def __init__(self, key):
        self._key = key
        self._n = 0

    def _next(self):
        self._n += 1
        return jax.random.fold_in(self._key, self._n)

    def _w(self, shape, fan_in):
        return jax.random.normal(self._next(), shape, jnp.float32) * math.sqrt(2.0 / fan_in)

    def _bn(self, c):
        # folded inference BatchNorm: y = x*scale + bias
        scale = 1.0 + 0.05 * jax.random.normal(self._next(), (c,), jnp.float32)
        bias = 0.05 * jax.random.normal(self._next(), (c,), jnp.float32)
        return scale, bias

    def conv1x1(self, cin, cout):
        w = self._w((cin, cout), cin)
        s, b = self._bn(cout)
        return (w * s).astype(jnp.bfloat16), b            # BN scale folded into w

    def conv3x3(self, cin, cout):
        # (9, cin, cout), tap index t = di*3 + dj (matches im2col ordering too)
        w = self._w((9, cin, cout), 9 * cin)
        s, b = self._bn(cout)
        return (w * s).astype(jnp.bfloat16), b

    def conv7x7(self, cin, cout):
        # im2col layout (kh*kw*cin, cout), patch ordering (kh, kw, c)
        w = self._w((7 * 7 * cin, cout), 7 * 7 * cin)
        s, b = self._bn(cout)
        return (w * s).astype(jnp.bfloat16), b


def make_resnet101_params(key):
    pg = _ParamGen(key)
    params = {}
    params["conv1_w"], params["conv1_b"] = pg.conv7x7(3, 64)
    inplanes = 64
    layers = []
    for planes, blocks, stride in LAYERS_CFG:
        layer = []
        for b in range(blocks):
            s = stride if b == 0 else 1
            p = {}
            p["w1"], p["b1"] = pg.conv1x1(inplanes, planes)
            p["w2"], p["b2"] = pg.conv3x3(planes, planes)
            p["w3"], p["b3"] = pg.conv1x1(planes, planes * 4)
            if s != 1 or inplanes != planes * 4:
                p["wd"], p["bd"] = pg.conv1x1(inplanes, planes * 4)
            layer.append(p)
            inplanes = planes * 4
        layers.append(layer)
    params["layers"] = layers
    return params


# ------------------------------ forward pass --------------------------------

@jax.jit
def _stem(x_nchw, w, b):
    # layout: input is NCHW (PyTorch); convert once to NHWC, drop to bf16.
    x = jnp.transpose(x_nchw, (0, 2, 3, 1)).astype(jnp.bfloat16)
    y = conv_im2col(x, w, b, kh=7, kw=7, stride=2, pad=3, relu=True)
    return maxpool3x3_s2_p1(y)


@functools.partial(jax.jit, static_argnames=("stride",))
def _bottleneck(x, p, *, stride):
    identity = x
    out = conv1x1_bn(x, p["w1"], p["b1"], relu=True)
    if stride == 1:
        out = conv3x3_bn_relu(out, p["w2"], p["b2"])
    else:
        # TODO(synk): the 3 stride-2 3x3 convs still use bf16 im2col (strided
        # tap slices don't fit the flat row-shift trick).
        w2d = p["w2"].reshape(-1, p["w2"].shape[-1])
        out = conv_im2col(out, w2d, p["b2"], kh=3, kw=3, stride=stride,
                          pad=1, relu=True)
    if "wd" in p:
        identity = conv1x1_bn(x, p["wd"], p["bd"], relu=False, stride=stride)
    return conv1x1_bn(out, p["w3"], p["b3"], relu=True, residual=identity)


def resnet_forward(params, x_nchw):
    x = _stem(x_nchw, params["conv1_w"], params["conv1_b"])
    for li, (_, blocks, stride) in enumerate(LAYERS_CFG):
        for bi in range(blocks):
            x = _bottleneck(x, params["layers"][li][bi],
                            stride=stride if bi == 0 else 1)
    N, H, W, C = x.shape
    # NCHW permute(0,2,3,1).view(B,-1,2048)  ==  NHWC reshape(B, H*W, 2048)
    return x.reshape(N, H * W, C).astype(jnp.float32)


# ---------------------------------- main -------------------------------------

if __name__ == "__main__":
    key = jax.random.PRNGKey(0)
    pkey, xkey = jax.random.split(key)

    params = make_resnet101_params(pkey)

    # small input consistent with the module: batch=2, 3 channels, 64x64 spatial
    x = jax.random.normal(xkey, (2, 3, 64, 64), jnp.float32)

    out = resnet_forward(params, x)
    out = jax.block_until_ready(out)

    # 64 -> conv1 /2 -> 32 -> maxpool /2 -> 16 -> layer2..4 /2 each -> 2
    assert out.shape == (2, 2 * 2, 2048), out.shape
    assert bool(jnp.all(jnp.isfinite(out)))
    print("KERNEL_OK")
</pallas_src>

<mosaic_0001>
module attributes {stable_mosaic.version = 11 : i64} {
  func.func @_mm_kernel(%arg0: i32, %arg1: i32, %arg2: i32, %arg3: memref<256x147xbf16, #tpu.memory_space<vmem>>, %arg4: memref<147x64xbf16, #tpu.memory_space<vmem>>, %arg5: memref<1x64xf32, #tpu.memory_space<vmem>>, %arg6: memref<256x64xbf16, #tpu.memory_space<vmem>>, %arg7: memref<256x64xf32, #tpu.memory_space<vmem>>) attributes {dimension_semantics = [#tpu.dimension_semantics<parallel>, #tpu.dimension_semantics<parallel>, #tpu.dimension_semantics<arbitrary>], iteration_bounds = array<i64: 8, 1, 1>, scalar_prefetch = 0 : i64, scratch_operands = 1 : i64, tpu.core_type = #tpu.core_type<tc>, window_params = [{transform_indices = @transform_0, window_bounds = array<i64: 256, 147>}, {transform_indices = @transform_1, window_bounds = array<i64: 147, 64>}, {transform_indices = @transform_2, window_bounds = array<i64: 1, 64>}, {transform_indices = @transform_3, window_bounds = array<i64: 256, 64>}]} {
    %c0_i32 = arith.constant 0 : i32
    %0 = arith.cmpi eq, %arg2, %c0_i32 : i32
    %1 = arith.extui %0 : i1 to i32
    %c0_i32_0 = arith.constant 0 : i32
    %2 = arith.cmpi ne, %1, %c0_i32_0 : i32
    scf.if %2 {
      %cst_10 = arith.constant 0.000000e+00 : f32
      %12 = vector.broadcast %cst_10 : f32 to vector<256x64xf32>
      %c0_11 = arith.constant 0 : index
      %c0_12 = arith.constant 0 : index
      %13 = vector.load %arg7[%c0_11, %c0_12] : memref<256x64xf32, #tpu.memory_space<vmem>>, vector<256x64xf32>
      tpu.vector_store %arg7[%c0_11, %c0_12], %12 {strides = array<i32>} : memref<256x64xf32, #tpu.memory_space<vmem>>, vector<256x64xf32>,
    } else {
    }
    %c0 = arith.constant 0 : index
    %c0_1 = arith.constant 0 : index
    %3 = vector.load %arg7[%c0, %c0_1] : memref<256x64xf32, #tpu.memory_space<vmem>>, vector<256x64xf32>
    %c0_2 = arith.constant 0 : index
    %c0_3 = arith.constant 0 : index
    %4 = vector.load %arg3[%c0_2, %c0_3] : memref<256x147xbf16, #tpu.memory_space<vmem>>, vector<256x147xbf16>
    %c0_4 = arith.constant 0 : index
    %c0_5 = arith.constant 0 : index
    %5 = vector.load %arg4[%c0_4, %c0_5] : memref<147x64xbf16, #tpu.memory_space<vmem>>, vector<147x64xbf16>
    %cst = arith.constant dense<0.000000e+00> : vector<256x64xf32>
    %6 = tpu.matmul %4, %5, %cst {dimension_numbers = #tpu.dot_dimension_numbers<[1], [0], [0], [1], [0, 0, 1, 1], [], []>} : vector<256x147xbf16>, vector<147x64xbf16>, vector<256x64xf32> -> vector<256x64xf32>
    %7 = arith.addf %3, %6 : vector<256x64xf32>
    %c0_6 = arith.constant 0 : index
    %c0_7 = arith.constant 0 : index
    %8 = vector.load %arg7[%c0_6, %c0_7] : memref<256x64xf32, #tpu.memory_space<vmem>>, vector<256x64xf32>
    tpu.vector_store %arg7[%c0_6, %c0_7], %7 {strides = array<i32>} : memref<256x64xf32, #tpu.memory_space<vmem>>, vector<256x64xf32>,
    %c0_i32_8 = arith.constant 0 : i32
    %9 = arith.cmpi eq, %arg2, %c0_i32_8 : i32
    %10 = arith.extui %9 : i1 to i32
    %c0_i32_9 = arith.constant 0 : i32
    %11 = arith.cmpi ne, %10, %c0_i32_9 : i32
    scf.if %11 {
      %c0_10 = arith.constant 0 : index
      %c0_11 = arith.constant 0 : index
      %12 = vector.load %arg7[%c0_10, %c0_11] : memref<256x64xf32, #tpu.memory_space<vmem>>, vector<256x64xf32>
      %c0_12 = arith.constant 0 : index
      %c0_13 = arith.constant 0 : index
      %13 = vector.load %arg5[%c0_12, %c0_13] : memref<1x64xf32, #tpu.memory_space<vmem>>, vector<1x64xf32>
      %14 = vector.broadcast %13 : vector<1x64xf32> to vector<256x64xf32>
      %15 = arith.addf %12, %14 : vector<256x64xf32>
      %cst_14 = arith.constant 0.000000e+00 : f32
      %16 = vector.broadcast %cst_14 : f32 to vector<256x64xf32>
      %17 = arith.maximumf %15, %16 : vector<256x64xf32>
      %18 = arith.truncf %17 : vector<256x64xf32> to vector<256x64xbf16>
      %c0_15 = arith.constant 0 : index
      %c0_16 = arith.constant 0 : index
      %19 = vector.load %arg6[%c0_15, %c0_16] : memref<256x64xbf16, #tpu.memory_space<vmem>>, vector<256x64xbf16>
      tpu.vector_store %arg6[%c0_15, %c0_16], %18 {strides = array<i32>} : memref<256x64xbf16, #tpu.memory_space<vmem>>, vector<256x64xbf16>,
    } else {
    }
    return
  }
  func.func @transform_0(%arg0: i32, %arg1: i32, %arg2: i32) -> (i32, i32) {
    %c0_i32 = arith.constant 0 : i32
    return %arg0, %arg2 : i32, i32
  }
  func.func @transform_1(%arg0: i32, %arg1: i32, %arg2: i32) -> (i32, i32) {
    %c0_i32 = arith.constant 0 : i32
    return %arg2, %arg1 : i32, i32
  }
  func.func @transform_2(%arg0: i32, %arg1: i32, %arg2: i32) -> (i32, i32) {
    %c0_i32 = arith.constant 0 : i32
    %c0_i32_0 = arith.constant 0 : i32
    return %c0_i32, %arg1 : i32, i32
  }
  func.func @transform_3(%arg0: i32, %arg1: i32, %arg2: i32) -> (i32, i32) {
    %c0_i32 = arith.constant 0 : i32
    return %arg0, %arg1 : i32, i32
  }
}

module attributes {stable_mosaic.version = 11 : i64} {
  func.func @_maxpool_kernel(%arg0: i32, %arg1: memref<9x256x64xbf16, #tpu.memory_space<vmem>>, %arg2: memref<256x64xbf16, #tpu.memory_space<vmem>>) attributes {dimension_semantics = [#tpu.dimension_semantics<parallel>], iteration_bounds = array<i64: 2>, scalar_prefetch = 0 : i64, scratch_operands = 0 : i64, tpu.core_type = #tpu.core_type<tc>, window_params = [{transform_indices = @transform_0, window_bounds = array<i64: 9, 256, 64>}, {transform_indices = @transform_1, window_bounds = array<i64: 256, 64>}]} {
    %c0 = arith.constant 0 : index
    %c0_0 = arith.constant 0 : index
    %c0_1 = arith.constant 0 : index
    %0 = vector.load %arg1[%c0, %c0_0, %c0_1] : memref<9x256x64xbf16, #tpu.memory_space<vmem>>, vector<9x256x64xbf16>
    %cst = arith.constant dense<0xFF80> : vector<256x64xbf16>
    %1 = vector.multi_reduction <maximumf>, %0, %cst [0] : vector<9x256x64xbf16> to vector<256x64xbf16>
    %c0_2 = arith.constant 0 : index
    %c0_3 = arith.constant 0 : index
    %2 = vector.load %arg2[%c0_2, %c0_3] : memref<256x64xbf16, #tpu.memory_space<vmem>>, vector<256x64xbf16>
    tpu.vector_store %arg2[%c0_2, %c0_3], %1 {strides = array<i32>} : memref<256x64xbf16, #tpu.memory_space<vmem>>, vector<256x64xbf16>,
    return
  }
  func.func @transform_0(%arg0: i32) -> (i32, i32, i32) {
    %c0_i32 = arith.constant 0 : i32
    %c0_i32_0 = arith.constant 0 : i32
    %c0_i32_1 = arith.constant 0 : i32
    return %c0_i32, %arg0, %c0_i32_0 : i32, i32, i32
  }
  func.func @transform_1(%arg0: i32) -> (i32, i32) {
    %c0_i32 = arith.constant 0 : i32
    %c0_i32_0 = arith.constant 0 : i32
    return %arg0, %c0_i32 : i32, i32
  }
}

</mosaic_0001>

<llo_original>
// kernel: _stem.2
$region0: #{_stem.2}
  #allocation0 [shape = 'u32[]', space=smem, size = 0x4, offset = 0x4, fixed_abs, tag = 'smem constant byte address 0x4 - core index']
  #allocation1 [shape = 'u32[144,128]{1,0:T(1,128)}', space=vmem, size = 0x12000, scoped, tag = 'internal scratch']
  #allocation2 [shape = 'f32[256,64]{1,0:T(8,128)}', space=vmem, size = 0x20000, scoped, tag = 'scratch operand']
  %s0 = inlined_call_operand.vmem [shape: bf16[2048,147], index: 0, kind: input, shape index: {}]
  %s1 = inlined_call_operand.vmem [shape: bf16[147,64], index: 1, kind: input, shape index: {}]
  %s2 = inlined_call_operand.vmem [shape: f32[1,64], index: 2, kind: input, shape index: {}]
  %s3 = inlined_call_operand.vmem [shape: bf16[2048,64], index: 3, kind: output, shape index: {}]
  %s4 = sld [smem:[#allocation0]]
  $region53: #{_stem.2} parent=0
    _
  %s6 = ssub.s32 1, %s4
  %s7 = scalar_select 0, %s6, %s4
  loop: start=0, step=1, limit=10
  $region2: #{_stem.2} parent=0 // loop_pre_header
    _
  $region3: #{_stem.2} parent=0 // loop_header
    %s9 = sphi 0, %s13
    %p10 = scmp.ge.s32.totalorder %s9, 10
    %s16 = sphi 0, %s35
    %s17 = sphi 0, %s31
    %s18 = sphi 0, %s27
    %s19 = sphi 0, %s16
    %s20 = sphi 0, %s17
    %s21 = sphi 0, %s18
    %s22 = sphi 0, %s19
    %s23 = sphi 0, %s20
    %s24 = sphi 0, %s21
    %s40 = sphi 0, %s42
    %s43 = sphi 0, %s40
    %s44 = sphi 0, %s43
    %s60 = sphi 0, %s44
    %s68 = sphi 0, %s70
    %s71 = sphi 0, %s68
    %s72 = sphi 0, %s71
    %s88 = sphi 0, %s72
    %s94 = sphi 0, %s96
    %s97 = sphi 0, %s94
    %s98 = sphi 0, %s97
    %s114 = sphi 0, %s98
    %s122 = sphi 0, %s124
    %s125 = sphi 0, %s122
    %s126 = sphi 0, %s125
    %s142 = sphi 0, %s126
  $region4: #{_stem.2} parent=0 // loop_header_branch
    %12 = sbr.rel (%p10) target = $region8
  $region5: #{_stem.2} parent=0 // loop_body
    %s14 = ssub.s32 %s9, 1
    %s15 = ssub.s32 %s9, 2
    %s25 = sadd.s32 1, %s18
    %p26 = scmp.ge.s32.totalorder %s25, 1
    %s27 = scalar_select %p26, 0, %s25
    %s28 = sadd.s32 1, %s17
    %s29 = scalar_select %p26, %s28, %s17
    %p30 = scmp.ge.s32.totalorder %s29, 1
    %s31 = scalar_select %p30, 0, %s29
    %s32 = sadd.s32 1, %s16
    %s33 = scalar_select %p30, %s32, %s16
    %p34 = scmp.ge.s32.totalorder %s33, 8
    %s35 = scalar_select %p34, 0, %s33
    %s36 = ssub.s32 %s16, %s35
    %s37 = ssub.s32 %s18, %s27
    %s38 = sor.u32 %s36, %s37
    %p39 = scmp.eq.s32.totalorder %s38, 0
    %s41 = sadd.s32 %s40, 1
    %s42 = scalar_select %p39, %s40, %s41
    %p45 = pneg %p39
    %p46 = scmp.eq.s32.totalorder %s9, 7
    %p47 = por %p45, %p46
    %p48 = scmp.ne.s32.totalorder %s40, %s43
    %p49 = scmp.eq.s32.totalorder %s9, 0
    %p50 = por %p48, %p49
    %p51 = scmp.ne.s32.totalorder %s40, %s43
    %p52 = scmp.eq.s32.totalorder %s14, 7
    %p53 = por %p51, %p52
    %p54 = scmp.ne.s32.totalorder %s43, %s44
    %p55 = scmp.eq.s32.totalorder %s14, 0
    %p56 = por %p54, %p55
    %p57 = scmp.ne.s32.totalorder %s43, %s44
    %p58 = scmp.eq.s32.totalorder %s15, 7
    %p59 = por %p57, %p58
    %p61 = scmp.ne.s32.totalorder %s44, %s60
    %p62 = scmp.eq.s32.totalorder %s15, 0
    %p63 = por %p61, %p62
    %s64 = ssub.s32 %s18, %s27
    %s65 = ssub.s32 %s17, %s31
    %s66 = sor.u32 %s64, %s65
    %p67 = scmp.eq.s32.totalorder %s66, 0
    %s69 = sadd.s32 %s68, 1
    %s70 = scalar_select %p67, %s68, %s69
    %p73 = pneg %p67
    %p74 = scmp.eq.s32.totalorder %s9, 7
    %p75 = por %p73, %p74
    %p76 = scmp.ne.s32.totalorder %s68, %s71
    %p77 = scmp.eq.s32.totalorder %s9, 0
    %p78 = por %p76, %p77
    %p79 = scmp.ne.s32.totalorder %s68, %s71
    %p80 = scmp.eq.s32.totalorder %s14, 7
    %p81 = por %p79, %p80
    %p82 = scmp.ne.s32.totalorder %s71, %s72
    %p83 = scmp.eq.s32.totalorder %s14, 0
    %p84 = por %p82, %p83
    %p85 = scmp.ne.s32.totalorder %s71, %s72
    %p86 = scmp.eq.s32.totalorder %s15, 7
    %p87 = por %p85, %p86
    %p89 = scmp.ne.s32.totalorder %s72, %s88
    %p90 = scmp.eq.s32.totalorder %s15, 0
    %p91 = por %p89, %p90
    %s92 = ssub.s32 %s17, %s31
    %p93 = scmp.eq.s32.totalorder %s92, 0
    %s95 = sadd.s32 %s94, 1
    %s96 = scalar_select %p93, %s94, %s95
    %p99 = pneg %p93
    %p100 = scmp.eq.s32.totalorder %s9, 7
    %p101 = por %p99, %p100
    %p102 = scmp.ne.s32.totalorder %s94, %s97
    %p103 = scmp.eq.s32.totalorder %s9, 0
    %p104 = por %p102, %p103
    %p105 = scmp.ne.s32.totalorder %s94, %s97
    %p106 = scmp.eq.s32.totalorder %s14, 7
    %p107 = por %p105, %p106
    %p108 = scmp.ne.s32.totalorder %s97, %s98
    %p109 = scmp.eq.s32.totalorder %s14, 0
    %p110 = por %p108, %p109
    %p111 = scmp.ne.s32.totalorder %s97, %s98
    %p112 = scmp.eq.s32.totalorder %s15, 7
    %p113 = por %p111, %p112
    %p115 = scmp.ne.s32.totalorder %s98, %s114
    %p116 = scmp.eq.s32.totalorder %s15, 0
    %p117 = por %p115, %p116
    %s118 = ssub.s32 %s16, %s35
    %s119 = ssub.s32 %s17, %s31
    %s120 = sor.u32 %s118, %s119
    %p121 = scmp.eq.s32.totalorder %s120, 0
    %s123 = sadd.s32 %s122, 1
    %s124 = scalar_select %p121, %s122, %s123
    %p127 = pneg %p121
    %p128 = scmp.eq.s32.totalorder %s9, 7
    %p129 = por %p127, %p128
    %p130 = scmp.ne.s32.totalorder %s122, %s125
    %p131 = scmp.eq.s32.totalorder %s9, 0
    %p132 = por %p130, %p131
    %p133 = scmp.ne.s32.totalorder %s122, %s125
    %p134 = scmp.eq.s32.totalorder %s14, 7
    %p135 = por %p133, %p134
    %p136 = scmp.ne.s32.totalorder %s125, %s126
    %p137 = scmp.eq.s32.totalorder %s14, 0
    %p138 = por %p136, %p137
    %p139 = scmp.ne.s32.totalorder %s125, %s126
    %p140 = scmp.eq.s32.totalorder %s15, 7
    %p141 = por %p139, %p140
    %p143 = scmp.ne.s32.totalorder %s126, %s142
    %p144 = scmp.eq.s32.totalorder %s15, 0
    %p145 = por %p143, %p144
    %p146 = scmp.le.s32.totalorder 1, %s9
    %p147 = scmp.lt.s32.totalorder %s9, 9
    %p148 = pnand %p146, %p147
    %p149 = pneg %p148
    // Predicated region
    $region9: #{_stem.2} parent=5 // pred_check
      _
    $region10: #{_stem.2} parent=5 // pred_check_branch
      %151 = sbr.rel (%p148) target = $region12
    $region11: #{_stem.2} parent=5 // pred_region
      %s152 = ssub.s32 %s9, 1
      // Predicated region
      $region13: #{_stem.2} parent=11 // pred_check
        %p153 = pneg %p84
      $region14: #{_stem.2} parent=11 // pred_check_branch
        %155 = sbr.rel (%p153) target = $region16
      $region15: #{_stem.2} parent=11 // pred_region
        %s156 = smul.u32 19, %s21
        %p157 = scmp.lt.s32.totalorder %s156, 18
        %s158 = scalar_select %p157, %s156, 18
        %p159 = scmp.lt.s32.totalorder %s20, 0
        %s160 = scalar_select %p159, %s20, 0
        %s161 = sadd.s32 %s160, %s158
        %s162 = smul.addr %s161, 4
        %s163 = scalar_lea.vmem %s1, %s162
        %s164 = smul.u32 19, %s21
      $region16: #{_stem.2} parent=11 // pred_fallthru
        _
      // Predicated region
      $region17: #{_stem.2} parent=11 // pred_check
        %p165 = pneg %p110
      $region18: #{_stem.2} parent=11 // pred_check_branch
        %167 = sbr.rel (%p165) target = $region20
      $region19: #{_stem.2} parent=11 // pred_region
        %p168 = scmp.lt.s32.totalorder %s20, 0
        %s169 = scalar_select %p168, %s20, 0
        %s170 = scalar_lea.vmem %s2, %s169
      $region20: #{_stem.2} parent=11 // pred_fallthru
        _
    $region12: #{_stem.2} parent=5 // pred_fallthru
      _
    %p171 = scmp.lt.s32.totalorder %s9, 8
    // Predicated region
    $region21: #{_stem.2} parent=5 // pred_check
      %p172 = pneg %p171
    $region22: #{_stem.2} parent=5 // pred_check_branch
      %174 = sbr.rel (%p172) target = $region24
    $region23: #{_stem.2} parent=5 // pred_region
      // Predicated region
      $region25: #{_stem.2} parent=23 // pred_check
        %p175 = pneg %p50
      $region26: #{_stem.2} parent=23 // pred_check_branch
        %177 = sbr.rel (%p175) target = $region28
      $region27: #{_stem.2} parent=23 // pred_region
        %s178 = smul.u32 32, %s16
        %s179 = smul.u32 2, %s18
        %p180 = scmp.lt.s32.totalorder %s178, 255
        %s181 = scalar_select %p180, %s178, 255
        %p182 = scmp.lt.s32.totalorder %s179, 1
        %s183 = scalar_select %p182, %s179, 1
        %s184 = smul.addr %s181, 2
        %s185 = sadd.s32 %s183, %s184
        %s186 = smul.addr %s185, 4
        %s187 = scalar_lea.vmem %s0, %s186
        %s188 = smul.u32 32, %s16
        %s189 = smul.u32 2, %s18
      $region28: #{_stem.2} parent=23 // pred_fallthru
        _
    $region24: #{_stem.2} parent=5 // pred_fallthru
      _
    %p190 = scmp.le.s32.totalorder 1, %s9
    %p191 = scmp.lt.s32.totalorder %s9, 9
    %p192 = pnand %p190, %p191
    %p193 = pneg %p192
    // Predicated region
    $region29: #{_stem.2} parent=5 // pred_check
      _
    $region30: #{_stem.2} parent=5 // pred_check_branch
      %195 = sbr.rel (%p192) target = $region32
    $region31: #{_stem.2} parent=5 // pred_region
      %s196 = ssub.s32 %s9, 1
      %s197 = smul.u32 32, %s19
      %s198 = smul.u32 2, %s21
      %p199 = scmp.lt.s32.totalorder %s197, 255
      %s200 = scalar_select %p199, %s197, 255
      %p201 = scmp.lt.s32.totalorder %s198, 1
      %s202 = scalar_select %p201, %s198, 1
      %s203 = smul.addr %s200, 2
      %s204 = sadd.s32 %s202, %s203
      %s205 = smul.addr %s204, 4
      %s206 = scalar_lea.vmem %s0, %s205
      %p207 = pneg %p56
      %p208 = pneg %p53
      %s209 = smul.u32 19, %s21
      %p210 = scmp.lt.s32.totalorder %s209, 18
      %s211 = scalar_select %p210, %s209, 18
      %p212 = scmp.lt.s32.totalorder %s20, 0
      %s213 = scalar_select %p212, %s20, 0
      %s214 = sadd.s32 %s213, %s211
      %s215 = smul.addr %s214, 4
      %s216 = scalar_lea.vmem %s1, %s215
      %p217 = pneg %p84
      %p218 = pneg %p81
      %p219 = scmp.lt.s32.totalorder %s20, 0
      %s220 = scalar_select %p219, %s20, 0
      %s221 = scalar_lea.vmem %s2, %s220
      %p222 = pneg %p110
      %p223 = pneg %p107
      %p224 = pneg %p138
      %p225 = pneg %p135
      %s226 = smul.u32 32, %s19
      %p227 = scmp.lt.s32.totalorder %s226, 255
      %s228 = scalar_select %p227, %s226, 255
      %p229 = scmp.lt.s32.totalorder %s20, 0
      %s230 = scalar_select %p229, %s20, 0
      %s231 = sadd.s32 %s230, %s228
      %s232 = smul.addr %s231, 4
      %s233 = scalar_lea.vmem %s3, %s232
      %s234 = smul.u32 32, %s19
      %s235 = smul.u32 2, %s21
      %p236 = scmp.lt.s32.totalorder %s234, 255
      %s237 = scalar_select %p236, %s234, 255
      %p238 = scmp.lt.s32.totalorder %s235, 1
      %s239 = scalar_select %p238, %s235, 1
      %s240 = smul.addr %s237, 2
      %s241 = sadd.s32 %s239, %s240
      %s242 = smul.addr %s241, 4
      %s243 = scalar_lea.vmem %s0, %s242
      %s244 = smul.u32 32, %s19
      %s245 = smul.u32 2, %s21
      %s246 = smul.u32 19, %s21
      %p247 = scmp.lt.s32.totalorder %s246, 18
      %s248 = scalar_select %p247, %s246, 18
      %p249 = scmp.lt.s32.totalorder %s20, 0
      %s250 = scalar_select %p249, %s20, 0
      %s251 = sadd.s32 %s250, %s248
      %s252 = smul.addr %s251, 4
      %s253 = scalar_lea.vmem %s1, %s252
      %s254 = smul.u32 19, %s21
      %p255 = scmp.lt.s32.totalorder %s20, 0
      %s256 = scalar_select %p255, %s20, 0
      %s257 = scalar_lea.vmem %s2, %s256
      %s258 = smul.u32 32, %s19
      %p259 = scmp.lt.s32.totalorder %s258, 255
      %s260 = scalar_select %p259, %s258, 255
      %p261 = scmp.lt.s32.totalorder %s20, 0
      %s262 = scalar_select %p261, %s20, 0
      %s263 = sadd.s32 %s262, %s260
      %s264 = smul.addr %s263, 4
      %s265 = scalar_lea.vmem %s3, %s264
      %s266 = smul.u32 32, %s19
      %p268 = scmp.eq.s32.totalorder %s21, 0
      // Predicated region
      $region33: #{_stem.2} parent=31 // pred_check
        %p269 = pneg %p268
      $region34: #{_stem.2} parent=31 // pred_check_branch
        %271 = sbr.rel (%p269) target = $region36
      $region35: #{_stem.2} parent=31 // pred_region
        %vm272 = vcmask 523264
        %273 = vst.msk [vmem:[#allocation2] sm:$0xff] %vm272, 0.0
        %274 = vst.msk [vmem:[#allocation2 + $0x8] sm:$0xff] %vm272, 0.0
        %275 = vst.msk [vmem:[#allocation2 + $0x10] sm:$0xff] %vm272, 0.0
        %276 = vst.msk [vmem:[#allocation2 + $0x18] sm:$0xff] %vm272, 0.0
        %277 = vst.msk [vmem:[#allocation2 + $0x20] sm:$0xff] %vm272, 0.0
        %278 = vst.msk [vmem:[#allocation2 + $0x28] sm:$0xff] %vm272, 0.0
        %279 = vst.msk [vmem:[#allocation2 + $0x30] sm:$0xff] %vm272, 0.0
        %280 = vst.msk [vmem:[#allocation2 + $0x38] sm:$0xff] %vm272, 0.0
        %281 = vst.msk [vmem:[#allocation2 + $0x40] sm:$0xff] %vm272, 0.0
        %282 = vst.msk [vmem:[#allocation2 + $0x48] sm:$0xff] %vm272, 0.0
        %283 = vst.msk [vmem:[#allocation2 + $0x50] sm:$0xff] %vm272, 0.0
        %284 = vst.msk [vmem:[#allocation2 + $0x58] sm:$0xff] %vm272, 0.0
        %285 = vst.msk [vmem:[#allocation2 + $0x60] sm:$0xff] %vm272, 0.0
        %286 = vst.msk [vmem:[#allocation2 + $0x68] sm:$0xff] %vm272, 0.0
        %287 = vst.msk [vmem:[#allocation2 + $0x70] sm:$0xff] %vm272, 0.0
        %288 = vst.msk [vmem:[#allocation2 + $0x78] sm:$0xff] %vm272, 0.0
        %289 = vst.msk [vmem:[#allocation2 + $0x80] sm:$0xff] %vm272, 0.0
        %290 = vst.msk [vmem:[#allocation2 + $0x88] sm:$0xff] %vm272, 0.0
        %291 = vst.msk [vmem:[#allocation2 + $0x90] sm:$0xff] %vm272, 0.0
        %292 = vst.msk [vmem:[#allocation2 + $0x98] sm:$0xff] %vm272, 0.0
        %293 = vst.msk [vmem:[#allocation2 + $0xa0] sm:$0xff] %vm272, 0.0
        %294 = vst.msk [vmem:[#allocation2 + $0xa8] sm:$0xff] %vm272, 0.0
        %295 = vst.msk [vmem:[#allocation2 + $0xb0] sm:$0xff] %vm272, 0.0
        %296 = vst.msk [vmem:[#allocation2 + $0xb8] sm:$0xff] %vm272, 0.0
        %297 = vst.msk [vmem:[#allocation2 + $0xc0] sm:$0xff] %vm272, 0.0
        %298 = vst.msk [vmem:[#allocation2 + $0xc8] sm:$0xff] %vm272, 0.0
        %299 = vst.msk [vmem:[#allocation2 + $0xd0] sm:$0xff] %vm272, 0.0
        %300 = vst.msk [vmem:[#allocation2 + $0xd8] sm:$0xff] %vm272, 0.0
        %301 = vst.msk [vmem:[#allocation2 + $0xe0] sm:$0xff] %vm272, 0.0
        %302 = vst.msk [vmem:[#allocation2 + $0xe8] sm:$0xff] %vm272, 0.0
        %303 = vst.msk [vmem:[#allocation2 + $0xf0] sm:$0xff] %vm272, 0.0
        %304 = vst.msk [vmem:[#allocation2 + $0xf8] sm:$0xff] %vm272, 0.0
      $region36: #{_stem.2} parent=31 // pred_fallthru
        _
      %v305 = vld [vmem:[#allocation2] sm:$0xff]
      %v306 = vld [vmem:[#allocation2 + $0x8] sm:$0xff]
      %v307 = vld [vmem:[#allocation2 + $0x10] sm:$0xff]
      %v308 = vld [vmem:[#allocation2 + $0x18] sm:$0xff]
      %v309 = vld [vmem:[#allocation2 + $0x20] sm:$0xff]
      %v310 = vld [vmem:[#allocation2 + $0x28] sm:$0xff]
      %v311 = vld [vmem:[#allocation2 + $0x30] sm:$0xff]
      %v312 = vld [vmem:[#allocation2 + $0x38] sm:$0xff]
      %v313 = vld [vmem:[#allocation2 + $0x40] sm:$0xff]
      %v314 = vld [vmem:[#allocation2 + $0x48] sm:$0xff]
      %v315 = vld [vmem:[#allocation2 + $0x50] sm:$0xff]
      %v316 = vld [vmem:[#allocation2 + $0x58] sm:$0xff]
      %v317 = vld [vmem:[#allocation2 + $0x60] sm:$0xff]
      %v318 = vld [vmem:[#allocation2 + $0x68] sm:$0xff]
      %v319 = vld [vmem:[#allocation2 + $0x70] sm:$0xff]
      %v320 = vld [vmem:[#allocation2 + $0x78] sm:$0xff]
      %v321 = vld [vmem:[#allocation2 + $0x80] sm:$0xff]
      %v322 = vld [vmem:[#allocation2 + $0x88] sm:$0xff]
      %v323 = vld [vmem:[#allocation2 + $0x90] sm:$0xff]
      %v324 = vld [vmem:[#allocation2 + $0x98] sm:$0xff]
      %v325 = vld [vmem:[#allocation2 + $0xa0] sm:$0xff]
      %v326 = vld [vmem:[#allocation2 + $0xa8] sm:$0xff]
      %v327 = vld [vmem:[#allocation2 + $0xb0] sm:$0xff]
      %v328 = vld [vmem:[#allocation2 + $0xb8] sm:$0xff]
      %v329 = vld [vmem:[#allocation2 + $0xc0] sm:$0xff]
      %v330 = vld [vmem:[#allocation2 + $0xc8] sm:$0xff]
      %v331 = vld [vmem:[#allocation2 + $0xd0] sm:$0xff]
      %v332 = vld [vmem:[#allocation2 + $0xd8] sm:$0xff]
      %v333 = vld [vmem:[#allocation2 + $0xe0] sm:$0xff]
      %v334 = vld [vmem:[#allocation2 + $0xe8] sm:$0xff]
      %v335 = vld [vmem:[#allocation2 + $0xf0] sm:$0xff]
      %v336 = vld [vmem:[#allocation2 + $0xf8] sm:$0xff]
      %v337 = vld [vmem:[%s243] sm:$0xff]
      %v338 = vld [vmem:[%s243 + $0x8] sm:$0xff]
      %v339 = vld [vmem:[%s243 + $0x10] sm:$0xff]
      %v340 = vld [vmem:[%s243 + $0x18] sm:$0xff]
      %v341 = vld [vmem:[%s243 + $0x20] sm:$0xff]
      %v342 = vld [vmem:[%s243 + $0x28] sm:$0xff]
      %v343 = vld [vmem:[%s243 + $0x30] sm:$0xff]
      %v344 = vld [vmem:[%s243 + $0x38] sm:$0xff]
      %v345 = vld [vmem:[%s243 + $0x40] sm:$0xff]
      %v346 = vld [vmem:[%s243 + $0x48] sm:$0xff]
      %v347 = vld [vmem:[%s243 + $0x50] sm:$0xff]
      %v348 = vld [vmem:[%s243 + $0x58] sm:$0xff]
      %v349 = vld [vmem:[%s243 + $0x60] sm:$0xff]
      %v350 = vld [vmem:[%s243 + $0x68] sm:$0xff]
      %v351 = vld [vmem:[%s243 + $0x70] sm:$0xff]
      %v352 = vld [vmem:[%s243 + $0x78] sm:$0xff]
      %v353 = vld [vmem:[%s243 + $0x80] sm:$0xff]
      %v354 = vld [vmem:[%s243 + $0x88] sm:$0xff]
      %v355 = vld [vmem:[%s243 + $0x90] sm:$0xff]
      %v356 = vld [vmem:[%s243 + $0x98] sm:$0xff]
      %v357 = vld [vmem:[%s243 + $0xa0] sm:$0xff]
      %v358 = vld [vmem:[%s243 + $0xa8] sm:$0xff]
      %v359 = vld [vmem:[%s243 + $0xb0] sm:$0xff]
      %v360 = vld [vmem:[%s243 + $0xb8] sm:$0xff]
      %v361 = vld [vmem:[%s243 + $0xc0] sm:$0xff]
      %v362 = vld [vmem:[%s243 + $0xc8] sm:$0xff]
      %v363 = vld [vmem:[%s243 + $0xd0] sm:$0xff]
      %v364 = vld [vmem:[%s243 + $0xd8] sm:$0xff]
      %v365 = vld [vmem:[%s243 + $0xe0] sm:$0xff]
      %v366 = vld [vmem:[%s243 + $0xe8] sm:$0xff]
      %v367 = vld [vmem:[%s243 + $0xf0] sm:$0xff]
      %v368 = vld [vmem:[%s243 + $0xf8] sm:$0xff]
      %v369 = vld [vmem:[%s253] sm:$0xf]
      %v370 = vld [vmem:[%s253 + $0x4] sm:$0xf]
      %v371 = vld [vmem:[%s253 + $0x8] sm:$0xf]
      %v372 = vld [vmem:[%s253 + $0xc] sm:$0xf]
      %v373 = vld [vmem:[%s253 + $0x10] sm:$0xf]
      %v374 = vld [vmem:[%s253 + $0x14] sm:$0xf]
      %v375 = vld [vmem:[%s253 + $0x18] sm:$0xf]
      %v376 = vld [vmem:[%s253 + $0x1c] sm:$0xf]
      %v377 = vld [vmem:[%s253 + $0x20] sm:$0xf]
      %v378 = vld [vmem:[%s253 + $0x24] sm:$0xf]
      %v379 = vld [vmem:[%s253 + $0x28] sm:$0xf]
      %v380 = vld [vmem:[%s253 + $0x2c] sm:$0xf]
      %v381 = vld [vmem:[%s253 + $0x30] sm:$0xf]
      %v382 = vld [vmem:[%s253 + $0x34] sm:$0xf]
      %v383 = vld [vmem:[%s253 + $0x38] sm:$0xf]
      %v384 = vld [vmem:[%s253 + $0x3c] sm:$0xf]
      %v385 = vld [vmem:[%s253 + $0x40] sm:$0xf]
      %v386 = vld [vmem:[%s253 + $0x44] sm:$0xf]
      %v387 = vld [vmem:[%s253 + $0x48] sm:$0x3]
      %v420 = vunpack.c.l.b16 %v337
      %v421 = vunpack.c.h.b16 %v337
      %v422 = vunpack.c.l.b16 %v338
      %v423 = vunpack.c.h.b16 %v338
      %v424 = vunpack.c.l.b16 %v339
      %v425 = vunpack.c.h.b16 %v339
      %v426 = vunpack.c.l.b16 %v340
      %v427 = vunpack.c.h.b16 %v340
      %v428 = vunpack.c.l.b16 %v341
      %v429 = vunpack.c.h.b16 %v341
      %v430 = vunpack.c.l.b16 %v342
      %v431 = vunpack.c.h.b16 %v342
      %v432 = vunpack.c.l.b16 %v343
      %v433 = vunpack.c.h.b16 %v343
      %v434 = vunpack.c.l.b16 %v344
      %v435 = vunpack.c.h.b16 %v344
      %v436 = vunpack.c.l.b16 %v345
      %v437 = vunpack.c.h.b16 %v345
      %v438 = vunpack.c.l.b16 %v346
      %v439 = vunpack.c.h.b16 %v346
      %v440 = vunpack.c.l.b16 %v347
      %v441 = vunpack.c.h.b16 %v347
      %v442 = vunpack.c.l.b16 %v348
      %v443 = vunpack.c.h.b16 %v348
      %v444 = vunpack.c.l.b16 %v349
      %v445 = vunpack.c.h.b16 %v349
      %v446 = vunpack.c.l.b16 %v350
      %v447 = vunpack.c.h.b16 %v350
      %v448 = vunpack.c.l.b16 %v351
      %v449 = vunpack.c.h.b16 %v351
      %v450 = vunpack.c.l.b16 %v352
      %v451 = vunpack.c.h.b16 %v352
      %v452 = vunpack.c.l.b16 %v353
      %v453 = vunpack.c.h.b16 %v353
      %v454 = vunpack.c.l.b16 %v354
      %v455 = vunpack.c.h.b16 %v354
      %v456 = vunpack.c.l.b16 %v355
      %v457 = vunpack.c.h.b16 %v355
      %v458 = vunpack.c.l.b16 %v356
      %v459 = vunpack.c.h.b16 %v356
      %v460 = vunpack.c.l.b16 %v357
      %v461 = vunpack.c.h.b16 %v357
      %v462 = vunpack.c.l.b16 %v358
      %v463 = vunpack.c.h.b16 %v358
      %v464 = vunpack.c.l.b16 %v359
      %v465 = vunpack.c.h.b16 %v359
      %v466 = vunpack.c.l.b16 %v360
      %v467 = vunpack.c.h.b16 %v360
      %v468 = vunpack.c.l.b16 %v361
      %v469 = vunpack.c.h.b16 %v361
      %v470 = vunpack.c.l.b16 %v362
      %v471 = vunpack.c.h.b16 %v362
      %v472 = vunpack.c.l.b16 %v363
      %v473 = vunpack.c.h.b16 %v363
      %v474 = vunpack.c.l.b16 %v364
      %v475 = vunpack.c.h.b16 %v364
      %v476 = vunpack.c.l.b16 %v365
      %v477 = vunpack.c.h.b16 %v365
      %v478 = vunpack.c.l.b16 %v366
      %v479 = vunpack.c.h.b16 %v366
      %v480 = vunpack.c.l.b16 %v367
      %v481 = vunpack.c.h.b16 %v367
      %v482 = vunpack.c.l.b16 %v368
      %v483 = vunpack.c.h.b16 %v368
      %v484 = vpack.c.b16 %v422, %v420
      %v485 = vpack.c.b16 %v423, %v421
      %v486 = vpack.c.b16 %v426, %v424
      %v487 = vpack.c.b16 %v427, %v425
      %v488 = vpack.c.b16 %v430, %v428
      %v489 = vpack.c.b16 %v431, %v429
      %v490 = vpack.c.b16 %v434, %v432
      %v491 = vpack.c.b16 %v435, %v433
      %v492 = vpack.c.b16 %v438, %v436
      %v493 = vpack.c.b16 %v439, %v437
      %v494 = vpack.c.b16 %v442, %v440
      %v495 = vpack.c.b16 %v443, %v441
      %v496 = vpack.c.b16 %v446, %v444
      %v497 = vpack.c.b16 %v447, %v445
      %v498 = vpack.c.b16 %v450, %v448
      %v499 = vpack.c.b16 %v451, %v449
      %v500 = vpack.c.b16 %v454, %v452
      %v501 = vpack.c.b16 %v455, %v453
      %v502 = vpack.c.b16 %v458, %v456
      %v503 = vpack.c.b16 %v459, %v457
      %v504 = vpack.c.b16 %v462, %v460
      %v505 = vpack.c.b16 %v463, %v461
      %v506 = vpack.c.b16 %v466, %v464
      %v507 = vpack.c.b16 %v467, %v465
      %v508 = vpack.c.b16 %v470, %v468
      %v509 = vpack.c.b16 %v471, %v469
      %v510 = vpack.c.b16 %v474, %v472
      %v511 = vpack.c.b16 %v475, %v473
      %v512 = vpack.c.b16 %v478, %v476
      %v513 = vpack.c.b16 %v479, %v477
      %v514 = vpack.c.b16 %v482, %v480
      %v515 = vpack.c.b16 %v483, %v481
      %v551 = vunpack.c.l.b16 %v369
      %v552 = vunpack.c.l.b16 %v370
      %v553 = vunpack.c.l.b16 %v371
      %v554 = vunpack.c.l.b16 %v372
      %v555 = vunpack.c.l.b16 %v373
      %v556 = vunpack.c.l.b16 %v374
      %v557 = vunpack.c.l.b16 %v375
      %v558 = vunpack.c.l.b16 %v376
      %v559 = vunpack.c.l.b16 %v377
      %v560 = vunpack.c.l.b16 %v378
      %v561 = vunpack.c.l.b16 %v379
      %v562 = vunpack.c.l.b16 %v380
      %v563 = vunpack.c.l.b16 %v381
      %v564 = vunpack.c.l.b16 %v382
      %v565 = vunpack.c.l.b16 %v383
      %v566 = vunpack.c.l.b16 %v384
      %v567 = vunpack.c.l.b16 %v385
      %v568 = vunpack.c.l.b16 %v386
      %v569 = vunpack.c.l.b16 %v387
      %v570 = vpack.c.b16 %v552, %v551
      %v571 = vpack.c.b16 %v554, %v553
      %v572 = vpack.c.b16 %v556, %v555
      %v573 = vpack.c.b16 %v558, %v557
      %v574 = vpack.c.b16 %v560, %v559
      %v575 = vpack.c.b16 %v562, %v561
      %v576 = vpack.c.b16 %v564, %v563
      %v577 = vpack.c.b16 %v566, %v565
      %v578 = vpack.c.b16 %v568, %v567
      %v579 = vpack.c.b16 %v569, %v569
      %vm589 = vcmask 154624
      %v591 = vsel %vm589, %v485, 0
      %v594 = vsel %vm589, %v487, 0
      %v597 = vsel %vm589, %v489, 0
      %v600 = vsel %vm589, %v491, 0
      %v603 = vsel %vm589, %v493, 0
      %v606 = vsel %vm589, %v495, 0
      %v609 = vsel %vm589, %v497, 0
      %v612 = vsel %vm589, %v499, 0
      %v615 = vsel %vm589, %v501, 0
      %v618 = vsel %vm589, %v503, 0
      %v621 = vsel %vm589, %v505, 0
      %v624 = vsel %vm589, %v507, 0
      %v627 = vsel %vm589, %v509, 0
      %v630 = vsel %vm589, %v511, 0
      %v633 = vsel %vm589, %v513, 0
      %v636 = vsel %vm589, %v515, 0
      %vm638 = vcmask 1040384
      %vm639 = vcmask 1041408
      %v640 = vsel %vm638, 4294967295, 65535
      %v641 = vsel %vm639, %v640, 0
      %v643 = vand.u32 %v579, %v641
      %645 = vmatprep.subr.bf16.mxu0 0
      %646 = vmatpush1.bf16.msra.mxu0 %v570
      %647 = vmatprep.subr.bf16.mxu0 0
      %648 = vmatpush1.bf16.msra.mxu0 %v571
      %649 = vmatprep.subr.bf16.mxu0 0
      %650 = vmatpush1.bf16.msra.mxu0 %v572
      %651 = vmatprep.subr.bf16.mxu0 0
      %652 = vmatpush1.bf16.msra.mxu0 %v573
      %653 = vmatprep.subr.bf16.mxu0 0
      %654 = vmatpush1.bf16.msra.mxu0 %v574
      %655 = vmatprep.subr.bf16.mxu0 0
      %656 = vmatpush1.bf16.msra.mxu0 %v575
      %657 = vmatprep.subr.bf16.mxu0 0
      %658 = vmatpush1.bf16.msra.mxu0 %v576
      %659 = vmatprep.subr.bf16.mxu0 0
      %660 = vmatpush1.bf16.msra.mxu0 %v577
      %661 = vmatprep.subr.bf16.mxu0 0
      %662 = vmatpush1.bf16.msra.mxu0 %v578
      %663 = vmatprep.subr.bf16.mxu0 0
      %664 = vmatpush1.bf16.msra.mxu0 %v643
      %665 = vmatprep.subr.bf16.mxu0 0
      %666 = vmatpush1.bf16.msra.mxu0 0
      %667 = vmatprep.subr.bf16.mxu0 0
      %668 = vmatpush1.bf16.msra.mxu0 0
      %669 = vmatprep.subr.bf16.mxu0 0
      %670 = vmatpush1.bf16.msra.mxu0 0
      %671 = vmatprep.subr.bf16.mxu0 0
      %672 = vmatpush1.bf16.msra.mxu0 0
      %673 = vmatprep.subr.bf16.mxu0 0
      %674 = vmatpush1.bf16.msra.mxu0 0
      %675 = vmatprep.subr.bf16.mxu0 0
      %676 = vmatpush1.bf16.msra.mxu0 0
      %677 = vmatprep.mubr.bf16.mxu0 %v591
      %678 = vmatmul.mubr.bf16.gmra.mrb[0].mxu0 %v484
      %v679 = vpop.f32.mrb[0].mxu0
      %v680 = vadd.f32 0.0, %v679
      %v681 = vpop.f32.mrb[0].mxu0
      %v682 = vpop.f32.mrb[0].mxu0
      %v683 = vadd.f32 0.0, %v682
      %v684 = vpop.f32.mrb[0].mxu0
      %685 = vmatprep.mubr.bf16.mxu0 %v594
      %686 = vmatmul.mubr.bf16.gmra.mrb[0].mxu0 %v486
      %v687 = vpop.f32.mrb[0].mxu0
      %v688 = vadd.f32 0.0, %v687
      %v689 = vpop.f32.mrb[0].mxu0
      %v690 = vpop.f32.mrb[0].mxu0
      %v691 = vadd.f32 0.0, %v690
      %v692 = vpop.f32.mrb[0].mxu0
      %693 = vmatprep.mubr.bf16.mxu0 %v597
      %694 = vmatmul.mubr.bf16.gmra.mrb[0].mxu0 %v488
      %v695 = vpop.f32.mrb[0].mxu0
      %v696 = vadd.f32 0.0, %v695
      %v697 = vpop.f32.mrb[0].mxu0
      %v698 = vpop.f32.mrb[0].mxu0
      %v699 = vadd.f32 0.0, %v698
      %v700 = vpop.f32.mrb[0].mxu0
      %701 = vmatprep.mubr.bf16.mxu0 %v600
      %702 = vmatmul.mubr.bf16.gmra.mrb[0].mxu0 %v490
      %v703 = vpop.f32.mrb[0].mxu0
      %v704 = vadd.f32 0.0, %v703
      %v705 = vpop.f32.mrb[0].mxu0
      %v706 = vpop.f32.mrb[0].mxu0
      %v707 = vadd.f32 0.0, %v706
      %v708 = vpop.f32.mrb[0].mxu0
      %709 = vmatprep.mubr.bf16.mxu0 %v603
      %710 = vmatmul.mubr.bf16.gmra.mrb[0].mxu0 %v492
      %v711 = vpop.f32.mrb[0].mxu0
      %v712 = vadd.f32 0.0, %v711
      %v713 = vpop.f32.mrb[0].mxu0
      %v714 = vpop.f32.mrb[0].mxu0
      %v715 = vadd.f32 0.0, %v714
      %v716 = vpop.f32.mrb[0].mxu0
      %717 = vmatprep.mubr.bf16.mxu0 %v606
      %718 = vmatmul.mubr.bf16.gmra.mrb[0].mxu0 %v494
      %v719 = vpop.f32.mrb[0].mxu0
      %v720 = vadd.f32 0.0, %v719
      %v721 = vpop.f32.mrb[0].mxu0
      %v722 = vpop.f32.mrb[0].mxu0
      %v723 = vadd.f32 0.0, %v722
      %v724 = vpop.f32.mrb[0].mxu0
      %725 = vmatprep.mubr.bf16.mxu0 %v609
      %726 = vmatmul.mubr.bf16.gmra.mrb[0].mxu0 %v496
      %v727 = vpop.f32.mrb[0].mxu0
      %v728 = vadd.f32 0.0, %v727
      %v729 = vpop.f32.mrb[0].mxu0
      %v730 = vpop.f32.mrb[0].mxu0
      %v731 = vadd.f32 0.0, %v730
      %v732 = vpop.f32.mrb[0].mxu0
      %733 = vmatprep.mubr.bf16.mxu0 %v612
      %734 = vmatmul.mubr.bf16.gmra.mrb[0].mxu0 %v498
      %v735 = vpop.f32.mrb[0].mxu0
      %v736 = vadd.f32 0.0, %v735
      %v737 = vpop.f32.mrb[0].mxu0
      %v738 = vpop.f32.mrb[0].mxu0
      %v739 = vadd.f32 0.0, %v738
      %v740 = vpop.f32.mrb[0].mxu0
      %741 = vmatprep.mubr.bf16.mxu0 %v615
      %742 = vmatmul.mubr.bf16.gmra.mrb[0].mxu0 %v500
      %v743 = vpop.f32.mrb[0].mxu0
      %v744 = vadd.f32 0.0, %v743
      %v745 = vpop.f32.mrb[0].mxu0
      %v746 = vpop.f32.mrb[0].mxu0
      %v747 = vadd.f32 0.0, %v746
      %v748 = vpop.f32.mrb[0].mxu0
      %749 = vmatprep.mubr.bf16.mxu0 %v618
      %750 = vmatmul.mubr.bf16.gmra.mrb[0].mxu0 %v502
      %v751 = vpop.f32.mrb[0].mxu0
      %v752 = vadd.f32 0.0, %v751
      %v753 = vpop.f32.mrb[0].mxu0
      %v754 = vpop.f32.mrb[0].mxu0
      %v755 = vadd.f32 0.0, %v754
      %v756 = vpop.f32.mrb[0].mxu0
      %757 = vmatprep.mubr.bf16.mxu0 %v621
      %758 = vmatmul.mubr.bf16.gmra.mrb[0].mxu0 %v504
      %v759 = vpop.f32.mrb[0].mxu0
      %v760 = vadd.f32 0.0, %v759
      %v761 = vpop.f32.mrb[0].mxu0
      %v762 = vpop.f32.mrb[0].mxu0
      %v763 = vadd.f32 0.0, %v762
      %v764 = vpop.f32.mrb[0].mxu0
      %765 = vmatprep.mubr.bf16.mxu0 %v624
      %766 = vmatmul.mubr.bf16.gmra.mrb[0].mxu0 %v506
      %v767 = vpop.f32.mrb[0].mxu0
      %v768 = vadd.f32 0.0, %v767
      %v769 = vpop.f32.mrb[0].mxu0
      %v770 = vpop.f32.mrb[0].mxu0
      %v771 = vadd.f32 0.0, %v770
      %v772 = vpop.f32.mrb[0].mxu0
      %773 = vmatprep.mubr.bf16.mxu0 %v627
      %774 = vmatmul.mubr.bf16.gmra.mrb[0].mxu0 %v508
      %v775 = vpop.f32.mrb[0].mxu0
      %v776 = vadd.f32 0.0, %v775
      %v777 = vpop.f32.mrb[0].mxu0
      %v778 = vpop.f32.mrb[0].mxu0
      %v779 = vadd.f32 0.0, %v778
      %v780 = vpop.f32.mrb[0].mxu0
      %781 = vmatprep.mubr.bf16.mxu0 %v630
      %782 = vmatmul.mubr.bf16.gmra.mrb[0].mxu0 %v510
      %v783 = vpop.f32.mrb[0].mxu0
      %v784 = vadd.f32 0.0, %v783
      %v785 = vpop.f32.mrb[0].mxu0
      %v786 = vpop.f32.mrb[0].mxu0
      %v787 = vadd.f32 0.0, %v786
      %v788 = vpop.f32.mrb[0].mxu0
      %789 = vmatprep.mubr.bf16.mxu0 %v633
      %790 = vmatmul.mubr.bf16.gmra.mrb[0].mxu0 %v512
      %v791 = vpop.f32.mrb[0].mxu0
      %v792 = vadd.f32 0.0, %v791
      %v793 = vpop.f32.mrb[0].mxu0
      %v794 = vpop.f32.mrb[0].mxu0
      %v795 = vadd.f32 0.0, %v794
      %v796 = vpop.f32.mrb[0].mxu0
      %797 = vmatprep.mubr.bf16.mxu0 %v636
      %798 = vmatmul.mubr.bf16.gmra.mrb[0].mxu0 %v514
      %v799 = vpop.f32.mrb[0].mxu0
      %v800 = vadd.f32 0.0, %v799
      %v801 = vpop.f32.mrb[0].mxu0
      %v802 = vpop.f32.mrb[0].mxu0
      %v803 = vadd.f32 0.0, %v802
      %v804 = vpop.f32.mrb[0].mxu0
      %805 = vdwg.mxu0
      %v806 = vadd.f32 %v305, %v680
      %v807 = vadd.f32 %v306, %v683
      %v808 = vadd.f32 %v307, %v688
      %v809 = vadd.f32 %v308, %v691
      %v810 = vadd.f32 %v309, %v696
      %v811 = vadd.f32 %v310, %v699
      %v812 = vadd.f32 %v311, %v704
      %v813 = vadd.f32 %v312, %v707
      %v814 = vadd.f32 %v313, %v712
      %v815 = vadd.f32 %v314, %v715
      %v816 = vadd.f32 %v315, %v720
      %v817 = vadd.f32 %v316, %v723
      %v818 = vadd.f32 %v317, %v728
      %v819 = vadd.f32 %v318, %v731
      %v820 = vadd.f32 %v319, %v736
      %v821 = vadd.f32 %v320, %v739
      %v822 = vadd.f32 %v321, %v744
      %v823 = vadd.f32 %v322, %v747
      %v824 = vadd.f32 %v323, %v752
      %v825 = vadd.f32 %v324, %v755
      %v826 = vadd.f32 %v325, %v760
      %v827 = vadd.f32 %v326, %v763
      %v828 = vadd.f32 %v327, %v768
      %v829 = vadd.f32 %v328, %v771
      %v830 = vadd.f32 %v329, %v776
      %v831 = vadd.f32 %v330, %v779
      %v832 = vadd.f32 %v331, %v784
      %v833 = vadd.f32 %v332, %v787
      %v834 = vadd.f32 %v333, %v792
      %v835 = vadd.f32 %v334, %v795
      %v836 = vadd.f32 %v335, %v800
      %v837 = vadd.f32 %v336, %v803
      %vm838 = vcmask 523264
      %839 = vst.msk [vmem:[#allocation2] sm:$0xff] %vm838, %v806
      %840 = vst.msk [vmem:[#allocation2 + $0x8] sm:$0xff] %vm838, %v807
      %841 = vst.msk [vmem:[#allocation2 + $0x10] sm:$0xff] %vm838, %v808
      %842 = vst.msk [vmem:[#allocation2 + $0x18] sm:$0xff] %vm838, %v809
      %843 = vst.msk [vmem:[#allocation2 + $0x20] sm:$0xff] %vm838, %v810
      %844 = vst.msk [vmem:[#allocation2 + $0x28] sm:$0xff] %vm838, %v811
      %845 = vst.msk [vmem:[#allocation2 + $0x30] sm:$0xff] %vm838, %v812
      %846 = vst.msk [vmem:[#allocation2 + $0x38] sm:$0xff] %vm838, %v813
      %847 = vst.msk [vmem:[#allocation2 + $0x40] sm:$0xff] %vm838, %v814
      %848 = vst.msk [vmem:[#allocation2 + $0x48] sm:$0xff] %vm838, %v815
      %849 = vst.msk [vmem:[#allocation2 + $0x50] sm:$0xff] %vm838, %v816
      %850 = vst.msk [vmem:[#allocation2 + $0x58] sm:$0xff] %vm838, %v817
      %851 = vst.msk [vmem:[#allocation2 + $0x60] sm:$0xff] %vm838, %v818
      %852 = vst.msk [vmem:[#allocation2 + $0x68] sm:$0xff] %vm838, %v819
      %853 = vst.msk [vmem:[#allocation2 + $0x70] sm:$0xff] %vm838, %v820
      %854 = vst.msk [vmem:[#allocation2 + $0x78] sm:$0xff] %vm838, %v821
      %855 = vst.msk [vmem:[#allocation2 + $0x80] sm:$0xff] %vm838, %v822
      %856 = vst.msk [vmem:[#allocation2 + $0x88] sm:$0xff] %vm838, %v823
      %857 = vst.msk [vmem:[#allocation2 + $0x90] sm:$0xff] %vm838, %v824
      %858 = vst.msk [vmem:[#allocation2 + $0x98] sm:$0xff] %vm838, %v825
      %859 = vst.msk [vmem:[#allocation2 + $0xa0] sm:$0xff] %vm838, %v826
      %860 = vst.msk [vmem:[#allocation2 + $0xa8] sm:$0xff] %vm838, %v827
      %861 = vst.msk [vmem:[#allocation2 + $0xb0] sm:$0xff] %vm838, %v828
      %862 = vst.msk [vmem:[#allocation2 + $0xb8] sm:$0xff] %vm838, %v829
      %863 = vst.msk [vmem:[#allocation2 + $0xc0] sm:$0xff] %vm838, %v830
      %864 = vst.msk [vmem:[#allocation2 + $0xc8] sm:$0xff] %vm838, %v831
      %865 = vst.msk [vmem:[#allocation2 + $0xd0] sm:$0xff] %vm838, %v832
      %866 = vst.msk [vmem:[#allocation2 + $0xd8] sm:$0xff] %vm838, %v833
      %867 = vst.msk [vmem:[#allocation2 + $0xe0] sm:$0xff] %vm838, %v834
      %868 = vst.msk [vmem:[#allocation2 + $0xe8] sm:$0xff] %vm838, %v835
      %869 = vst.msk [vmem:[#allocation2 + $0xf0] sm:$0xff] %vm838, %v836
      %870 = vst.msk [vmem:[#allocation2 + $0xf8] sm:$0xff] %vm838, %v837
      // Predicated region
      $region37: #{_stem.2} parent=31 // pred_check
        %p871 = pneg %p268
      $region38: #{_stem.2} parent=31 // pred_check_branch
        %873 = sbr.rel (%p871) target = $region40
      $region39: #{_stem.2} parent=31 // pred_region
        %v874 = vld [vmem:[#allocation2] sm:$0xff]
        %v875 = vld [vmem:[#allocation2 + $0x8] sm:$0xff]
        %v876 = vld [vmem:[#allocation2 + $0x10] sm:$0xff]
        %v877 = vld [vmem:[#allocation2 + $0x18] sm:$0xff]
        %v878 = vld [vmem:[#allocation2 + $0x20] sm:$0xff]
        %v879 = vld [vmem:[#allocation2 + $0x28] sm:$0xff]
        %v880 = vld [vmem:[#allocation2 + $0x30] sm:$0xff]
        %v881 = vld [vmem:[#allocation2 + $0x38] sm:$0xff]
        %v882 = vld [vmem:[#allocation2 + $0x40] sm:$0xff]
        %v883 = vld [vmem:[#allocation2 + $0x48] sm:$0xff]
        %v884 = vld [vmem:[#allocation2 + $0x50] sm:$0xff]
        %v885 = vld [vmem:[#allocation2 + $0x58] sm:$0xff]
        %v886 = vld [vmem:[#allocation2 + $0x60] sm:$0xff]
        %v887 = vld [vmem:[#allocation2 + $0x68] sm:$0xff]
        %v888 = vld [vmem:[#allocation2 + $0x70] sm:$0xff]
        %v889 = vld [vmem:[#allocation2 + $0x78] sm:$0xff]
        %v890 = vld [vmem:[#allocation2 + $0x80] sm:$0xff]
        %v891 = vld [vmem:[#allocation2 + $0x88] sm:$0xff]
        %v892 = vld [vmem:[#allocation2 + $0x90] sm:$0xff]
        %v893 = vld [vmem:[#allocation2 + $0x98] sm:$0xff]
        %v894 = vld [vmem:[#allocation2 + $0xa0] sm:$0xff]
        %v895 = vld [vmem:[#allocation2 + $0xa8] sm:$0xff]
        %v896 = vld [vmem:[#allocation2 + $0xb0] sm:$0xff]
        %v897 = vld [vmem:[#allocation2 + $0xb8] sm:$0xff]
        %v898 = vld [vmem:[#allocation2 + $0xc0] sm:$0xff]
        %v899 = vld [vmem:[#allocation2 + $0xc8] sm:$0xff]
        %v900 = vld [vmem:[#allocation2 + $0xd0] sm:$0xff]
        %v901 = vld [vmem:[#allocation2 + $0xd8] sm:$0xff]
        %v902 = vld [vmem:[#allocation2 + $0xe0] sm:$0xff]
        %v903 = vld [vmem:[#allocation2 + $0xe8] sm:$0xff]
        %v904 = vld [vmem:[#allocation2 + $0xf0] sm:$0xff]
        %v905 = vld [vmem:[#allocation2 + $0xf8] sm:$0xff]
        %v906 = vld [vmem:[%s257] sm:$0x1]
        %v908 = vlaneseq
        %v909 = vshrl.u32 %v908, 7
        %v910 = vsub.s32 0, %v909
        %v911 = vrot.slane %v906, %v910
        %v913 = vadd.f32 %v874, %v911
        %v914 = vadd.f32 %v875, %v911
        %v915 = vadd.f32 %v876, %v911
        %v916 = vadd.f32 %v877, %v911
        %v917 = vadd.f32 %v878, %v911
        %v918 = vadd.f32 %v879, %v911
        %v919 = vadd.f32 %v880, %v911
        %v920 = vadd.f32 %v881, %v911
        %v921 = vadd.f32 %v882, %v911
        %v922 = vadd.f32 %v883, %v911
        %v923 = vadd.f32 %v884, %v911
        %v924 = vadd.f32 %v885, %v911
        %v925 = vadd.f32 %v886, %v911
        %v926 = vadd.f32 %v887, %v911
        %v927 = vadd.f32 %v888, %v911
        %v928 = vadd.f32 %v889, %v911
        %v929 = vadd.f32 %v890, %v911
        %v930 = vadd.f32 %v891, %v911
        %v931 = vadd.f32 %v892, %v911
        %v932 = vadd.f32 %v893, %v911
        %v933 = vadd.f32 %v894, %v911
        %v934 = vadd.f32 %v895, %v911
        %v935 = vadd.f32 %v896, %v911
        %v936 = vadd.f32 %v897, %v911
        %v937 = vadd.f32 %v898, %v911
        %v938 = vadd.f32 %v899, %v911
        %v939 = vadd.f32 %v900, %v911
        %v940 = vadd.f32 %v901, %v911
        %v941 = vadd.f32 %v902, %v911
        %v942 = vadd.f32 %v903, %v911
        %v943 = vadd.f32 %v904, %v911
        %v944 = vadd.f32 %v905, %v911
        %v945 = vmax.f32 %v913, 0.0
        %v946 = vmax.f32 %v914, 0.0
        %v947 = vmax.f32 %v915, 0.0
        %v948 = vmax.f32 %v916, 0.0
        %v949 = vmax.f32 %v917, 0.0
        %v950 = vmax.f32 %v918, 0.0
        %v951 = vmax.f32 %v919, 0.0
        %v952 = vmax.f32 %v920, 0.0
        %v953 = vmax.f32 %v921, 0.0
        %v954 = vmax.f32 %v922, 0.0
        %v955 = vmax.f32 %v923, 0.0
        %v956 = vmax.f32 %v924, 0.0
        %v957 = vmax.f32 %v925, 0.0
        %v958 = vmax.f32 %v926, 0.0
        %v959 = vmax.f32 %v927, 0.0
        %v960 = vmax.f32 %v928, 0.0
        %v961 = vmax.f32 %v929, 0.0
        %v962 = vmax.f32 %v930, 0.0
        %v963 = vmax.f32 %v931, 0.0
        %v964 = vmax.f32 %v932, 0.0
        %v965 = vmax.f32 %v933, 0.0
        %v966 = vmax.f32 %v934, 0.0
        %v967 = vmax.f32 %v935, 0.0
        %v968 = vmax.f32 %v936, 0.0
        %v969 = vmax.f32 %v937, 0.0
        %v970 = vmax.f32 %v938, 0.0
        %v971 = vmax.f32 %v939, 0.0
        %v972 = vmax.f32 %v940, 0.0
        %v973 = vmax.f32 %v941, 0.0
        %v974 = vmax.f32 %v942, 0.0
        %v975 = vmax.f32 %v943, 0.0
        %v976 = vmax.f32 %v944, 0.0
        %v977 = vpack.c.bf16 %v946, %v945
        %v978 = vpack.c.bf16 %v948, %v947
        %v979 = vpack.c.bf16 %v950, %v949
        %v980 = vpack.c.bf16 %v952, %v951
        %v981 = vpack.c.bf16 %v954, %v953
        %v982 = vpack.c.bf16 %v956, %v955
        %v983 = vpack.c.bf16 %v958, %v957
        %v984 = vpack.c.bf16 %v960, %v959
        %v985 = vpack.c.bf16 %v962, %v961
        %v986 = vpack.c.bf16 %v964, %v963
        %v987 = vpack.c.bf16 %v966, %v965
        %v988 = vpack.c.bf16 %v968, %v967
        %v989 = vpack.c.bf16 %v970, %v969
        %v990 = vpack.c.bf16 %v972, %v971
        %v991 = vpack.c.bf16 %v974, %v973
        %v992 = vpack.c.bf16 %v976, %v975
        %v1009 = vunpack.c.l.b16 %v977
        %v1010 = vunpack.c.h.b16 %v977
        %v1011 = vunpack.c.l.b16 %v978
        %v1012 = vunpack.c.h.b16 %v978
        %v1013 = vunpack.c.l.b16 %v979
        %v1014 = vunpack.c.h.b16 %v979
        %v1015 = vunpack.c.l.b16 %v980
        %v1016 = vunpack.c.h.b16 %v980
        %v1017 = vunpack.c.l.b16 %v981
        %v1018 = vunpack.c.h.b16 %v981
        %v1019 = vunpack.c.l.b16 %v982
        %v1020 = vunpack.c.h.b16 %v982
        %v1021 = vunpack.c.l.b16 %v983
        %v1022 = vunpack.c.h.b16 %v983
        %v1023 = vunpack.c.l.b16 %v984
        %v1024 = vunpack.c.h.b16 %v984
        %v1025 = vunpack.c.l.b16 %v985
        %v1026 = vunpack.c.h.b16 %v985
        %v1027 = vunpack.c.l.b16 %v986
        %v1028 = vunpack.c.h.b16 %v986
        %v1029 = vunpack.c.l.b16 %v987
        %v1030 = vunpack.c.h.b16 %v987
        %v1031 = vunpack.c.l.b16 %v988
        %v1032 = vunpack.c.h.b16 %v988
        %v1033 = vunpack.c.l.b16 %v989
        %v1034 = vunpack.c.h.b16 %v989
        %v1035 = vunpack.c.l.b16 %v990
        %v1036 = vunpack.c.h.b16 %v990
        %v1037 = vunpack.c.l.b16 %v991
        %v1038 = vunpack.c.h.b16 %v991
        %v1039 = vunpack.c.l.b16 %v992
        %v1040 = vunpack.c.h.b16 %v992
        %v1041 = vpack.c.b16 %v1009, %v1009
        %v1042 = vpack.c.b16 %v1010, %v1010
        %v1043 = vpack.c.b16 %v1011, %v1011
        %v1044 = vpack.c.b16 %v1012, %v1012
        %v1045 = vpack.c.b16 %v1013, %v1013
        %v1046 = vpack.c.b16 %v1014, %v1014
        %v1047 = vpack.c.b16 %v1015, %v1015
        %v1048 = vpack.c.b16 %v1016, %v1016
        %v1049 = vpack.c.b16 %v1017, %v1017
        %v1050 = vpack.c.b16 %v1018, %v1018
        %v1051 = vpack.c.b16 %v1019, %v1019
        %v1052 = vpack.c.b16 %v1020, %v1020
        %v1053 = vpack.c.b16 %v1021, %v1021
        %v1054 = vpack.c.b16 %v1022, %v1022
        %v1055 = vpack.c.b16 %v1023, %v1023
        %v1056 = vpack.c.b16 %v1024, %v1024
        %v1057 = vpack.c.b16 %v1025, %v1025
        %v1058 = vpack.c.b16 %v1026, %v1026
        %v1059 = vpack.c.b16 %v1027, %v1027
        %v1060 = vpack.c.b16 %v1028, %v1028
        %v1061 = vpack.c.b16 %v1029, %v1029
        %v1062 = vpack.c.b16 %v1030, %v1030
        %v1063 = vpack.c.b16 %v1031, %v1031
        %v1064 = vpack.c.b16 %v1032, %v1032
        %v1065 = vpack.c.b16 %v1033, %v1033
        %v1066 = vpack.c.b16 %v1034, %v1034
        %v1067 = vpack.c.b16 %v1035, %v1035
        %v1068 = vpack.c.b16 %v1036, %v1036
        %v1069 = vpack.c.b16 %v1037, %v1037
        %v1070 = vpack.c.b16 %v1038, %v1038
        %v1071 = vpack.c.b16 %v1039, %v1039
        %v1072 = vpack.c.b16 %v1040, %v1040
        %vm1105 = vcmask 519168
        %1106 = vst.msk [vmem:[%s265] sm:$0xf] %vm1105, %v1041
        %1107 = vst.msk [vmem:[%s265 + $0x4] sm:$0xf] %vm1105, %v1042
        %1108 = vst.msk [vmem:[%s265 + $0x8] sm:$0xf] %vm1105, %v1043
        %1109 = vst.msk [vmem:[%s265 + $0xc] sm:$0xf] %vm1105, %v1044
        %1110 = vst.msk [vmem:[%s265 + $0x10] sm:$0xf] %vm1105, %v1045
        %1111 = vst.msk [vmem:[%s265 + $0x14] sm:$0xf] %vm1105, %v1046
        %1112 = vst.msk [vmem:[%s265 + $0x18] sm:$0xf] %vm1105, %v1047
        %1113 = vst.msk [vmem:[%s265 + $0x1c] sm:$0xf] %vm1105, %v1048
        %1114 = vst.msk [vmem:[%s265 + $0x20] sm:$0xf] %vm1105, %v1049
        %1115 = vst.msk [vmem:[%s265 + $0x24] sm:$0xf] %vm1105, %v1050
        %1116 = vst.msk [vmem:[%s265 + $0x28] sm:$0xf] %vm1105, %v1051
        %1117 = vst.msk [vmem:[%s265 + $0x2c] sm:$0xf] %vm1105, %v1052
        %1118 = vst.msk [vmem:[%s265 + $0x30] sm:$0xf] %vm1105, %v1053
        %1119 = vst.msk [vmem:[%s265 + $0x34] sm:$0xf] %vm1105, %v1054
        %1120 = vst.msk [vmem:[%s265 + $0x38] sm:$0xf] %vm1105, %v1055
        %1121 = vst.msk [vmem:[%s265 + $0x3c] sm:$0xf] %vm1105, %v1056
        %1122 = vst.msk [vmem:[%s265 + $0x40] sm:$0xf] %vm1105, %v1057
        %1123 = vst.msk [vmem:[%s265 + $0x44] sm:$0xf] %vm1105, %v1058
        %1124 = vst.msk [vmem:[%s265 + $0x48] sm:$0xf] %vm1105, %v1059
        %1125 = vst.msk [vmem:[%s265 + $0x4c] sm:$0xf] %vm1105, %v1060
        %1126 = vst.msk [vmem:[%s265 + $0x50] sm:$0xf] %vm1105, %v1061
        %1127 = vst.msk [vmem:[%s265 + $0x54] sm:$0xf] %vm1105, %v1062
        %1128 = vst.msk [vmem:[%s265 + $0x58] sm:$0xf] %vm1105, %v1063
        %1129 = vst.msk [vmem:[%s265 + $0x5c] sm:$0xf] %vm1105, %v1064
        %1130 = vst.msk [vmem:[%s265 + $0x60] sm:$0xf] %vm1105, %v1065
        %1131 = vst.msk [vmem:[%s265 + $0x64] sm:$0xf] %vm1105, %v1066
        %1132 = vst.msk [vmem:[%s265 + $0x68] sm:$0xf] %vm1105, %v1067
        %1133 = vst.msk [vmem:[%s265 + $0x6c] sm:$0xf] %vm1105, %v1068
        %1134 = vst.msk [vmem:[%s265 + $0x70] sm:$0xf] %vm1105, %v1069
        %1135 = vst.msk [vmem:[%s265 + $0x74] sm:$0xf] %vm1105, %v1070
        %1136 = vst.msk [vmem:[%s265 + $0x78] sm:$0xf] %vm1105, %v1071
        %1137 = vst.msk [vmem:[%s265 + $0x7c] sm:$0xf] %vm1105, %v1072
      $region40: #{_stem.2} parent=31 // pred_fallthru
        _
      %s1138 = smul.u32 32, %s19
      %p1139 = scmp.lt.s32.totalorder %s1138, 255
      %s1140 = scalar_select %p1139, %s1138, 255
      %p1141 = scmp.lt.s32.totalorder %s20, 0
      %s1142 = scalar_select %p1141, %s20, 0
      %s1143 = sadd.s32 %s1142, %s1140
      %s1144 = smul.addr %s1143, 4
      %s1145 = scalar_lea.vmem %s3, %s1144
      // Predicated region
      $region41: #{_stem.2} parent=31 // pred_check
        %p1146 = pneg %p135
      $region42: #{_stem.2} parent=31 // pred_check_branch
        %1148 = sbr.rel (%p1146) target = $region44
      $region43: #{_stem.2} parent=31 // pred_region
        %s1149 = smul.u32 32, %s19
      $region44: #{_stem.2} parent=31 // pred_fallthru
        _
    $region32: #{_stem.2} parent=5 // pred_fallthru
      _
    %p1150 = scmp.le.s32.totalorder 2, %s9
    // Predicated region
    $region45: #{_stem.2} parent=5 // pred_check
      %p1151 = pneg %p1150
    $region46: #{_stem.2} parent=5 // pred_check_branch
      %1153 = sbr.rel (%p1151) target = $region48
    $region47: #{_stem.2} parent=5 // pred_region
      %s1154 = ssub.s32 %s9, 2
      // Predicated region
      $region49: #{_stem.2} parent=47 // pred_check
        %p1155 = pneg %p141
      $region50: #{_stem.2} parent=47 // pred_check_branch
        %1157 = sbr.rel (%p1155) target = $region52
      $region51: #{_stem.2} parent=47 // pred_region
        %s1158 = smul.u32 32, %s22
        %p1159 = scmp.lt.s32.totalorder %s1158, 255
        %s1160 = scalar_select %p1159, %s1158, 255
        %p1161 = scmp.lt.s32.totalorder %s23, 0
        %s1162 = scalar_select %p1161, %s23, 0
        %s1163 = sadd.s32 %s1162, %s1160
        %s1164 = smul.addr %s1163, 4
        %s1165 = scalar_lea.vmem %s3, %s1164
      $region52: #{_stem.2} parent=47 // pred_fallthru
        _
    $region48: #{_stem.2} parent=5 // pred_fallthru
      _
  $region6: #{_stem.2} parent=0 // loop_footer
    %s13 = sadd.s32 1, %s9
  $region7: #{_stem.2} parent=0 // loop_footer_branch
    %8 = sbr.rel target = $region3
  $region8: #{_stem.2} parent=0 // loop_exit
    _

// kernel: _stem.3
$region0: #{_stem.3}
  #allocation0 [shape = 'u32[]', space=smem, size = 0x4, offset = 0x4, fixed_abs, tag = 'smem constant byte address 0x4 - core index']
  #allocation1 [shape = 'u32[144,128]{1,0:T(1,128)}', space=vmem, size = 0x12000, scoped, tag = 'internal scratch']
  %s0 = inlined_call_operand.vmem [shape: bf16[9,512,64], index: 0, kind: input, shape index: {}]
  %s1 = inlined_call_operand.hbm [shape: bf16[512,64], index: 1, kind: output, shape index: {}]
  %s2 = sld [smem:[#allocation0]]
  $region78: #{_stem.3} parent=0
    _
  %s4 = ssub.s32 1, %s2
  %s5 = scalar_select 0, %s4, %s2
  $region1: #{_stem.3} parent=0
    #allocation2 [shape = 'u8[1179648]{0}', space=vmem, size = 0x120000, scoped, tag = 'input window, operand 0']
    #allocation3 [shape = 'u8[131072]{0}', space=vmem, size = 0x20000, scoped, tag = 'output window, operand 0']
    #allocation4 [shape = 's32[2]{0}', space=sflag, size = 0x8, scoped, tag = 'scoped memory for _stem.3']
    %6 = vsyncpa [#allocation4], 0
    %s7 = scalar_lea.sflag [#allocation4], 1
    %8 = vsyncpa %s7, 0
    loop: start=0, step=1, limit=4
    $region2: #{_stem.3} parent=1 // loop_pre_header
      _
    $region3: #{_stem.3} parent=1 // loop_header
      %s10 = sphi 0, %s14
      %p11 = scmp.ge.s32.totalorder %s10, 4
      %s20 = sphi 0, %s22
      %s23 = sphi 0, %s20
      %s24 = sphi 0, %s23
      %s40 = sphi 0, %s24
      %s46 = sphi 0, %s48
      %s49 = sphi 0, %s46
      %s50 = sphi 0, %s49
      %s66 = sphi 0, %s50
    $region4: #{_stem.3} parent=1 // loop_header_branch
      %13 = sbr.rel (%p11) target = $region8
    $region5: #{_stem.3} parent=1 // loop_body
      %s15 = ssub.s32 %s10, 1
      %s16 = ssub.s32 %s10, 2
      %s17 = sadd.s32 %s10, 1
      %s18 = ssub.s32 %s10, %s17
      %p19 = scmp.eq.s32.totalorder %s18, 0
      %s21 = sadd.s32 %s20, 1
      %s22 = scalar_select %p19, %s20, %s21
      %p25 = pneg %p19
      %p26 = scmp.eq.s32.totalorder %s10, 1
      %p27 = por %p25, %p26
      %p28 = scmp.ne.s32.totalorder %s20, %s23
      %p29 = scmp.eq.s32.totalorder %s10, 0
      %p30 = por %p28, %p29
      %p31 = scmp.ne.s32.totalorder %s20, %s23
      %p32 = scmp.eq.s32.totalorder %s15, 1
      %p33 = por %p31, %p32
      %p34 = scmp.ne.s32.totalorder %s23, %s24
      %p35 = scmp.eq.s32.totalorder %s15, 0
      %p36 = por %p34, %p35
      %p37 = scmp.ne.s32.totalorder %s23, %s24
      %p38 = scmp.eq.s32.totalorder %s16, 1
      %p39 = por %p37, %p38
      %p41 = scmp.ne.s32.totalorder %s24, %s40
      %p42 = scmp.eq.s32.totalorder %s16, 0
      %p43 = por %p41, %p42
      %s44 = ssub.s32 %s10, %s17
      %p45 = scmp.eq.s32.totalorder %s44, 0
      %s47 = sadd.s32 %s46, 1
      %s48 = scalar_select %p45, %s46, %s47
      %p51 = pneg %p45
      %p52 = scmp.eq.s32.totalorder %s10, 1
      %p53 = por %p51, %p52
      %p54 = scmp.ne.s32.totalorder %s46, %s49
      %p55 = scmp.eq.s32.totalorder %s10, 0
      %p56 = por %p54, %p55
      %p57 = scmp.ne.s32.totalorder %s46, %s49
      %p58 = scmp.eq.s32.totalorder %s15, 1
      %p59 = por %p57, %p58
      %p60 = scmp.ne.s32.totalorder %s49, %s50
      %p61 = scmp.eq.s32.totalorder %s15, 0
      %p62 = por %p60, %p61
      %p63 = scmp.ne.s32.totalorder %s49, %s50
      %p64 = scmp.eq.s32.totalorder %s16, 1
      %p65 = por %p63, %p64
      %p67 = scmp.ne.s32.totalorder %s50, %s66
      %p68 = scmp.eq.s32.totalorder %s16, 0
      %p69 = por %p67, %p68
      %p70 = scmp.le.s32.totalorder 1, %s10
      %p71 = scmp.lt.s32.totalorder %s10, 3
      %p72 = pnand %p70, %p71
      %p73 = pneg %p72
      // Predicated region
      $region9: #{_stem.3} parent=5 // pred_check
        _
      $region10: #{_stem.3} parent=5 // pred_check_branch
        %75 = sbr.rel (%p72) target = $region12
      $region11: #{_stem.3} parent=5 // pred_region
        %s76 = ssub.s32 %s10, 1
      $region12: #{_stem.3} parent=5 // pred_fallthru
        _
      %p77 = scmp.lt.s32.totalorder %s10, 2
      // Predicated region
      $region13: #{_stem.3} parent=5 // pred_check
        %p78 = pneg %p77
      $region14: #{_stem.3} parent=5 // pred_check_branch
        %80 = sbr.rel (%p78) target = $region16
      $region15: #{_stem.3} parent=5 // pred_region
        // Predicated region
        $region17: #{_stem.3} parent=15 // pred_check
          %p81 = pneg %p30
        $region18: #{_stem.3} parent=15 // pred_check_branch
          %83 = sbr.rel (%p81) target = $region20
        $region19: #{_stem.3} parent=15 // pred_region
          %s84 = sand.u32 %s20, 1
          %s85 = sand.u32 %s20, 1
          %s86 = smul.addr %s85, 1152
          %s87 = scalar_lea.vmem [#allocation2], %s86
          %s88 = smul.u32 32, %s10
          %s89 = smul.addr %s88, 4
          %s90 = scalar_lea.vmem %s0, %s89
          // Predicated region
          $region21: #{_stem.3} parent=19 // pred_check
            _
          $region22: #{_stem.3} parent=19 // pred_check_branch
            %92 = sbr.rel (0) target = $region24
          $region23: #{_stem.3} parent=19 // pred_region
            // Predicated region
            $region25: #{_stem.3} parent=23 // pred_check
              _
            $region26: #{_stem.3} parent=23 // pred_check_branch
              %94 = sbr.rel target = $region28
            $region27: #{_stem.3} parent=23 // pred_region
              // Predicated region
              $region40: #{_stem.3} parent=27 // pred_check
                _
              $region41: #{_stem.3} parent=27 // pred_check_branch
                %683 = sbr.rel (0) target = $region43
              $region42: #{_stem.3} parent=27 // pred_region
                loop: start=0, step=1, limit=1
                $region44: #{_stem.3} parent=42 // loop_pre_header
                  _
                $region45: #{_stem.3} parent=42 // loop_header
                  %s685 = sphi 0, %s689
                  %p686 = scmp.ge.s32.totalorder %s685, 1
                  %s690 = sphi %s90, %s90
                  %s691 = sphi %s87, %s87
                $region46: #{_stem.3} parent=42 // loop_header_branch
                  %688 = sbr.rel (%p686) target = $region50
                $region47: #{_stem.3} parent=42 // loop_body
                  _
                $region48: #{_stem.3} parent=42 // loop_footer
                  %s689 = sadd.s32 1, %s685
                $region49: #{_stem.3} parent=42 // loop_footer_branch
                  %684 = sbr.rel target = $region45
                $region50: #{_stem.3} parent=42 // loop_exit
                  _
                loop: start=0, step=1, limit=1
                $region51: #{_stem.3} parent=42 // loop_pre_header
                  _
                $region52: #{_stem.3} parent=42 // loop_header
                  %s694 = sphi 0, %s698
                  %p695 = scmp.ge.s32.totalorder %s694, 1
                  %s699 = sphi %s90, %s90
                  %s700 = sphi %s87, %s87
                $region53: #{_stem.3} parent=42 // loop_header_branch
                  %697 = sbr.rel (%p695) target = $region57
                $region54: #{_stem.3} parent=42 // loop_body
                  %v701 = vld [vmem:[%s699] sm:$0xf]
                  %702 = vst [vmem:[%s700] sm:$0xf] %v701
                  %v703 = vld [vmem:[%s699 + $0x4] sm:$0xf]
                  %704 = vst [vmem:[%s700 + $0x4] sm:$0xf] %v703
                  %v705 = vld [vmem:[%s699 + $0x8] sm:$0xf]
                  %706 = vst [vmem:[%s700 + $0x8] sm:$0xf] %v705
                  %v707 = vld [vmem:[%s699 + $0xc] sm:$0xf]
                  %708 = vst [vmem:[%s700 + $0xc] sm:$0xf] %v707
                  %v709 = vld [vmem:[%s699 + $0x10] sm:$0xf]
                  %710 = vst [vmem:[%s700 + $0x10] sm:$0xf] %v709
                  %v711 = vld [vmem:[%s699 + $0x14] sm:$0xf]
                  %712 = vst [vmem:[%s700 + $0x14] sm:$0xf] %v711
                  %v713 = vld [vmem:[%s699 + $0x18] sm:$0xf]
                  %714 = vst [vmem:[%s700 + $0x18] sm:$0xf] %v713
                  %v715 = vld [vmem:[%s699 + $0x1c] sm:$0xf]
                  %716 = vst [vmem:[%s700 + $0x1c] sm:$0xf] %v715
                  %v717 = vld [vmem:[%s699 + $0x20] sm:$0xf]
                  %718 = vst [vmem:[%s700 + $0x20] sm:$0xf] %v717
                  %v719 = vld [vmem:[%s699 + $0x24] sm:$0xf]
                  %720 = vst [vmem:[%s700 + $0x24] sm:$0xf] %v719
                  %v721 = vld [vmem:[%s699 + $0x28] sm:$0xf]
                  %722 = vst [vmem:[%s700 + $0x28] sm:$0xf] %v721
                  %v723 = vld [vmem:[%s699 + $0x2c] sm:$0xf]
                  %724 = vst [vmem:[%s700 + $0x2c] sm:$0xf] %v723
                  %v725 = vld [vmem:[%s699 + $0x30] sm:$0xf]
                  %726 = vst [vmem:[%s700 + $0x30] sm:$0xf] %v725
                  %v727 = vld [vmem:[%s699 + $0x34] sm:$0xf]
                  %728 = vst [vmem:[%s700 + $0x34] sm:$0xf] %v727
                  %v729 = vld [vmem:[%s699 + $0x38] sm:$0xf]
                  %730 = vst [vmem:[%s700 + $0x38] sm:$0xf] %v729
                  %v731 = vld [vmem:[%s699 + $0x3c] sm:$0xf]
                  %732 = vst [vmem:[%s700 + $0x3c] sm:$0xf] %v731
                  %v733 = vld [vmem:[%s699 + $0x40] sm:$0xf]
                  %734 = vst [vmem:[%s700 + $0x40] sm:$0xf] %v733
                  %v735 = vld [vmem:[%s699 + $0x44] sm:$0xf]
                  %736 = vst [vmem:[%s700 + $0x44] sm:$0xf] %v735
                  %v737 = vld [vmem:[%s699 + $0x48] sm:$0xf]
                  %738 = vst [vmem:[%s700 + $0x48] sm:$0xf] %v737
                  %v739 = vld [vmem:[%s699 + $0x4c] sm:$0xf]
                  %740 = vst [vmem:[%s700 + $0x4c] sm:$0xf] %v739
                  %v741 = vld [vmem:[%s699 + $0x50] sm:$0xf]
                  %742 = vst [vmem:[%s700 + $0x50] sm:$0xf] %v741
                  %v743 = vld [vmem:[%s699 + $0x54] sm:$0xf]
                  %744 = vst [vmem:[%s700 + $0x54] sm:$0xf] %v743
                  %v745 = vld [vmem:[%s699 + $0x58] sm:$0xf]
                  %746 = vst [vmem:[%s700 + $0x58] sm:$0xf] %v745
                  %v747 = vld [vmem:[%s699 + $0x5c] sm:$0xf]
                  %748 = vst [vmem:[%s700 + $0x5c] sm:$0xf] %v747
                  %v749 = vld [vmem:[%s699 + $0x60] sm:$0xf]
                  %750 = vst [vmem:[%s700 + $0x60] sm:$0xf] %v749
                  %v751 = vld [vmem:[%s699 + $0x64] sm:$0xf]
                  %752 = vst [vmem:[%s700 + $0x64] sm:$0xf] %v751
                  %v753 = vld [vmem:[%s699 + $0x68] sm:$0xf]
                  %754 = vst [vmem:[%s700 + $0x68] sm:$0xf] %v753
                  %v755 = vld [vmem:[%s699 + $0x6c] sm:$0xf]
                  %756 = vst [vmem:[%s700 + $0x6c] sm:$0xf] %v755
                  %v757 = vld [vmem:[%s699 + $0x70] sm:$0xf]
                  %758 = vst [vmem:[%s700 + $0x70] sm:$0xf] %v757
                  %v759 = vld [vmem:[%s699 + $0x74] sm:$0xf]
                  %760 = vst [vmem:[%s700 + $0x74] sm:$0xf] %v759
                  %v761 = vld [vmem:[%s699 + $0x78] sm:$0xf]
                  %762 = vst [vmem:[%s700 + $0x78] sm:$0xf] %v761
                  %v763 = vld [vmem:[%s699 + $0x7c] sm:$0xf]
                  %764 = vst [vmem:[%s700 + $0x7c] sm:$0xf] %v763
                  %v765 = vld [vmem:[%s699 + $0x100] sm:$0xf]
                  %766 = vst [vmem:[%s700 + $0x80] sm:$0xf] %v765
                  %v767 = vld [vmem:[%s699 + $0x104] sm:$0xf]
                  %768 = vst [vmem:[%s700 + $0x84] sm:$0xf] %v767
                  %v769 = vld [vmem:[%s699 + $0x108] sm:$0xf]
                  %770 = vst [vmem:[%s700 + $0x88] sm:$0xf] %v769
                  %v771 = vld [vmem:[%s699 + $0x10c] sm:$0xf]
                  %772 = vst [vmem:[%s700 + $0x8c] sm:$0xf] %v771
                  %v773 = vld [vmem:[%s699 + $0x110] sm:$0xf]
                  %774 = vst [vmem:[%s700 + $0x90] sm:$0xf] %v773
                  %v775 = vld [vmem:[%s699 + $0x114] sm:$0xf]
                  %776 = vst [vmem:[%s700 + $0x94] sm:$0xf] %v775
                  %v777 = vld [vmem:[%s699 + $0x118] sm:$0xf]
                  %778 = vst [vmem:[%s700 + $0x98] sm:$0xf] %v777
                  %v779 = vld [vmem:[%s699 + $0x11c] sm:$0xf]
                  %780 = vst [vmem:[%s700 + $0x9c] sm:$0xf] %v779
                  %v781 = vld [vmem:[%s699 + $0x120] sm:$0xf]
                  %782 = vst [vmem:[%s700 + $0xa0] sm:$0xf] %v781
                  %v783 = vld [vmem:[%s699 + $0x124] sm:$0xf]
                  %784 = vst [vmem:[%s700 + $0xa4] sm:$0xf] %v783
                  %v785 = vld [vmem:[%s699 + $0x128] sm:$0xf]
                  %786 = vst [vmem:[%s700 + $0xa8] sm:$0xf] %v785
                  %v787 = vld [vmem:[%s699 + $0x12c] sm:$0xf]
                  %788 = vst [vmem:[%s700 + $0xac] sm:$0xf] %v787
                  %v789 = vld [vmem:[%s699 + $0x130] sm:$0xf]
                  %790 = vst [vmem:[%s700 + $0xb0] sm:$0xf] %v789
                  %v791 = vld [vmem:[%s699 + $0x134] sm:$0xf]
                  %792 = vst [vmem:[%s700 + $0xb4] sm:$0xf] %v791
                  %v793 = vld [vmem:[%s699 + $0x138] sm:$0xf]
                  %794 = vst [vmem:[%s700 + $0xb8] sm:$0xf] %v793
                  %v795 = vld [vmem:[%s699 + $0x13c] sm:$0xf]
                  %796 = vst [vmem:[%s700 + $0xbc] sm:$0xf] %v795
                  %v797 = vld [vmem:[%s699 + $0x140] sm:$0xf]
                  %798 = vst [vmem:[%s700 + $0xc0] sm:$0xf] %v797
                  %v799 = vld [vmem:[%s699 + $0x144] sm:$0xf]
                  %800 = vst [vmem:[%s700 + $0xc4] sm:$0xf] %v799
                  %v801 = vld [vmem:[%s699 + $0x148] sm:$0xf]
                  %802 = vst [vmem:[%s700 + $0xc8] sm:$0xf] %v801
                  %v803 = vld [vmem:[%s699 + $0x14c] sm:$0xf]
                  %804 = vst [vmem:[%s700 + $0xcc] sm:$0xf] %v803
                  %v805 = vld [vmem:[%s699 + $0x150] sm:$0xf]
                  %806 = vst [vmem:[%s700 + $0xd0] sm:$0xf] %v805
                  %v807 = vld [vmem:[%s699 + $0x154] sm:$0xf]
                  %808 = vst [vmem:[%s700 + $0xd4] sm:$0xf] %v807
                  %v809 = vld [vmem:[%s699 + $0x158] sm:$0xf]
                  %810 = vst [vmem:[%s700 + $0xd8] sm:$0xf] %v809
                  %v811 = vld [vmem:[%s699 + $0x15c] sm:$0xf]
                  %812 = vst [vmem:[%s700 + $0xdc] sm:$0xf] %v811
                  %v813 = vld [vmem:[%s699 + $0x160] sm:$0xf]
                  %814 = vst [vmem:[%s700 + $0xe0] sm:$0xf] %v813
                  %v815 = vld [vmem:[%s699 + $0x164] sm:$0xf]
                  %816 = vst [vmem:[%s700 + $0xe4] sm:$0xf] %v815
                  %v817 = vld [vmem:[%s699 + $0x168] sm:$0xf]
                  %818 = vst [vmem:[%s700 + $0xe8] sm:$0xf] %v817
                  %v819 = vld [vmem:[%s699 + $0x16c] sm:$0xf]
                  %820 = vst [vmem:[%s700 + $0xec] sm:$0xf] %v819
                  %v821 = vld [vmem:[%s699 + $0x170] sm:$0xf]
                  %822 = vst [vmem:[%s700 + $0xf0] sm:$0xf] %v821
                  %v823 = vld [vmem:[%s699 + $0x174] sm:$0xf]
                  %824 = vst [vmem:[%s700 + $0xf4] sm:$0xf] %v823
                  %v825 = vld [vmem:[%s699 + $0x178] sm:$0xf]
                  %826 = vst [vmem:[%s700 + $0xf8] sm:$0xf] %v825
                  %v827 = vld [vmem:[%s699 + $0x17c] sm:$0xf]
                  %828 = vst [vmem:[%s700 + $0xfc] sm:$0xf] %v827
                  %v829 = vld [vmem:[%s699 + $0x200] sm:$0xf]
                  %830 = vst [vmem:[%s700 + $0x100] sm:$0xf] %v829
                  %v831 = vld [vmem:[%s699 + $0x204] sm:$0xf]
                  %832 = vst [vmem:[%s700 + $0x104] sm:$0xf] %v831
                  %v833 = vld [vmem:[%s699 + $0x208] sm:$0xf]
                  %834 = vst [vmem:[%s700 + $0x108] sm:$0xf] %v833
                  %v835 = vld [vmem:[%s699 + $0x20c] sm:$0xf]
                  %836 = vst [vmem:[%s700 + $0x10c] sm:$0xf] %v835
                  %v837 = vld [vmem:[%s699 + $0x210] sm:$0xf]
                  %838 = vst [vmem:[%s700 + $0x110] sm:$0xf] %v837
                  %v839 = vld [vmem:[%s699 + $0x214] sm:$0xf]
                  %840 = vst [vmem:[%s700 + $0x114] sm:$0xf] %v839
                  %v841 = vld [vmem:[%s699 + $0x218] sm:$0xf]
                  %842 = vst [vmem:[%s700 + $0x118] sm:$0xf] %v841
                  %v843 = vld [vmem:[%s699 + $0x21c] sm:$0xf]
                  %844 = vst [vmem:[%s700 + $0x11c] sm:$0xf] %v843
                  %v845 = vld [vmem:[%s699 + $0x220] sm:$0xf]
                  %846 = vst [vmem:[%s700 + $0x120] sm:$0xf] %v845
                  %v847 = vld [vmem:[%s699 + $0x224] sm:$0xf]
                  %848 = vst [vmem:[%s700 + $0x124] sm:$0xf] %v847
                  %v849 = vld [vmem:[%s699 + $0x228] sm:$0xf]
                  %850 = vst [vmem:[%s700 + $0x128] sm:$0xf] %v849
                  %v851 = vld [vmem:[%s699 + $0x22c] sm:$0xf]
                  %852 = vst [vmem:[%s700 + $0x12c] sm:$0xf] %v851
                  %v853 = vld [vmem:[%s699 + $0x230] sm:$0xf]
                  %854 = vst [vmem:[%s700 + $0x130] sm:$0xf] %v853
                  %v855 = vld [vmem:[%s699 + $0x234] sm:$0xf]
                  %856 = vst [vmem:[%s700 + $0x134] sm:$0xf] %v855
                  %v857 = vld [vmem:[%s699 + $0x238] sm:$0xf]
                  %858 = vst [vmem:[%s700 + $0x138] sm:$0xf] %v857
                  %v859 = vld [vmem:[%s699 + $0x23c] sm:$0xf]
                  %860 = vst [vmem:[%s700 + $0x13c] sm:$0xf] %v859
                  %v861 = vld [vmem:[%s699 + $0x240] sm:$0xf]
                  %862 = vst [vmem:[%s700 + $0x140] sm:$0xf] %v861
                  %v863 = vld [vmem:[%s699 + $0x244] sm:$0xf]
                  %864 = vst [vmem:[%s700 + $0x144] sm:$0xf] %v863
                  %v865 = vld [vmem:[%s699 + $0x248] sm:$0xf]
                  %866 = vst [vmem:[%s700 + $0x148] sm:$0xf] %v865
                  %v867 = vld [vmem:[%s699 + $0x24c] sm:$0xf]
                  %868 = vst [vmem:[%s700 + $0x14c] sm:$0xf] %v867
                  %v869 = vld [vmem:[%s699 + $0x250] sm:$0xf]
                  %870 = vst [vmem:[%s700 + $0x150] sm:$0xf] %v869
                  %v871 = vld [vmem:[%s699 + $0x254] sm:$0xf]
                  %872 = vst [vmem:[%s700 + $0x154] sm:$0xf] %v871
                  %v873 = vld [vmem:[%s699 + $0x258] sm:$0xf]
                  %874 = vst [vmem:[%s700 + $0x158] sm:$0xf] %v873
                  %v875 = vld [vmem:[%s699 + $0x25c] sm:$0xf]
                  %876 = vst [vmem:[%s700 + $0x15c] sm:$0xf] %v875
                  %v877 = vld [vmem:[%s699 + $0x260] sm:$0xf]
                  %878 = vst [vmem:[%s700 + $0x160] sm:$0xf] %v877
                  %v879 = vld [vmem:[%s699 + $0x264] sm:$0xf]
                  %880 = vst [vmem:[%s700 + $0x164] sm:$0xf] %v879
                  %v881 = vld [vmem:[%s699 + $0x268] sm:$0xf]
                  %882 = vst [vmem:[%s700 + $0x168] sm:$0xf] %v881
                  %v883 = vld [vmem:[%s699 + $0x26c] sm:$0xf]
                  %884 = vst [vmem:[%s700 + $0x16c] sm:$0xf] %v883
                  %v885 = vld [vmem:[%s699 + $0x270] sm:$0xf]
                  %886 = vst [vmem:[%s700 + $0x170] sm:$0xf] %v885
                  %v887 = vld [vmem:[%s699 + $0x274] sm:$0xf]
                  %888 = vst [vmem:[%s700 + $0x174] sm:$0xf] %v887
                  %v889 = vld [vmem:[%s699 + $0x278] sm:$0xf]
                  %890 = vst [vmem:[%s700 + $0x178] sm:$0xf] %v889
                  %v891 = vld [vmem:[%s699 + $0x27c] sm:$0xf]
                  %892 = vst [vmem:[%s700 + $0x17c] sm:$0xf] %v891
                  %v893 = vld [vmem:[%s699 + $0x300] sm:$0xf]
                  %894 = vst [vmem:[%s700 + $0x180] sm:$0xf] %v893
                  %v895 = vld [vmem:[%s699 + $0x304] sm:$0xf]
                  %896 = vst [vmem:[%s700 + $0x184] sm:$0xf] %v895
                  %v897 = vld [vmem:[%s699 + $0x308] sm:$0xf]
                  %898 = vst [vmem:[%s700 + $0x188] sm:$0xf] %v897
                  %v899 = vld [vmem:[%s699 + $0x30c] sm:$0xf]
                  %900 = vst [vmem:[%s700 + $0x18c] sm:$0xf] %v899
                  %v901 = vld [vmem:[%s699 + $0x310] sm:$0xf]
                  %902 = vst [vmem:[%s700 + $0x190] sm:$0xf] %v901
                  %v903 = vld [vmem:[%s699 + $0x314] sm:$0xf]
                  %904 = vst [vmem:[%s700 + $0x194] sm:$0xf] %v903
                  %v905 = vld [vmem:[%s699 + $0x318] sm:$0xf]
                  %906 = vst [vmem:[%s700 + $0x198] sm:$0xf] %v905
                  %v907 = vld [vmem:[%s699 + $0x31c] sm:$0xf]
                  %908 = vst [vmem:[%s700 + $0x19c] sm:$0xf] %v907
                  %v909 = vld [vmem:[%s699 + $0x320] sm:$0xf]
                  %910 = vst [vmem:[%s700 + $0x1a0] sm:$0xf] %v909
                  %v911 = vld [vmem:[%s699 + $0x324] sm:$0xf]
                  %912 = vst [vmem:[%s700 + $0x1a4] sm:$0xf] %v911
                  %v913 = vld [vmem:[%s699 + $0x328] sm:$0xf]
                  %914 = vst [vmem:[%s700 + $0x1a8] sm:$0xf] %v913
                  %v915 = vld [vmem:[%s699 + $0x32c] sm:$0xf]
                  %916 = vst [vmem:[%s700 + $0x1ac] sm:$0xf] %v915
                  %v917 = vld [vmem:[%s699 + $0x330] sm:$0xf]
                  %918 = vst [vmem:[%s700 + $0x1b0] sm:$0xf] %v917
                  %v919 = vld [vmem:[%s699 + $0x334] sm:$0xf]
                  %920 = vst [vmem:[%s700 + $0x1b4] sm:$0xf] %v919
                  %v921 = vld [vmem:[%s699 + $0x338] sm:$0xf]
                  %922 = vst [vmem:[%s700 + $0x1b8] sm:$0xf] %v921
                  %v923 = vld [vmem:[%s699 + $0x33c] sm:$0xf]
                  %924 = vst [vmem:[%s700 + $0x1bc] sm:$0xf] %v923
                  %v925 = vld [vmem:[%s699 + $0x340] sm:$0xf]
                  %926 = vst [vmem:[%s700 + $0x1c0] sm:$0xf] %v925
                  %v927 = vld [vmem:[%s699 + $0x344] sm:$0xf]
                  %928 = vst [vmem:[%s700 + $0x1c4] sm:$0xf] %v927
                  %v929 = vld [vmem:[%s699 + $0x348] sm:$0xf]
                  %930 = vst [vmem:[%s700 + $0x1c8] sm:$0xf] %v929
                  %v931 = vld [vmem:[%s699 + $0x34c] sm:$0xf]
                  %932 = vst [vmem:[%s700 + $0x1cc] sm:$0xf] %v931
                  %v933 = vld [vmem:[%s699 + $0x350] sm:$0xf]
                  %934 = vst [vmem:[%s700 + $0x1d0] sm:$0xf] %v933
                  %v935 = vld [vmem:[%s699 + $0x354] sm:$0xf]
                  %936 = vst [vmem:[%s700 + $0x1d4] sm:$0xf] %v935
                  %v937 = vld [vmem:[%s699 + $0x358] sm:$0xf]
                  %938 = vst [vmem:[%s700 + $0x1d8] sm:$0xf] %v937
                  %v939 = vld [vmem:[%s699 + $0x35c] sm:$0xf]
                  %940 = vst [vmem:[%s700 + $0x1dc] sm:$0xf] %v939
                  %v941 = vld [vmem:[%s699 + $0x360] sm:$0xf]
                  %942 = vst [vmem:[%s700 + $0x1e0] sm:$0xf] %v941
                  %v943 = vld [vmem:[%s699 + $0x364] sm:$0xf]
                  %944 = vst [vmem:[%s700 + $0x1e4] sm:$0xf] %v943
                  %v945 = vld [vmem:[%s699 + $0x368] sm:$0xf]
                  %946 = vst [vmem:[%s700 + $0x1e8] sm:$0xf] %v945
                  %v947 = vld [vmem:[%s699 + $0x36c] sm:$0xf]
                  %948 = vst [vmem:[%s700 + $0x1ec] sm:$0xf] %v947
                  %v949 = vld [vmem:[%s699 + $0x370] sm:$0xf]
                  %950 = vst [vmem:[%s700 + $0x1f0] sm:$0xf] %v949
                  %v951 = vld [vmem:[%s699 + $0x374] sm:$0xf]
                  %952 = vst [vmem:[%s700 + $0x1f4] sm:$0xf] %v951
                  %v953 = vld [vmem:[%s699 + $0x378] sm:$0xf]
                  %954 = vst [vmem:[%s700 + $0x1f8] sm:$0xf] %v953
                  %v955 = vld [vmem:[%s699 + $0x37c] sm:$0xf]
                  %956 = vst [vmem:[%s700 + $0x1fc] sm:$0xf] %v955
                  %v957 = vld [vmem:[%s699 + $0x400] sm:$0xf]
                  %958 = vst [vmem:[%s700 + $0x200] sm:$0xf] %v957
                  %v959 = vld [vmem:[%s699 + $0x404] sm:$0xf]
                  %960 = vst [vmem:[%s700 + $0x204] sm:$0xf] %v959
                  %v961 = vld [vmem:[%s699 + $0x408] sm:$0xf]
                  %962 = vst [vmem:[%s700 + $0x208] sm:$0xf] %v961
                  %v963 = vld [vmem:[%s699 + $0x40c] sm:$0xf]
                  %964 = vst [vmem:[%s700 + $0x20c] sm:$0xf] %v963
                  %v965 = vld [vmem:[%s699 + $0x410] sm:$0xf]
                  %966 = vst [vmem:[%s700 + $0x210] sm:$0xf] %v965
                  %v967 = vld [vmem:[%s699 + $0x414] sm:$0xf]
                  %968 = vst [vmem:[%s700 + $0x214] sm:$0xf] %v967
                  %v969 = vld [vmem:[%s699 + $0x418] sm:$0xf]
                  %970 = vst [vmem:[%s700 + $0x218] sm:$0xf] %v969
                  %v971 = vld [vmem:[%s699 + $0x41c] sm:$0xf]
                  %972 = vst [vmem:[%s700 + $0x21c] sm:$0xf] %v971
                  %v973 = vld [vmem:[%s699 + $0x420] sm:$0xf]
                  %974 = vst [vmem:[%s700 + $0x220] sm:$0xf] %v973
                  %v975 = vld [vmem:[%s699 + $0x424] sm:$0xf]
                  %976 = vst [vmem:[%s700 + $0x224] sm:$0xf] %v975
                  %v977 = vld [vmem:[%s699 + $0x428] sm:$0xf]
                  %978 = vst [vmem:[%s700 + $0x228] sm:$0xf] %v977
                  %v979 = vld [vmem:[%s699 + $0x42c] sm:$0xf]
                  %980 = vst [vmem:[%s700 + $0x22c] sm:$0xf] %v979
                  %v981 = vld [vmem:[%s699 + $0x430] sm:$0xf]
                  %982 = vst [vmem:[%s700 + $0x230] sm:$0xf] %v981
                  %v983 = vld [vmem:[%s699 + $0x434] sm:$0xf]
                  %984 = vst [vmem:[%s700 + $0x234] sm:$0xf] %v983
                  %v985 = vld [vmem:[%s699 + $0x438] sm:$0xf]
                  %986 = vst [vmem:[%s700 + $0x238] sm:$0xf] %v985
                  %v987 = vld [vmem:[%s699 + $0x43c] sm:$0xf]
                  %988 = vst [vmem:[%s700 + $0x23c] sm:$0xf] %v987
                  %v989 = vld [vmem:[%s699 + $0x440] sm:$0xf]
                  %990 = vst [vmem:[%s700 + $0x240] sm:$0xf] %v989
                  %v991 = vld [vmem:[%s699 + $0x444] sm:$0xf]
                  %992 = vst [vmem:[%s700 + $0x244] sm:$0xf] %v991
                  %v993 = vld [vmem:[%s699 + $0x448] sm:$0xf]
                  %994 = vst [vmem:[%s700 + $0x248] sm:$0xf] %v993
                  %v995 = vld [vmem:[%s699 + $0x44c] sm:$0xf]
                  %996 = vst [vmem:[%s700 + $0x24c] sm:$0xf] %v995
                  %v997 = vld [vmem:[%s699 + $0x450] sm:$0xf]
                  %998 = vst [vmem:[%s700 + $0x250] sm:$0xf] %v997
                  %v999 = vld [vmem:[%s699 + $0x454] sm:$0xf]
                  %1000 = vst [vmem:[%s700 + $0x254] sm:$0xf] %v999
                  %v1001 = vld [vmem:[%s699 + $0x458] sm:$0xf]
                  %1002 = vst [vmem:[%s700 + $0x258] sm:$0xf] %v1001
                  %v1003 = vld [vmem:[%s699 + $0x45c] sm:$0xf]
                  %1004 = vst [vmem:[%s700 + $0x25c] sm:$0xf] %v1003
                  %v1005 = vld [vmem:[%s699 + $0x460] sm:$0xf]
                  %1006 = vst [vmem:[%s700 + $0x260] sm:$0xf] %v1005
                  %v1007 = vld [vmem:[%s699 + $0x464] sm:$0xf]
                  %1008 = vst [vmem:[%s700 + $0x264] sm:$0xf] %v1007
                  %v1009 = vld [vmem:[%s699 + $0x468] sm:$0xf]
                  %1010 = vst [vmem:[%s700 + $0x268] sm:$0xf] %v1009
                  %v1011 = vld [vmem:[%s699 + $0x46c] sm:$0xf]
                  %1012 = vst [vmem:[%s700 + $0x26c] sm:$0xf] %v1011
                  %v1013 = vld [vmem:[%s699 + $0x470] sm:$0xf]
                  %1014 = vst [vmem:[%s700 + $0x270] sm:$0xf] %v1013
                  %v1015 = vld [vmem:[%s699 + $0x474] sm:$0xf]
                  %1016 = vst [vmem:[%s700 + $0x274] sm:$0xf] %v1015
                  %v1017 = vld [vmem:[%s699 + $0x478] sm:$0xf]
                  %1018 = vst [vmem:[%s700 + $0x278] sm:$0xf] %v1017
                  %v1019 = vld [vmem:[%s699 + $0x47c] sm:$0xf]
                  %1020 = vst [vmem:[%s700 + $0x27c] sm:$0xf] %v1019
                  %v1021 = vld [vmem:[%s699 + $0x500] sm:$0xf]
                  %1022 = vst [vmem:[%s700 + $0x280] sm:$0xf] %v1021
                  %v1023 = vld [vmem:[%s699 + $0x504] sm:$0xf]
                  %1024 = vst [vmem:[%s700 + $0x284] sm:$0xf] %v1023
                  %v1025 = vld [vmem:[%s699 + $0x508] sm:$0xf]
                  %1026 = vst [vmem:[%s700 + $0x288] sm:$0xf] %v1025
                  %v1027 = vld [vmem:[%s699 + $0x50c] sm:$0xf]
                  %1028 = vst [vmem:[%s700 + $0x28c] sm:$0xf] %v1027
                  %v1029 = vld [vmem:[%s699 + $0x510] sm:$0xf]
                  %1030 = vst [vmem:[%s700 + $0x290] sm:$0xf] %v1029
                  %v1031 = vld [vmem:[%s699 + $0x514] sm:$0xf]
                  %1032 = vst [vmem:[%s700 + $0x294] sm:$0xf] %v1031
                  %v1033 = vld [vmem:[%s699 + $0x518] sm:$0xf]
                  %1034 = vst [vmem:[%s700 + $0x298] sm:$0xf] %v1033
                  %v1035 = vld [vmem:[%s699 + $0x51c] sm:$0xf]
                  %1036 = vst [vmem:[%s700 + $0x29c] sm:$0xf] %v1035
                  %v1037 = vld [vmem:[%s699 + $0x520] sm:$0xf]
                  %1038 = vst [vmem:[%s700 + $0x2a0] sm:$0xf] %v1037
                  %v1039 = vld [vmem:[%s699 + $0x524] sm:$0xf]
                  %1040 = vst [vmem:[%s700 + $0x2a4] sm:$0xf] %v1039
                  %v1041 = vld [vmem:[%s699 + $0x528] sm:$0xf]
                  %1042 = vst [vmem:[%s700 + $0x2a8] sm:$0xf] %v1041
                  %v1043 = vld [vmem:[%s699 + $0x52c] sm:$0xf]
                  %1044 = vst [vmem:[%s700 + $0x2ac] sm:$0xf] %v1043
                  %v1045 = vld [vmem:[%s699 + $0x530] sm:$0xf]
                  %1046 = vst [vmem:[%s700 + $0x2b0] sm:$0xf] %v1045
                  %v1047 = vld [vmem:[%s699 + $0x534] sm:$0xf]
                  %1048 = vst [vmem:[%s700 + $0x2b4] sm:$0xf] %v1047
                  %v1049 = vld [vmem:[%s699 + $0x538] sm:$0xf]
                  %1050 = vst [vmem:[%s700 + $0x2b8] sm:$0xf] %v1049
                  %v1051 = vld [vmem:[%s699 + $0x53c] sm:$0xf]
                  %1052 = vst [vmem:[%s700 + $0x2bc] sm:$0xf] %v1051
                  %v1053 = vld [vmem:[%s699 + $0x540] sm:$0xf]
                  %1054 = vst [vmem:[%s700 + $0x2c0] sm:$0xf] %v1053
                  %v1055 = vld [vmem:[%s699 + $0x544] sm:$0xf]
                  %1056 = vst [vmem:[%s700 + $0x2c4] sm:$0xf] %v1055
                  %v1057 = vld [vmem:[%s699 + $0x548] sm:$0xf]
                  %1058 = vst [vmem:[%s700 + $0x2c8] sm:$0xf] %v1057
                  %v1059 = vld [vmem:[%s699 + $0x54c] sm:$0xf]
                  %1060 = vst [vmem:[%s700 + $0x2cc] sm:$0xf] %v1059
                  %v1061 = vld [vmem:[%s699 + $0x550] sm:$0xf]
                  %1062 = vst [vmem:[%s700 + $0x2d0] sm:$0xf] %v1061
                  %v1063 = vld [vmem:[%s699 + $0x554] sm:$0xf]
                  %1064 = vst [vmem:[%s700 + $0x2d4] sm:$0xf] %v1063
                  %v1065 = vld [vmem:[%s699 + $0x558] sm:$0xf]
                  %1066 = vst [vmem:[%s700 + $0x2d8] sm:$0xf] %v1065
                  %v1067 = vld [vmem:[%s699 + $0x55c] sm:$0xf]
                  %1068 = vst [vmem:[%s700 + $0x2dc] sm:$0xf] %v1067
                  %v1069 = vld [vmem:[%s699 + $0x560] sm:$0xf]
                  %1070 = vst [vmem:[%s700 + $0x2e0] sm:$0xf] %v1069
                  %v1071 = vld [vmem:[%s699 + $0x564] sm:$0xf]
                  %1072 = vst [vmem:[%s700 + $0x2e4] sm:$0xf] %v1071
                  %v1073 = vld [vmem:[%s699 + $0x568] sm:$0xf]
                  %1074 = vst [vmem:[%s700 + $0x2e8] sm:$0xf] %v1073
                  %v1075 = vld [vmem:[%s699 + $0x56c] sm:$0xf]
                  %1076 = vst [vmem:[%s700 + $0x2ec] sm:$0xf] %v1075
                  %v1077 = vld [vmem:[%s699 + $0x570] sm:$0xf]
                  %1078 = vst [vmem:[%s700 + $0x2f0] sm:$0xf] %v1077
                  %v1079 = vld [vmem:[%s699 + $0x574] sm:$0xf]
                  %1080 = vst [vmem:[%s700 + $0x2f4] sm:$0xf] %v1079
                  %v1081 = vld [vmem:[%s699 + $0x578] sm:$0xf]
                  %1082 = vst [vmem:[%s700 + $0x2f8] sm:$0xf] %v1081
                  %v1083 = vld [vmem:[%s699 + $0x57c] sm:$0xf]
                  %1084 = vst [vmem:[%s700 + $0x2fc] sm:$0xf] %v1083
                  %v1085 = vld [vmem:[%s699 + $0x600] sm:$0xf]
                  %1086 = vst [vmem:[%s700 + $0x300] sm:$0xf] %v1085
                  %v1087 = vld [vmem:[%s699 + $0x604] sm:$0xf]
                  %1088 = vst [vmem:[%s700 + $0x304] sm:$0xf] %v1087
                  %v1089 = vld [vmem:[%s699 + $0x608] sm:$0xf]
                  %1090 = vst [vmem:[%s700 + $0x308] sm:$0xf] %v1089
                  %v1091 = vld [vmem:[%s699 + $0x60c] sm:$0xf]
                  %1092 = vst [vmem:[%s700 + $0x30c] sm:$0xf] %v1091
                  %v1093 = vld [vmem:[%s699 + $0x610] sm:$0xf]
                  %1094 = vst [vmem:[%s700 + $0x310] sm:$0xf] %v1093
                  %v1095 = vld [vmem:[%s699 + $0x614] sm:$0xf]
                  %1096 = vst [vmem:[%s700 + $0x314] sm:$0xf] %v1095
                  %v1097 = vld [vmem:[%s699 + $0x618] sm:$0xf]
                  %1098 = vst [vmem:[%s700 + $0x318] sm:$0xf] %v1097
                  %v1099 = vld [vmem:[%s699 + $0x61c] sm:$0xf]
                  %1100 = vst [vmem:[%s700 + $0x31c] sm:$0xf] %v1099
                  %v1101 = vld [vmem:[%s699 + $0x620] sm:$0xf]
                  %1102 = vst [vmem:[%s700 + $0x320] sm:$0xf] %v1101
                  %v1103 = vld [vmem:[%s699 + $0x624] sm:$0xf]
                  %1104 = vst [vmem:[%s700 + $0x324] sm:$0xf] %v1103
                  %v1105 = vld [vmem:[%s699 + $0x628] sm:$0xf]
                  %1106 = vst [vmem:[%s700 + $0x328] sm:$0xf] %v1105
                  %v1107 = vld [vmem:[%s699 + $0x62c] sm:$0xf]
                  %1108 = vst [vmem:[%s700 + $0x32c] sm:$0xf] %v1107
                  %v1109 = vld [vmem:[%s699 + $0x630] sm:$0xf]
                  %1110 = vst [vmem:[%s700 + $0x330] sm:$0xf] %v1109
                  %v1111 = vld [vmem:[%s699 + $0x634] sm:$0xf]
                  %1112 = vst [vmem:[%s700 + $0x334] sm:$0xf] %v1111
                  %v1113 = vld [vmem:[%s699 + $0x638] sm:$0xf]
                  %1114 = vst [vmem:[%s700 + $0x338] sm:$0xf] %v1113
                  %v1115 = vld [vmem:[%s699 + $0x63c] sm:$0xf]
                  %1116 = vst [vmem:[%s700 + $0x33c] sm:$0xf] %v1115
                  %v1117 = vld [vmem:[%s699 + $0x640] sm:$0xf]
                  %1118 = vst [vmem:[%s700 + $0x340] sm:$0xf] %v1117
                  %v1119 = vld [vmem:[%s699 + $0x644] sm:$0xf]
                  %1120 = vst [vmem:[%s700 + $0x344] sm:$0xf] %v1119
                  %v1121 = vld [vmem:[%s699 + $0x648] sm:$0xf]
                  %1122 = vst [vmem:[%s700 + $0x348] sm:$0xf] %v1121
                  %v1123 = vld [vmem:[%s699 + $0x64c] sm:$0xf]
                  %1124 = vst [vmem:[%s700 + $0x34c] sm:$0xf] %v1123
                  %v1125 = vld [vmem:[%s699 + $0x650] sm:$0xf]
                  %1126 = vst [vmem:[%s700 + $0x350] sm:$0xf] %v1125
                  %v1127 = vld [vmem:[%s699 + $0x654] sm:$0xf]
                  %1128 = vst [vmem:[%s700 + $0x354] sm:$0xf] %v1127
                  %v1129 = vld [vmem:[%s699 + $0x658] sm:$0xf]
                  %1130 = vst [vmem:[%s700 + $0x358] sm:$0xf] %v1129
                  %v1131 = vld [vmem:[%s699 + $0x65c] sm:$0xf]
                  %1132 = vst [vmem:[%s700 + $0x35c] sm:$0xf] %v1131
                  %v1133 = vld [vmem:[%s699 + $0x660] sm:$0xf]
                  %1134 = vst [vmem:[%s700 + $0x360] sm:$0xf] %v1133
                  %v1135 = vld [vmem:[%s699 + $0x664] sm:$0xf]
                  %1136 = vst [vmem:[%s700 + $0x364] sm:$0xf] %v1135
                  %v1137 = vld [vmem:[%s699 + $0x668] sm:$0xf]
                  %1138 = vst [vmem:[%s700 + $0x368] sm:$0xf] %v1137
                  %v1139 = vld [vmem:[%s699 + $0x66c] sm:$0xf]
                  %1140 = vst [vmem:[%s700 + $0x36c] sm:$0xf] %v1139
                  %v1141 = vld [vmem:[%s699 + $0x670] sm:$0xf]
                  %1142 = vst [vmem:[%s700 + $0x370] sm:$0xf] %v1141
                  %v1143 = vld [vmem:[%s699 + $0x674] sm:$0xf]
                  %1144 = vst [vmem:[%s700 + $0x374] sm:$0xf] %v1143
                  %v1145 = vld [vmem:[%s699 + $0x678] sm:$0xf]
                  %1146 = vst [vmem:[%s700 + $0x378] sm:$0xf] %v1145
                  %v1147 = vld [vmem:[%s699 + $0x67c] sm:$0xf]
                  %1148 = vst [vmem:[%s700 + $0x37c] sm:$0xf] %v1147
                  %v1149 = vld [vmem:[%s699 + $0x700] sm:$0xf]
                  %1150 = vst [vmem:[%s700 + $0x380] sm:$0xf] %v1149
                  %v1151 = vld [vmem:[%s699 + $0x704] sm:$0xf]
                  %1152 = vst [vmem:[%s700 + $0x384] sm:$0xf] %v1151
                  %v1153 = vld [vmem:[%s699 + $0x708] sm:$0xf]
                  %1154 = vst [vmem:[%s700 + $0x388] sm:$0xf] %v1153
                  %v1155 = vld [vmem:[%s699 + $0x70c] sm:$0xf]
                  %1156 = vst [vmem:[%s700 + $0x38c] sm:$0xf] %v1155
                  %v1157 = vld [vmem:[%s699 + $0x710] sm:$0xf]
                  %1158 = vst [vmem:[%s700 + $0x390] sm:$0xf] %v1157
                  %v1159 = vld [vmem:[%s699 + $0x714] sm:$0xf]
                  %1160 = vst [vmem:[%s700 + $0x394] sm:$0xf] %v1159
                  %v1161 = vld [vmem:[%s699 + $0x718] sm:$0xf]
                  %1162 = vst [vmem:[%s700 + $0x398] sm:$0xf] %v1161
                  %v1163 = vld [vmem:[%s699 + $0x71c] sm:$0xf]
                  %1164 = vst [vmem:[%s700 + $0x39c] sm:$0xf] %v1163
                  %v1165 = vld [vmem:[%s699 + $0x720] sm:$0xf]
                  %1166 = vst [vmem:[%s700 + $0x3a0] sm:$0xf] %v1165
                  %v1167 = vld [vmem:[%s699 + $0x724] sm:$0xf]
                  %1168 = vst [vmem:[%s700 + $0x3a4] sm:$0xf] %v1167
                  %v1169 = vld [vmem:[%s699 + $0x728] sm:$0xf]
                  %1170 = vst [vmem:[%s700 + $0x3a8] sm:$0xf] %v1169
                  %v1171 = vld [vmem:[%s699 + $0x72c] sm:$0xf]
                  %1172 = vst [vmem:[%s700 + $0x3ac] sm:$0xf] %v1171
                  %v1173 = vld [vmem:[%s699 + $0x730] sm:$0xf]
                  %1174 = vst [vmem:[%s700 + $0x3b0] sm:$0xf] %v1173
                  %v1175 = vld [vmem:[%s699 + $0x734] sm:$0xf]
                  %1176 = vst [vmem:[%s700 + $0x3b4] sm:$0xf] %v1175
                  %v1177 = vld [vmem:[%s699 + $0x738] sm:$0xf]
                  %1178 = vst [vmem:[%s700 + $0x3b8] sm:$0xf] %v1177
                  %v1179 = vld [vmem:[%s699 + $0x73c] sm:$0xf]
                  %1180 = vst [vmem:[%s700 + $0x3bc] sm:$0xf] %v1179
                  %v1181 = vld [vmem:[%s699 + $0x740] sm:$0xf]
                  %1182 = vst [vmem:[%s700 + $0x3c0] sm:$0xf] %v1181
                  %v1183 = vld [vmem:[%s699 + $0x744] sm:$0xf]
                  %1184 = vst [vmem:[%s700 + $0x3c4] sm:$0xf] %v1183
                  %v1185 = vld [vmem:[%s699 + $0x748] sm:$0xf]
                  %1186 = vst [vmem:[%s700 + $0x3c8] sm:$0xf] %v1185
                  %v1187 = vld [vmem:[%s699 + $0x74c] sm:$0xf]
                  %1188 = vst [vmem:[%s700 + $0x3cc] sm:$0xf] %v1187
                  %v1189 = vld [vmem:[%s699 + $0x750] sm:$0xf]
                  %1190 = vst [vmem:[%s700 + $0x3d0] sm:$0xf] %v1189
                  %v1191 = vld [vmem:[%s699 + $0x754] sm:$0xf]
                  %1192 = vst [vmem:[%s700 + $0x3d4] sm:$0xf] %v1191
                  %v1193 = vld [vmem:[%s699 + $0x758] sm:$0xf]
                  %1194 = vst [vmem:[%s700 + $0x3d8] sm:$0xf] %v1193
                  %v1195 = vld [vmem:[%s699 + $0x75c] sm:$0xf]
                  %1196 = vst [vmem:[%s700 + $0x3dc] sm:$0xf] %v1195
                  %v1197 = vld [vmem:[%s699 + $0x760] sm:$0xf]
                  %1198 = vst [vmem:[%s700 + $0x3e0] sm:$0xf] %v1197
                  %v1199 = vld [vmem:[%s699 + $0x764] sm:$0xf]
                  %1200 = vst [vmem:[%s700 + $0x3e4] sm:$0xf] %v1199
                  %v1201 = vld [vmem:[%s699 + $0x768] sm:$0xf]
                  %1202 = vst [vmem:[%s700 + $0x3e8] sm:$0xf] %v1201
                  %v1203 = vld [vmem:[%s699 + $0x76c] sm:$0xf]
                  %1204 = vst [vmem:[%s700 + $0x3ec] sm:$0xf] %v1203
                  %v1205 = vld [vmem:[%s699 + $0x770] sm:$0xf]
                  %1206 = vst [vmem:[%s700 + $0x3f0] sm:$0xf] %v1205
                  %v1207 = vld [vmem:[%s699 + $0x774] sm:$0xf]
                  %1208 = vst [vmem:[%s700 + $0x3f4] sm:$0xf] %v1207
                  %v1209 = vld [vmem:[%s699 + $0x778] sm:$0xf]
                  %1210 = vst [vmem:[%s700 + $0x3f8] sm:$0xf] %v1209
                  %v1211 = vld [vmem:[%s699 + $0x77c] sm:$0xf]
                  %1212 = vst [vmem:[%s700 + $0x3fc] sm:$0xf] %v1211
                  %v1213 = vld [vmem:[%s699 + $0x800] sm:$0xf]
                  %1214 = vst [vmem:[%s700 + $0x400] sm:$0xf] %v1213
                  %v1215 = vld [vmem:[%s699 + $0x804] sm:$0xf]
                  %1216 = vst [vmem:[%s700 + $0x404] sm:$0xf] %v1215
                  %v1217 = vld [vmem:[%s699 + $0x808] sm:$0xf]
                  %1218 = vst [vmem:[%s700 + $0x408] sm:$0xf] %v1217
                  %v1219 = vld [vmem:[%s699 + $0x80c] sm:$0xf]
                  %1220 = vst [vmem:[%s700 + $0x40c] sm:$0xf] %v1219
                  %v1221 = vld [vmem:[%s699 + $0x810] sm:$0xf]
                  %1222 = vst [vmem:[%s700 + $0x410] sm:$0xf] %v1221
                  %v1223 = vld [vmem:[%s699 + $0x814] sm:$0xf]
                  %1224 = vst [vmem:[%s700 + $0x414] sm:$0xf] %v1223
                  %v1225 = vld [vmem:[%s699 + $0x818] sm:$0xf]
                  %1226 = vst [vmem:[%s700 + $0x418] sm:$0xf] %v1225
                  %v1227 = vld [vmem:[%s699 + $0x81c] sm:$0xf]
                  %1228 = vst [vmem:[%s700 + $0x41c] sm:$0xf] %v1227
                  %v1229 = vld [vmem:[%s699 + $0x820] sm:$0xf]
                  %1230 = vst [vmem:[%s700 + $0x420] sm:$0xf] %v1229
                  %v1231 = vld [vmem:[%s699 + $0x824] sm:$0xf]
                  %1232 = vst [vmem:[%s700 + $0x424] sm:$0xf] %v1231
                  %v1233 = vld [vmem:[%s699 + $0x828] sm:$0xf]
                  %1234 = vst [vmem:[%s700 + $0x428] sm:$0xf] %v1233
                  %v1235 = vld [vmem:[%s699 + $0x82c] sm:$0xf]
                  %1236 = vst [vmem:[%s700 + $0x42c] sm:$0xf] %v1235
                  %v1237 = vld [vmem:[%s699 + $0x830] sm:$0xf]
                  %1238 = vst [vmem:[%s700 + $0x430] sm:$0xf] %v1237
                  %v1239 = vld [vmem:[%s699 + $0x834] sm:$0xf]
                  %1240 = vst [vmem:[%s700 + $0x434] sm:$0xf] %v1239
                  %v1241 = vld [vmem:[%s699 + $0x838] sm:$0xf]
                  %1242 = vst [vmem:[%s700 + $0x438] sm:$0xf] %v1241
                  %v1243 = vld [vmem:[%s699 + $0x83c] sm:$0xf]
                  %1244 = vst [vmem:[%s700 + $0x43c] sm:$0xf] %v1243
                  %v1245 = vld [vmem:[%s699 + $0x840] sm:$0xf]
                  %1246 = vst [vmem:[%s700 + $0x440] sm:$0xf] %v1245
                  %v1247 = vld [vmem:[%s699 + $0x844] sm:$0xf]
                  %1248 = vst [vmem:[%s700 + $0x444] sm:$0xf] %v1247
                  %v1249 = vld [vmem:[%s699 + $0x848] sm:$0xf]
                  %1250 = vst [vmem:[%s700 + $0x448] sm:$0xf] %v1249
                  %v1251 = vld [vmem:[%s699 + $0x84c] sm:$0xf]
                  %1252 = vst [vmem:[%s700 + $0x44c] sm:$0xf] %v1251
                  %v1253 = vld [vmem:[%s699 + $0x850] sm:$0xf]
                  %1254 = vst [vmem:[%s700 + $0x450] sm:$0xf] %v1253
                  %v1255 = vld [vmem:[%s699 + $0x854] sm:$0xf]
                  %1256 = vst [vmem:[%s700 + $0x454] sm:$0xf] %v1255
                  %v1257 = vld [vmem:[%s699 + $0x858] sm:$0xf]
                  %1258 = vst [vmem:[%s700 + $0x458] sm:$0xf] %v1257
                  %v1259 = vld [vmem:[%s699 + $0x85c] sm:$0xf]
                  %1260 = vst [vmem:[%s700 + $0x45c] sm:$0xf] %v1259
                  %v1261 = vld [vmem:[%s699 + $0x860] sm:$0xf]
                  %1262 = vst [vmem:[%s700 + $0x460] sm:$0xf] %v1261
                  %v1263 = vld [vmem:[%s699 + $0x864] sm:$0xf]
                  %1264 = vst [vmem:[%s700 + $0x464] sm:$0xf] %v1263
                  %v1265 = vld [vmem:[%s699 + $0x868] sm:$0xf]
                  %1266 = vst [vmem:[%s700 + $0x468] sm:$0xf] %v1265
                  %v1267 = vld [vmem:[%s699 + $0x86c] sm:$0xf]
                  %1268 = vst [vmem:[%s700 + $0x46c] sm:$0xf] %v1267
                  %v1269 = vld [vmem:[%s699 + $0x870] sm:$0xf]
                  %1270 = vst [vmem:[%s700 + $0x470] sm:$0xf] %v1269
                  %v1271 = vld [vmem:[%s699 + $0x874] sm:$0xf]
                  %1272 = vst [vmem:[%s700 + $0x474] sm:$0xf] %v1271
                  %v1273 = vld [vmem:[%s699 + $0x878] sm:$0xf]
                  %1274 = vst [vmem:[%s700 + $0x478] sm:$0xf] %v1273
                  %v1275 = vld [vmem:[%s699 + $0x87c] sm:$0xf]
                  %1276 = vst [vmem:[%s700 + $0x47c] sm:$0xf] %v1275
                $region55: #{_stem.3} parent=42 // loop_footer
                  %s698 = sadd.s32 1, %s694
                $region56: #{_stem.3} parent=42 // loop_footer_branch
                  %693 = sbr.rel target = $region52
                $region57: #{_stem.3} parent=42 // loop_exit
                  _
              $region43: #{_stem.3} parent=27 // pred_fallthru
                _
            $region28: #{_stem.3} parent=23 // pred_fallthru
              _
            // Predicated region
            $region29: #{_stem.3} parent=23 // pred_check
              _
            $region30: #{_stem.3} parent=23 // pred_check_branch
              %96 = sbr.rel (0) target = $region32
            $region31: #{_stem.3} parent=23 // pred_region
              loop: start=0, step=1, limit=1
              $region33: #{_stem.3} parent=31 // loop_pre_header
                _
              $region34: #{_stem.3} parent=31 // loop_header
                %s99 = sphi 0, %s103
                %p100 = scmp.ge.s32.totalorder %s99, 1
                %s104 = sphi %s90, %s90
                %s105 = sphi %s87, %s87
              $region35: #{_stem.3} parent=31 // loop_header_branch
                %102 = sbr.rel (%p100) target = $region39
              $region36: #{_stem.3} parent=31 // loop_body
                %v106 = vld [vmem:[%s104] sm:$0xf]
                %107 = vst [vmem:[%s105] sm:$0xf] %v106
                %v108 = vld [vmem:[%s104 + $0x4] sm:$0xf]
                %109 = vst [vmem:[%s105 + $0x4] sm:$0xf] %v108
                %v110 = vld [vmem:[%s104 + $0x8] sm:$0xf]
                %111 = vst [vmem:[%s105 + $0x8] sm:$0xf] %v110
                %v112 = vld [vmem:[%s104 + $0xc] sm:$0xf]
                %113 = vst [vmem:[%s105 + $0xc] sm:$0xf] %v112
                %v114 = vld [vmem:[%s104 + $0x10] sm:$0xf]
                %115 = vst [vmem:[%s105 + $0x10] sm:$0xf] %v114
                %v116 = vld [vmem:[%s104 + $0x14] sm:$0xf]
                %117 = vst [vmem:[%s105 + $0x14] sm:$0xf] %v116
                %v118 = vld [vmem:[%s104 + $0x18] sm:$0xf]
                %119 = vst [vmem:[%s105 + $0x18] sm:$0xf] %v118
                %v120 = vld [vmem:[%s104 + $0x1c] sm:$0xf]
                %121 = vst [vmem:[%s105 + $0x1c] sm:$0xf] %v120
                %v122 = vld [vmem:[%s104 + $0x20] sm:$0xf]
                %123 = vst [vmem:[%s105 + $0x20] sm:$0xf] %v122
                %v124 = vld [vmem:[%s104 + $0x24] sm:$0xf]
                %125 = vst [vmem:[%s105 + $0x24] sm:$0xf] %v124
                %v126 = vld [vmem:[%s104 + $0x28] sm:$0xf]
                %127 = vst [vmem:[%s105 + $0x28] sm:$0xf] %v126
                %v128 = vld [vmem:[%s104 + $0x2c] sm:$0xf]
                %129 = vst [vmem:[%s105 + $0x2c] sm:$0xf] %v128
                %v130 = vld [vmem:[%s104 + $0x30] sm:$0xf]
                %131 = vst [vmem:[%s105 + $0x30] sm:$0xf] %v130
                %v132 = vld [vmem:[%s104 + $0x34] sm:$0xf]
                %133 = vst [vmem:[%s105 + $0x34] sm:$0xf] %v132
                %v134 = vld [vmem:[%s104 + $0x38] sm:$0xf]
                %135 = vst [vmem:[%s105 + $0x38] sm:$0xf] %v134
                %v136 = vld [vmem:[%s104 + $0x3c] sm:$0xf]
                %137 = vst [vmem:[%s105 + $0x3c] sm:$0xf] %v136
                %v138 = vld [vmem:[%s104 + $0x40] sm:$0xf]
                %139 = vst [vmem:[%s105 + $0x40] sm:$0xf] %v138
                %v140 = vld [vmem:[%s104 + $0x44] sm:$0xf]
                %141 = vst [vmem:[%s105 + $0x44] sm:$0xf] %v140
                %v142 = vld [vmem:[%s104 + $0x48] sm:$0xf]
                %143 = vst [vmem:[%s105 + $0x48] sm:$0xf] %v142
                %v144 = vld [vmem:[%s104 + $0x4c] sm:$0xf]
                %145 = vst [vmem:[%s105 + $0x4c] sm:$0xf] %v144
                %v146 = vld [vmem:[%s104 + $0x50] sm:$0xf]
                %147 = vst [vmem:[%s105 + $0x50] sm:$0xf] %v146
                %v148 = vld [vmem:[%s104 + $0x54] sm:$0xf]
                %149 = vst [vmem:[%s105 + $0x54] sm:$0xf] %v148
                %v150 = vld [vmem:[%s104 + $0x58] sm:$0xf]
                %151 = vst [vmem:[%s105 + $0x58] sm:$0xf] %v150
                %v152 = vld [vmem:[%s104 + $0x5c] sm:$0xf]
                %153 = vst [vmem:[%s105 + $0x5c] sm:$0xf] %v152
                %v154 = vld [vmem:[%s104 + $0x60] sm:$0xf]
                %155 = vst [vmem:[%s105 + $0x60] sm:$0xf] %v154
                %v156 = vld [vmem:[%s104 + $0x64] sm:$0xf]
                %157 = vst [vmem:[%s105 + $0x64] sm:$0xf] %v156
                %v158 = vld [vmem:[%s104 + $0x68] sm:$0xf]
                %159 = vst [vmem:[%s105 + $0x68] sm:$0xf] %v158
                %v160 = vld [vmem:[%s104 + $0x6c] sm:$0xf]
                %161 = vst [vmem:[%s105 + $0x6c] sm:$0xf] %v160
                %v162 = vld [vmem:[%s104 + $0x70] sm:$0xf]
                %163 = vst [vmem:[%s105 + $0x70] sm:$0xf] %v162
                %v164 = vld [vmem:[%s104 + $0x74] sm:$0xf]
                %165 = vst [vmem:[%s105 + $0x74] sm:$0xf] %v164
                %v166 = vld [vmem:[%s104 + $0x78] sm:$0xf]
                %167 = vst [vmem:[%s105 + $0x78] sm:$0xf] %v166
                %v168 = vld [vmem:[%s104 + $0x7c] sm:$0xf]
                %169 = vst [vmem:[%s105 + $0x7c] sm:$0xf] %v168
                %v170 = vld [vmem:[%s104 + $0x100] sm:$0xf]
                %171 = vst [vmem:[%s105 + $0x80] sm:$0xf] %v170
                %v172 = vld [vmem:[%s104 + $0x104] sm:$0xf]
                %173 = vst [vmem:[%s105 + $0x84] sm:$0xf] %v172
                %v174 = vld [vmem:[%s104 + $0x108] sm:$0xf]
                %175 = vst [vmem:[%s105 + $0x88] sm:$0xf] %v174
                %v176 = vld [vmem:[%s104 + $0x10c] sm:$0xf]
                %177 = vst [vmem:[%s105 + $0x8c] sm:$0xf] %v176
                %v178 = vld [vmem:[%s104 + $0x110] sm:$0xf]
                %179 = vst [vmem:[%s105 + $0x90] sm:$0xf] %v178
                %v180 = vld [vmem:[%s104 + $0x114] sm:$0xf]
                %181 = vst [vmem:[%s105 + $0x94] sm:$0xf] %v180
                %v182 = vld [vmem:[%s104 + $0x118] sm:$0xf]
                %183 = vst [vmem:[%s105 + $0x98] sm:$0xf] %v182
                %v184 = vld [vmem:[%s104 + $0x11c] sm:$0xf]
                %185 = vst [vmem:[%s105 + $0x9c] sm:$0xf] %v184
                %v186 = vld [vmem:[%s104 + $0x120] sm:$0xf]
                %187 = vst [vmem:[%s105 + $0xa0] sm:$0xf] %v186
                %v188 = vld [vmem:[%s104 + $0x124] sm:$0xf]
                %189 = vst [vmem:[%s105 + $0xa4] sm:$0xf] %v188
                %v190 = vld [vmem:[%s104 + $0x128] sm:$0xf]
                %191 = vst [vmem:[%s105 + $0xa8] sm:$0xf] %v190
                %v192 = vld [vmem:[%s104 + $0x12c] sm:$0xf]
                %193 = vst [vmem:[%s105 + $0xac] sm:$0xf] %v192
                %v194 = vld [vmem:[%s104 + $0x130] sm:$0xf]
                %195 = vst [vmem:[%s105 + $0xb0] sm:$0xf] %v194
                %v196 = vld [vmem:[%s104 + $0x134] sm:$0xf]
                %197 = vst [vmem:[%s105 + $0xb4] sm:$0xf] %v196
                %v198 = vld [vmem:[%s104 + $0x138] sm:$0xf]
                %199 = vst [vmem:[%s105 + $0xb8] sm:$0xf] %v198
                %v200 = vld [vmem:[%s104 + $0x13c] sm:$0xf]
                %201 = vst [vmem:[%s105 + $0xbc] sm:$0xf] %v200
                %v202 = vld [vmem:[%s104 + $0x140] sm:$0xf]
                %203 = vst [vmem:[%s105 + $0xc0] sm:$0xf] %v202
                %v204 = vld [vmem:[%s104 + $0x144] sm:$0xf]
                %205 = vst [vmem:[%s105 + $0xc4] sm:$0xf] %v204
                %v206 = vld [vmem:[%s104 + $0x148] sm:$0xf]
                %207 = vst [vmem:[%s105 + $0xc8] sm:$0xf] %v206
                %v208 = vld [vmem:[%s104 + $0x14c] sm:$0xf]
                %209 = vst [vmem:[%s105 + $0xcc] sm:$0xf] %v208
                %v210 = vld [vmem:[%s104 + $0x150] sm:$0xf]
                %211 = vst [vmem:[%s105 + $0xd0] sm:$0xf] %v210
                %v212 = vld [vmem:[%s104 + $0x154] sm:$0xf]
                %213 = vst [vmem:[%s105 + $0xd4] sm:$0xf] %v212
                %v214 = vld [vmem:[%s104 + $0x158] sm:$0xf]
                %215 = vst [vmem:[%s105 + $0xd8] sm:$0xf] %v214
                %v216 = vld [vmem:[%s104 + $0x15c] sm:$0xf]
                %217 = vst [vmem:[%s105 + $0xdc] sm:$0xf] %v216
                %v218 = vld [vmem:[%s104 + $0x160] sm:$0xf]
                %219 = vst [vmem:[%s105 + $0xe0] sm:$0xf] %v218
                %v220 = vld [vmem:[%s104 + $0x164] sm:$0xf]
                %221 = vst [vmem:[%s105 + $0xe4] sm:$0xf] %v220
                %v222 = vld [vmem:[%s104 + $0x168] sm:$0xf]
                %223 = vst [vmem:[%s105 + $0xe8] sm:$0xf] %v222
                %v224 = vld [vmem:[%s104 + $0x16c] sm:$0xf]
                %225 = vst [vmem:[%s105 + $0xec] sm:$0xf] %v224
                %v226 = vld [vmem:[%s104 + $0x170] sm:$0xf]
                %227 = vst [vmem:[%s105 + $0xf0] sm:$0xf] %v226
                %v228 = vld [vmem:[%s104 + $0x174] sm:$0xf]
                %229 = vst [vmem:[%s105 + $0xf4] sm:$0xf] %v228
                %v230 = vld [vmem:[%s104 + $0x178] sm:$0xf]
                %231 = vst [vmem:[%s105 + $0xf8] sm:$0xf] %v230
                %v232 = vld [vmem:[%s104 + $0x17c] sm:$0xf]
                %233 = vst [vmem:[%s105 + $0xfc] sm:$0xf] %v232
                %v234 = vld [vmem:[%s104 + $0x200] sm:$0xf]
                %235 = vst [vmem:[%s105 + $0x100] sm:$0xf] %v234
                %v236 = vld [vmem:[%s104 + $0x204] sm:$0xf]
                %237 = vst [vmem:[%s105 + $0x104] sm:$0xf] %v236
                %v238 = vld [vmem:[%s104 + $0x208] sm:$0xf]
                %239 = vst [vmem:[%s105 + $0x108] sm:$0xf] %v238
                %v240 = vld [vmem:[%s104 + $0x20c] sm:$0xf]
                %241 = vst [vmem:[%s105 + $0x10c] sm:$0xf] %v240
                %v242 = vld [vmem:[%s104 + $0x210] sm:$0xf]
                %243 = vst [vmem:[%s105 + $0x110] sm:$0xf] %v242
                %v244 = vld [vmem:[%s104 + $0x214] sm:$0xf]
                %245 = vst [vmem:[%s105 + $0x114] sm:$0xf] %v244
                %v246 = vld [vmem:[%s104 + $0x218] sm:$0xf]
                %247 = vst [vmem:[%s105 + $0x118] sm:$0xf] %v246
                %v248 = vld [vmem:[%s104 + $0x21c] sm:$0xf]
                %249 = vst [vmem:[%s105 + $0x11c] sm:$0xf] %v248
                %v250 = vld [vmem:[%s104 + $0x220] sm:$0xf]
                %251 = vst [vmem:[%s105 + $0x120] sm:$0xf] %v250
                %v252 = vld [vmem:[%s104 + $0x224] sm:$0xf]
                %253 = vst [vmem:[%s105 + $0x124] sm:$0xf] %v252
                %v254 = vld [vmem:[%s104 + $0x228] sm:$0xf]
                %255 = vst [vmem:[%s105 + $0x128] sm:$0xf] %v254
                %v256 = vld [vmem:[%s104 + $0x22c] sm:$0xf]
                %257 = vst [vmem:[%s105 + $0x12c] sm:$0xf] %v256
                %v258 = vld [vmem:[%s104 + $0x230] sm:$0xf]
                %259 = vst [vmem:[%s105 + $0x130] sm:$0xf] %v258
                %v260 = vld [vmem:[%s104 + $0x234] sm:$0xf]
                %261 = vst [vmem:[%s105 + $0x134] sm:$0xf] %v260
                %v262 = vld [vmem:[%s104 + $0x238] sm:$0xf]
                %263 = vst [vmem:[%s105 + $0x138] sm:$0xf] %v262
                %v264 = vld [vmem:[%s104 + $0x23c] sm:$0xf]
                %265 = vst [vmem:[%s105 + $0x13c] sm:$0xf] %v264
                %v266 = vld [vmem:[%s104 + $0x240] sm:$0xf]
                %267 = vst [vmem:[%s105 + $0x140] sm:$0xf] %v266
                %v268 = vld [vmem:[%s104 + $0x244] sm:$0xf]
                %269 = vst [vmem:[%s105 + $0x144] sm:$0xf] %v268
                %v270 = vld [vmem:[%s104 + $0x248] sm:$0xf]
                %271 = vst [vmem:[%s105 + $0x148] sm:$0xf] %v270
                %v272 = vld [vmem:[%s104 + $0x24c] sm:$0xf]
                %273 = vst [vmem:[%s105 + $0x14c] sm:$0xf] %v272
                %v274 = vld [vmem:[%s104 + $0x250] sm:$0xf]
                %275 = vst [vmem:[%s105 + $0x150] sm:$0xf] %v274
                %v276 = vld [vmem:[%s104 + $0x254] sm:$0xf]
                %277 = vst [vmem:[%s105 + $0x154] sm:$0xf] %v276
                %v278 = vld [vmem:[%s104 + $0x258] sm:$0xf]
                %279 = vst [vmem:[%s105 + $0x158] sm:$0xf] %v278
                %v280 = vld [vmem:[%s104 + $0x25c] sm:$0xf]
                %281 = vst [vmem:[%s105 + $0x15c] sm:$0xf] %v280
                %v282 = vld [vmem:[%s104 + $0x260] sm:$0xf]
                %283 = vst [vmem:[%s105 + $0x160] sm:$0xf] %v282
                %v284 = vld [vmem:[%s104 + $0x264] sm:$0xf]
                %285 = vst [vmem:[%s105 + $0x164] sm:$0xf] %v284
                %v286 = vld [vmem:[%s104 + $0x268] sm:$0xf]
                %287 = vst [vmem:[%s105 + $0x168] sm:$0xf] %v286
                %v288 = vld [vmem:[%s104 + $0x26c] sm:$0xf]
                %289 = vst [vmem:[%s105 + $0x16c] sm:$0xf] %v288
                %v290 = vld [vmem:[%s104 + $0x270] sm:$0xf]
                %291 = vst [vmem:[%s105 + $0x170] sm:$0xf] %v290
                %v292 = vld [vmem:[%s104 + $0x274] sm:$0xf]
                %293 = vst [vmem:[%s105 + $0x174] sm:$0xf] %v292
                %v294 = vld [vmem:[%s104 + $0x278] sm:$0xf]
                %295 = vst [vmem:[%s105 + $0x178] sm:$0xf] %v294
                %v296 = vld [vmem:[%s104 + $0x27c] sm:$0xf]
                %297 = vst [vmem:[%s105 + $0x17c] sm:$0xf] %v296
                %v298 = vld [vmem:[%s104 + $0x300] sm:$0xf]
                %299 = vst [vmem:[%s105 + $0x180] sm:$0xf] %v298
                %v300 = vld [vmem:[%s104 + $0x304] sm:$0xf]
                %301 = vst [vmem:[%s105 + $0x184] sm:$0xf] %v300
                %v302 = vld [vmem:[%s104 + $0x308] sm:$0xf]
                %303 = vst [vmem:[%s105 + $0x188] sm:$0xf] %v302
                %v304 = vld [vmem:[%s104 + $0x30c] sm:$0xf]
                %305 = vst [vmem:[%s105 + $0x18c] sm:$0xf] %v304
                %v306 = vld [vmem:[%s104 + $0x310] sm:$0xf]
                %307 = vst [vmem:[%s105 + $0x190] sm:$0xf] %v306
                %v308 = vld [vmem:[%s104 + $0x314] sm:$0xf]
                %309 = vst [vmem:[%s105 + $0x194] sm:$0xf] %v308
                %v310 = vld [vmem:[%s104 + $0x318] sm:$0xf]
                %311 = vst [vmem:[%s105 + $0x198] sm:$0xf] %v310
                %v312 = vld [vmem:[%s104 + $0x31c] sm:$0xf]
                %313 = vst [vmem:[%s105 + $0x19c] sm:$0xf] %v312
                %v314 = vld [vmem:[%s104 + $0x320] sm:$0xf]
                %315 = vst [vmem:[%s105 + $0x1a0] sm:$0xf] %v314
                %v316 = vld [vmem:[%s104 + $0x324] sm:$0xf]
                %317 = vst [vmem:[%s105 + $0x1a4] sm:$0xf] %v316
                %v318 = vld [vmem:[%s104 + $0x328] sm:$0xf]
                %319 = vst [vmem:[%s105 + $0x1a8] sm:$0xf] %v318
                %v320 = vld [vmem:[%s104 + $0x32c] sm:$0xf]
                %321 = vst [vmem:[%s105 + $0x1ac] sm:$0xf] %v320
                %v322 = vld [vmem:[%s104 + $0x330] sm:$0xf]
                %323 = vst [vmem:[%s105 + $0x1b0] sm:$0xf] %v322
                %v324 = vld [vmem:[%s104 + $0x334] sm:$0xf]
                %325 = vst [vmem:[%s105 + $0x1b4] sm:$0xf] %v324
                %v326 = vld [vmem:[%s104 + $0x338] sm:$0xf]
                %327 = vst [vmem:[%s105 + $0x1b8] sm:$0xf] %v326
                %v328 = vld [vmem:[%s104 + $0x33c] sm:$0xf]
                %329 = vst [vmem:[%s105 + $0x1bc] sm:$0xf] %v328
                %v330 = vld [vmem:[%s104 + $0x340] sm:$0xf]
                %331 = vst [vmem:[%s105 + $0x1c0] sm:$0xf] %v330
                %v332 = vld [vmem:[%s104 + $0x344] sm:$0xf]
                %333 = vst [vmem:[%s105 + $0x1c4] sm:$0xf] %v332
                %v334 = vld [vmem:[%s104 + $0x348] sm:$0xf]
                %335 = vst [vmem:[%s105 + $0x1c8] sm:$0xf] %v334
                %v336 = vld [vmem:[%s104 + $0x34c] sm:$0xf]
                %337 = vst [vmem:[%s105 + $0x1cc] sm:$0xf] %v336
                %v338 = vld [vmem:[%s104 + $0x350] sm:$0xf]
                %339 = vst [vmem:[%s105 + $0x1d0] sm:$0xf] %v338
                %v340 = vld [vmem:[%s104 + $0x354] sm:$0xf]
                %341 = vst [vmem:[%s105 + $0x1d4] sm:$0xf] %v340
                %v342 = vld [vmem:[%s104 + $0x358] sm:$0xf]
                %343 = vst [vmem:[%s105 + $0x1d8] sm:$0xf] %v342
                %v344 = vld [vmem:[%s104 + $0x35c] sm:$0xf]
                %345 = vst [vmem:[%s105 + $0x1dc] sm:$0xf] %v344
                %v346 = vld [vmem:[%s104 + $0x360] sm:$0xf]
                %347 = vst [vmem:[%s105 + $0x1e0] sm:$0xf] %v346
                %v348 = vld [vmem:[%s104 + $0x364] sm:$0xf]
                %349 = vst [vmem:[%s105 + $0x1e4] sm:$0xf] %v348
                %v350 = vld [vmem:[%s104 + $0x368] sm:$0xf]
                %351 = vst [vmem:[%s105 + $0x1e8] sm:$0xf] %v350
                %v352 = vld [vmem:[%s104 + $0x36c] sm:$0xf]
                %353 = vst [vmem:[%s105 + $0x1ec] sm:$0xf] %v352
                %v354 = vld [vmem:[%s104 + $0x370] sm:$0xf]
                %355 = vst [vmem:[%s105 + $0x1f0] sm:$0xf] %v354
                %v356 = vld [vmem:[%s104 + $0x374] sm:$0xf]
                %357 = vst [vmem:[%s105 + $0x1f4] sm:$0xf] %v356
                %v358 = vld [vmem:[%s104 + $0x378] sm:$0xf]
                %359 = vst [vmem:[%s105 + $0x1f8] sm:$0xf] %v358
                %v360 = vld [vmem:[%s104 + $0x37c] sm:$0xf]
                %361 = vst [vmem:[%s105 + $0x1fc] sm:$0xf] %v360
                %v362 = vld [vmem:[%s104 + $0x400] sm:$0xf]
                %363 = vst [vmem:[%s105 + $0x200] sm:$0xf] %v362
                %v364 = vld [vmem:[%s104 + $0x404] sm:$0xf]
                %365 = vst [vmem:[%s105 + $0x204] sm:$0xf] %v364
                %v366 = vld [vmem:[%s104 + $0x408] sm:$0xf]
                %367 = vst [vmem:[%s105 + $0x208] sm:$0xf] %v366
                %v368 = vld [vmem:[%s104 + $0x40c] sm:$0xf]
                %369 = vst [vmem:[%s105 + $0x20c] sm:$0xf] %v368
                %v370 = vld [vmem:[%s104 + $0x410] sm:$0xf]
                %371 = vst [vmem:[%s105 + $0x210] sm:$0xf] %v370
                %v372 = vld [vmem:[%s104 + $0x414] sm:$0xf]
                %373 = vst [vmem:[%s105 + $0x214] sm:$0xf] %v372
                %v374 = vld [vmem:[%s104 + $0x418] sm:$0xf]
                %375 = vst [vmem:[%s105 + $0x218] sm:$0xf] %v374
                %v376 = vld [vmem:[%s104 + $0x41c] sm:$0xf]
                %377 = vst [vmem:[%s105 + $0x21c] sm:$0xf] %v376
                %v378 = vld [vmem:[%s104 + $0x420] sm:$0xf]
                %379 = vst [vmem:[%s105 + $0x220] sm:$0xf] %v378
                %v380 = vld [vmem:[%s104 + $0x424] sm:$0xf]
                %381 = vst [vmem:[%s105 + $0x224] sm:$0xf] %v380
                %v382 = vld [vmem:[%s104 + $0x428] sm:$0xf]
                %383 = vst [vmem:[%s105 + $0x228] sm:$0xf] %v382
                %v384 = vld [vmem:[%s104 + $0x42c] sm:$0xf]
                %385 = vst [vmem:[%s105 + $0x22c] sm:$0xf] %v384
                %v386 = vld [vmem:[%s104 + $0x430] sm:$0xf]
                %387 = vst [vmem:[%s105 + $0x230] sm:$0xf] %v386
                %v388 = vld [vmem:[%s104 + $0x434] sm:$0xf]
                %389 = vst [vmem:[%s105 + $0x234] sm:$0xf] %v388
                %v390 = vld [vmem:[%s104 + $0x438] sm:$0xf]
                %391 = vst [vmem:[%s105 + $0x238] sm:$0xf] %v390
                %v392 = vld [vmem:[%s104 + $0x43c] sm:$0xf]
                %393 = vst [vmem:[%s105 + $0x23c] sm:$0xf] %v392
                %v394 = vld [vmem:[%s104 + $0x440] sm:$0xf]
                %395 = vst [vmem:[%s105 + $0x240] sm:$0xf] %v394
                %v396 = vld [vmem:[%s104 + $0x444] sm:$0xf]
                %397 = vst [vmem:[%s105 + $0x244] sm:$0xf] %v396
                %v398 = vld [vmem:[%s104 + $0x448] sm:$0xf]
                %399 = vst [vmem:[%s105 + $0x248] sm:$0xf] %v398
                %v400 = vld [vmem:[%s104 + $0x44c] sm:$0xf]
                %401 = vst [vmem:[%s105 + $0x24c] sm:$0xf] %v400
                %v402 = vld [vmem:[%s104 + $0x450] sm:$0xf]
                %403 = vst [vmem:[%s105 + $0x250] sm:$0xf] %v402
                %v404 = vld [vmem:[%s104 + $0x454] sm:$0xf]
                %405 = vst [vmem:[%s105 + $0x254] sm:$0xf] %v404
                %v406 = vld [vmem:[%s104 + $0x458] sm:$0xf]
                %407 = vst [vmem:[%s105 + $0x258] sm:$0xf] %v406
                %v408 = vld [vmem:[%s104 + $0x45c] sm:$0xf]
                %409 = vst [vmem:[%s105 + $0x25c] sm:$0xf] %v408
                %v410 = vld [vmem:[%s104 + $0x460] sm:$0xf]
                %411 = vst [vmem:[%s105 + $0x260] sm:$0xf] %v410
                %v412 = vld [vmem:[%s104 + $0x464] sm:$0xf]
                %413 = vst [vmem:[%s105 + $0x264] sm:$0xf] %v412
                %v414 = vld [vmem:[%s104 + $0x468] sm:$0xf]
                %415 = vst [vmem:[%s105 + $0x268] sm:$0xf] %v414
                %v416 = vld [vmem:[%s104 + $0x46c] sm:$0xf]
                %417 = vst [vmem:[%s105 + $0x26c] sm:$0xf] %v416
                %v418 = vld [vmem:[%s104 + $0x470] sm:$0xf]
                %419 = vst [vmem:[%s105 + $0x270] sm:$0xf] %v418
                %v420 = vld [vmem:[%s104 + $0x474] sm:$0xf]
                %421 = vst [vmem:[%s105 + $0x274] sm:$0xf] %v420
                %v422 = vld [vmem:[%s104 + $0x478] sm:$0xf]
                %423 = vst [vmem:[%s105 + $0x278] sm:$0xf] %v422
                %v424 = vld [vmem:[%s104 + $0x47c] sm:$0xf]
                %425 = vst [vmem:[%s105 + $0x27c] sm:$0xf] %v424
                %v426 = vld [vmem:[%s104 + $0x500] sm:$0xf]
                %427 = vst [vmem:[%s105 + $0x280] sm:$0xf] %v426
                %v428 = vld [vmem:[%s104 + $0x504] sm:$0xf]
                %429 = vst [vmem:[%s105 + $0x284] sm:$0xf] %v428
                %v430 = vld [vmem:[%s104 + $0x508] sm:$0xf]
                %431 = vst [vmem:[%s105 + $0x288] sm:$0xf] %v430
                %v432 = vld [vmem:[%s104 + $0x50c] sm:$0xf]
                %433 = vst [vmem:[%s105 + $0x28c] sm:$0xf] %v432
                %v434 = vld [vmem:[%s104 + $0x510] sm:$0xf]
                %435 = vst [vmem:[%s105 + $0x290] sm:$0xf] %v434
                %v436 = vld [vmem:[%s104 + $0x514] sm:$0xf]
                %437 = vst [vmem:[%s105 + $0x294] sm:$0xf] %v436
                %v438 = vld [vmem:[%s104 + $0x518] sm:$0xf]
                %439 = vst [vmem:[%s105 + $0x298] sm:$0xf] %v438
                %v440 = vld [vmem:[%s104 + $0x51c] sm:$0xf]
                %441 = vst [vmem:[%s105 + $0x29c] sm:$0xf] %v440
                %v442 = vld [vmem:[%s104 + $0x520] sm:$0xf]
                %443 = vst [vmem:[%s105 + $0x2a0] sm:$0xf] %v442
                %v444 = vld [vmem:[%s104 + $0x524] sm:$0xf]
                %445 = vst [vmem:[%s105 + $0x2a4] sm:$0xf] %v444
                %v446 = vld [vmem:[%s104 + $0x528] sm:$0xf]
                %447 = vst [vmem:[%s105 + $0x2a8] sm:$0xf] %v446
                %v448 = vld [vmem:[%s104 + $0x52c] sm:$0xf]
                %449 = vst [vmem:[%s105 + $0x2ac] sm:$0xf] %v448
                %v450 = vld [vmem:[%s104 + $0x530] sm:$0xf]
                %451 = vst [vmem:[%s105 + $0x2b0] sm:$0xf] %v450
                %v452 = vld [vmem:[%s104 + $0x534] sm:$0xf]
                %453 = vst [vmem:[%s105 + $0x2b4] sm:$0xf] %v452
                %v454 = vld [vmem:[%s104 + $0x538] sm:$0xf]
                %455 = vst [vmem:[%s105 + $0x2b8] sm:$0xf] %v454
                %v456 = vld [vmem:[%s104 + $0x53c] sm:$0xf]
                %457 = vst [vmem:[%s105 + $0x2bc] sm:$0xf] %v456
                %v458 = vld [vmem:[%s104 + $0x540] sm:$0xf]
                %459 = vst [vmem:[%s105 + $0x2c0] sm:$0xf] %v458
                %v460 = vld [vmem:[%s104 + $0x544] sm:$0xf]
                %461 = vst [vmem:[%s105 + $0x2c4] sm:$0xf] %v460
                %v462 = vld [vmem:[%s104 + $0x548] sm:$0xf]
                %463 = vst [vmem:[%s105 + $0x2c8] sm:$0xf] %v462
                %v464 = vld [vmem:[%s104 + $0x54c] sm:$0xf]
                %465 = vst [vmem:[%s105 + $0x2cc] sm:$0xf] %v464
                %v466 = vld [vmem:[%s104 + $0x550] sm:$0xf]
                %467 = vst [vmem:[%s105 + $0x2d0] sm:$0xf] %v466
                %v468 = vld [vmem:[%s104 + $0x554] sm:$0xf]
                %469 = vst [vmem:[%s105 + $0x2d4] sm:$0xf] %v468
                %v470 = vld [vmem:[%s104 + $0x558] sm:$0xf]
                %471 = vst [vmem:[%s105 + $0x2d8] sm:$0xf] %v470
                %v472 = vld [vmem:[%s104 + $0x55c] sm:$0xf]
                %473 = vst [vmem:[%s105 + $0x2dc] sm:$0xf] %v472
                %v474 = vld [vmem:[%s104 + $0x560] sm:$0xf]
                %475 = vst [vmem:[%s105 + $0x2e0] sm:$0xf] %v474
                %v476 = vld [vmem:[%s104 + $0x564] sm:$0xf]
                %477 = vst [vmem:[%s105 + $0x2e4] sm:$0xf] %v476
                %v478 = vld [vmem:[%s104 + $0x568] sm:$0xf]
                %479 = vst [vmem:[%s105 + $0x2e8] sm:$0xf] %v478
                %v480 = vld [vmem:[%s104 + $0x56c] sm:$0xf]
                %481 = vst [vmem:[%s105 + $0x2ec] sm:$0xf] %v480
                %v482 = vld [vmem:[%s104 + $0x570] sm:$0xf]
                %483 = vst [vmem:[%s105 + $0x2f0] sm:$0xf] %v482
                %v484 = vld [vmem:[%s104 + $0x574] sm:$0xf]
                %485 = vst [vmem:[%s105 + $0x2f4] sm:$0xf] %v484
                %v486 = vld [vmem:[%s104 + $0x578] sm:$0xf]
                %487 = vst [vmem:[%s105 + $0x2f8] sm:$0xf] %v486
                %v488 = vld [vmem:[%s104 + $0x57c] sm:$0xf]
                %489 = vst [vmem:[%s105 + $0x2fc] sm:$0xf] %v488
                %v490 = vld [vmem:[%s104 + $0x600] sm:$0xf]
                %491 = vst [vmem:[%s105 + $0x300] sm:$0xf] %v490
                %v492 = vld [vmem:[%s104 + $0x604] sm:$0xf]
                %493 = vst [vmem:[%s105 + $0x304] sm:$0xf] %v492
                %v494 = vld [vmem:[%s104 + $0x608] sm:$0xf]
                %495 = vst [vmem:[%s105 + $0x308] sm:$0xf] %v494
                %v496 = vld [vmem:[%s104 + $0x60c] sm:$0xf]
                %497 = vst [vmem:[%s105 + $0x30c] sm:$0xf] %v496
                %v498 = vld [vmem:[%s104 + $0x610] sm:$0xf]
                %499 = vst [vmem:[%s105 + $0x310] sm:$0xf] %v498
                %v500 = vld [vmem:[%s104 + $0x614] sm:$0xf]
                %501 = vst [vmem:[%s105 + $0x314] sm:$0xf] %v500
                %v502 = vld [vmem:[%s104 + $0x618] sm:$0xf]
                %503 = vst [vmem:[%s105 + $0x318] sm:$0xf] %v502
                %v504 = vld [vmem:[%s104 + $0x61c] sm:$0xf]
                %505 = vst [vmem:[%s105 + $0x31c] sm:$0xf] %v504
                %v506 = vld [vmem:[%s104 + $0x620] sm:$0xf]
                %507 = vst [vmem:[%s105 + $0x320] sm:$0xf] %v506
                %v508 = vld [vmem:[%s104 + $0x624] sm:$0xf]
                %509 = vst [vmem:[%s105 + $0x324] sm:$0xf] %v508
                %v510 = vld [vmem:[%s104 + $0x628] sm:$0xf]
                %511 = vst [vmem:[%s105 + $0x328] sm:$0xf] %v510
                %v512 = vld [vmem:[%s104 + $0x62c] sm:$0xf]
                %513 = vst [vmem:[%s105 + $0x32c] sm:$0xf] %v512
                %v514 = vld [vmem:[%s104 + $0x630] sm:$0xf]
                %515 = vst [vmem:[%s105 + $0x330] sm:$0xf] %v514
                %v516 = vld [vmem:[%s104 + $0x634] sm:$0xf]
                %517 = vst [vmem:[%s105 + $0x334] sm:$0xf] %v516
                %v518 = vld [vmem:[%s104 + $0x638] sm:$0xf]
                %519 = vst [vmem:[%s105 + $0x338] sm:$0xf] %v518
                %v520 = vld [vmem:[%s104 + $0x63c] sm:$0xf]
                %521 = vst [vmem:[%s105 + $0x33c] sm:$0xf] %v520
                %v522 = vld [vmem:[%s104 + $0x640] sm:$0xf]
                %523 = vst [vmem:[%s105 + $0x340] sm:$0xf] %v522
                %v524 = vld [vmem:[%s104 + $0x644] sm:$0xf]
                %525 = vst [vmem:[%s105 + $0x344] sm:$0xf] %v524
                %v526 = vld [vmem:[%s104 + $0x648] sm:$0xf]
                %527 = vst [vmem:[%s105 + $0x348] sm:$0xf] %v526
                %v528 = vld [vmem:[%s104 + $0x64c] sm:$0xf]
                %529 = vst [vmem:[%s105 + $0x34c] sm:$0xf] %v528
                %v530 = vld [vmem:[%s104 + $0x650] sm:$0xf]
                %531 = vst [vmem:[%s105 + $0x350] sm:$0xf] %v530
                %v532 = vld [vmem:[%s104 + $0x654] sm:$0xf]
                %533 = vst [vmem:[%s105 + $0x354] sm:$0xf] %v532
                %v534 = vld [vmem:[%s104 + $0x658] sm:$0xf]
                %535 = vst [vmem:[%s105 + $0x358] sm:$0xf] %v534
                %v536 = vld [vmem:[%s104 + $0x65c] sm:$0xf]
                %537 = vst [vmem:[%s105 + $0x35c] sm:$0xf] %v536
                %v538 = vld [vmem:[%s104 + $0x660] sm:$0xf]
                %539 = vst [vmem:[%s105 + $0x360] sm:$0xf] %v538
                %v540 = vld [vmem:[%s104 + $0x664] sm:$0xf]
                %541 = vst [vmem:[%s105 + $0x364] sm:$0xf] %v540
                %v542 = vld [vmem:[%s104 + $0x668] sm:$0xf]
                %543 = vst [vmem:[%s105 + $0x368] sm:$0xf] %v542
                %v544 = vld [vmem:[%s104 + $0x66c] sm:$0xf]
                %545 = vst [vmem:[%s105 + $0x36c] sm:$0xf] %v544
                %v546 = vld [vmem:[%s104 + $0x670] sm:$0xf]
                %547 = vst [vmem:[%s105 + $0x370] sm:$0xf] %v546
                %v548 = vld [vmem:[%s104 + $0x674] sm:$0xf]
                %549 = vst [vmem:[%s105 + $0x374] sm:$0xf] %v548
                %v550 = vld [vmem:[%s104 + $0x678] sm:$0xf]
                %551 = vst [vmem:[%s105 + $0x378] sm:$0xf] %v550
                %v552 = vld [vmem:[%s104 + $0x67c] sm:$0xf]
                %553 = vst [vmem:[%s105 + $0x37c] sm:$0xf] %v552
                %v554 = vld [vmem:[%s104 + $0x700] sm:$0xf]
                %555 = vst [vmem:[%s105 + $0x380] sm:$0xf] %v554
                %v556 = vld [vmem:[%s104 + $0x704] sm:$0xf]
                %557 = vst [vmem:[%s105 + $0x384] sm:$0xf] %v556
                %v558 = vld [vmem:[%s104 + $0x708] sm:$0xf]
                %559 = vst [vmem:[%s105 + $0x388] sm:$0xf] %v558
                %v560 = vld [vmem:[%s104 + $0x70c] sm:$0xf]
                %561 = vst [vmem:[%s105 + $0x38c] sm:$0xf] %v560
                %v562 = vld [vmem:[%s104 + $0x710] sm:$0xf]
                %563 = vst [vmem:[%s105 + $0x390] sm:$0xf] %v562
                %v564 = vld [vmem:[%s104 + $0x714] sm:$0xf]
                %565 = vst [vmem:[%s105 + $0x394] sm:$0xf] %v564
                %v566 = vld [vmem:[%s104 + $0x718] sm:$0xf]
                %567 = vst [vmem:[%s105 + $0x398] sm:$0xf] %v566
                %v568 = vld [vmem:[%s104 + $0x71c] sm:$0xf]
                %569 = vst [vmem:[%s105 + $0x39c] sm:$0xf] %v568
                %v570 = vld [vmem:[%s104 + $0x720] sm:$0xf]
                %571 = vst [vmem:[%s105 + $0x3a0] sm:$0xf] %v570
                %v572 = vld [vmem:[%s104 + $0x724] sm:$0xf]
                %573 = vst [vmem:[%s105 + $0x3a4] sm:$0xf] %v572
                %v574 = vld [vmem:[%s104 + $0x728] sm:$0xf]
                %575 = vst [vmem:[%s105 + $0x3a8] sm:$0xf] %v574
                %v576 = vld [vmem:[%s104 + $0x72c] sm:$0xf]
                %577 = vst [vmem:[%s105 + $0x3ac] sm:$0xf] %v576
                %v578 = vld [vmem:[%s104 + $0x730] sm:$0xf]
                %579 = vst [vmem:[%s105 + $0x3b0] sm:$0xf] %v578
                %v580 = vld [vmem:[%s104 + $0x734] sm:$0xf]
                %581 = vst [vmem:[%s105 + $0x3b4] sm:$0xf] %v580
                %v582 = vld [vmem:[%s104 + $0x738] sm:$0xf]
                %583 = vst [vmem:[%s105 + $0x3b8] sm:$0xf] %v582
                %v584 = vld [vmem:[%s104 + $0x73c] sm:$0xf]
                %585 = vst [vmem:[%s105 + $0x3bc] sm:$0xf] %v584
                %v586 = vld [vmem:[%s104 + $0x740] sm:$0xf]
                %587 = vst [vmem:[%s105 + $0x3c0] sm:$0xf] %v586
                %v588 = vld [vmem:[%s104 + $0x744] sm:$0xf]
                %589 = vst [vmem:[%s105 + $0x3c4] sm:$0xf] %v588
                %v590 = vld [vmem:[%s104 + $0x748] sm:$0xf]
                %591 = vst [vmem:[%s105 + $0x3c8] sm:$0xf] %v590
                %v592 = vld [vmem:[%s104 + $0x74c] sm:$0xf]
                %593 = vst [vmem:[%s105 + $0x3cc] sm:$0xf] %v592
                %v594 = vld [vmem:[%s104 + $0x750] sm:$0xf]
                %595 = vst [vmem:[%s105 + $0x3d0] sm:$0xf] %v594
                %v596 = vld [vmem:[%s104 + $0x754] sm:$0xf]
                %597 = vst [vmem:[%s105 + $0x3d4] sm:$0xf] %v596
                %v598 = vld [vmem:[%s104 + $0x758] sm:$0xf]
                %599 = vst [vmem:[%s105 + $0x3d8] sm:$0xf] %v598
                %v600 = vld [vmem:[%s104 + $0x75c] sm:$0xf]
                %601 = vst [vmem:[%s105 + $0x3dc] sm:$0xf] %v600
                %v602 = vld [vmem:[%s104 + $0x760] sm:$0xf]
                %603 = vst [vmem:[%s105 + $0x3e0] sm:$0xf] %v602
                %v604 = vld [vmem:[%s104 + $0x764] sm:$0xf]
                %605 = vst [vmem:[%s105 + $0x3e4] sm:$0xf] %v604
                %v606 = vld [vmem:[%s104 + $0x768] sm:$0xf]
                %607 = vst [vmem:[%s105 + $0x3e8] sm:$0xf] %v606
                %v608 = vld [vmem:[%s104 + $0x76c] sm:$0xf]
                %609 = vst [vmem:[%s105 + $0x3ec] sm:$0xf] %v608
                %v610 = vld [vmem:[%s104 + $0x770] sm:$0xf]
                %611 = vst [vmem:[%s105 + $0x3f0] sm:$0xf] %v610
                %v612 = vld [vmem:[%s104 + $0x774] sm:$0xf]
                %613 = vst [vmem:[%s105 + $0x3f4] sm:$0xf] %v612
                %v614 = vld [vmem:[%s104 + $0x778] sm:$0xf]
                %615 = vst [vmem:[%s105 + $0x3f8] sm:$0xf] %v614
                %v616 = vld [vmem:[%s104 + $0x77c] sm:$0xf]
                %617 = vst [vmem:[%s105 + $0x3fc] sm:$0xf] %v616
                %v618 = vld [vmem:[%s104 + $0x800] sm:$0xf]
                %619 = vst [vmem:[%s105 + $0x400] sm:$0xf] %v618
                %v620 = vld [vmem:[%s104 + $0x804] sm:$0xf]
                %621 = vst [vmem:[%s105 + $0x404] sm:$0xf] %v620
                %v622 = vld [vmem:[%s104 + $0x808] sm:$0xf]
                %623 = vst [vmem:[%s105 + $0x408] sm:$0xf] %v622
                %v624 = vld [vmem:[%s104 + $0x80c] sm:$0xf]
                %625 = vst [vmem:[%s105 + $0x40c] sm:$0xf] %v624
                %v626 = vld [vmem:[%s104 + $0x810] sm:$0xf]
                %627 = vst [vmem:[%s105 + $0x410] sm:$0xf] %v626
                %v628 = vld [vmem:[%s104 + $0x814] sm:$0xf]
                %629 = vst [vmem:[%s105 + $0x414] sm:$0xf] %v628
                %v630 = vld [vmem:[%s104 + $0x818] sm:$0xf]
                %631 = vst [vmem:[%s105 + $0x418] sm:$0xf] %v630
                %v632 = vld [vmem:[%s104 + $0x81c] sm:$0xf]
                %633 = vst [vmem:[%s105 + $0x41c] sm:$0xf] %v632
                %v634 = vld [vmem:[%s104 + $0x820] sm:$0xf]
                %635 = vst [vmem:[%s105 + $0x420] sm:$0xf] %v634
                %v636 = vld [vmem:[%s104 + $0x824] sm:$0xf]
                %637 = vst [vmem:[%s105 + $0x424] sm:$0xf] %v636
                %v638 = vld [vmem:[%s104 + $0x828] sm:$0xf]
                %639 = vst [vmem:[%s105 + $0x428] sm:$0xf] %v638
                %v640 = vld [vmem:[%s104 + $0x82c] sm:$0xf]
                %641 = vst [vmem:[%s105 + $0x42c] sm:$0xf] %v640
                %v642 = vld [vmem:[%s104 + $0x830] sm:$0xf]
                %643 = vst [vmem:[%s105 + $0x430] sm:$0xf] %v642
                %v644 = vld [vmem:[%s104 + $0x834] sm:$0xf]
                %645 = vst [vmem:[%s105 + $0x434] sm:$0xf] %v644
                %v646 = vld [vmem:[%s104 + $0x838] sm:$0xf]
                %647 = vst [vmem:[%s105 + $0x438] sm:$0xf] %v646
                %v648 = vld [vmem:[%s104 + $0x83c] sm:$0xf]
                %649 = vst [vmem:[%s105 + $0x43c] sm:$0xf] %v648
                %v650 = vld [vmem:[%s104 + $0x840] sm:$0xf]
                %651 = vst [vmem:[%s105 + $0x440] sm:$0xf] %v650
                %v652 = vld [vmem:[%s104 + $0x844] sm:$0xf]
                %653 = vst [vmem:[%s105 + $0x444] sm:$0xf] %v652
                %v654 = vld [vmem:[%s104 + $0x848] sm:$0xf]
                %655 = vst [vmem:[%s105 + $0x448] sm:$0xf] %v654
                %v656 = vld [vmem:[%s104 + $0x84c] sm:$0xf]
                %657 = vst [vmem:[%s105 + $0x44c] sm:$0xf] %v656
                %v658 = vld [vmem:[%s104 + $0x850] sm:$0xf]
                %659 = vst [vmem:[%s105 + $0x450] sm:$0xf] %v658
                %v660 = vld [vmem:[%s104 + $0x854] sm:$0xf]
                %661 = vst [vmem:[%s105 + $0x454] sm:$0xf] %v660
                %v662 = vld [vmem:[%s104 + $0x858] sm:$0xf]
                %663 = vst [vmem:[%s105 + $0x458] sm:$0xf] %v662
                %v664 = vld [vmem:[%s104 + $0x85c] sm:$0xf]
                %665 = vst [vmem:[%s105 + $0x45c] sm:$0xf] %v664
                %v666 = vld [vmem:[%s104 + $0x860] sm:$0xf]
                %667 = vst [vmem:[%s105 + $0x460] sm:$0xf] %v666
                %v668 = vld [vmem:[%s104 + $0x864] sm:$0xf]
                %669 = vst [vmem:[%s105 + $0x464] sm:$0xf] %v668
                %v670 = vld [vmem:[%s104 + $0x868] sm:$0xf]
                %671 = vst [vmem:[%s105 + $0x468] sm:$0xf] %v670
                %v672 = vld [vmem:[%s104 + $0x86c] sm:$0xf]
                %673 = vst [vmem:[%s105 + $0x46c] sm:$0xf] %v672
                %v674 = vld [vmem:[%s104 + $0x870] sm:$0xf]
                %675 = vst [vmem:[%s105 + $0x470] sm:$0xf] %v674
                %v676 = vld [vmem:[%s104 + $0x874] sm:$0xf]
                %677 = vst [vmem:[%s105 + $0x474] sm:$0xf] %v676
                %v678 = vld [vmem:[%s104 + $0x878] sm:$0xf]
                %679 = vst [vmem:[%s105 + $0x478] sm:$0xf] %v678
                %v680 = vld [vmem:[%s104 + $0x87c] sm:$0xf]
                %681 = vst [vmem:[%s105 + $0x47c] sm:$0xf] %v680
              $region37: #{_stem.3} parent=31 // loop_footer
                %s103 = sadd.s32 1, %s99
              $region38: #{_stem.3} parent=31 // loop_footer_branch
                %98 = sbr.rel target = $region34
              $region39: #{_stem.3} parent=31 // loop_exit
                _
            $region32: #{_stem.3} parent=23 // pred_fallthru
              _
          $region24: #{_stem.3} parent=19 // pred_fallthru
            _
          %1277 = vnop
        $region20: #{_stem.3} parent=15 // pred_fallthru
          _
      $region16: #{_stem.3} parent=5 // pred_fallthru
        _
      %p1278 = scmp.le.s32.totalorder 1, %s10
      %p1279 = scmp.lt.s32.totalorder %s10, 3
      %p1280 = pnand %p1278, %p1279
      %p1281 = pneg %p1280
      // Predicated region
      $region58: #{_stem.3} parent=5 // pred_check
        _
      $region59: #{_stem.3} parent=5 // pred_check_branch
        %1283 = sbr.rel (%p1280) target = $region61
      $region60: #{_stem.3} parent=5 // pred_region
        %s1284 = ssub.s32 %s10, 1
        %s1285 = sand.u32 %s23, 1
        %s1286 = sand.u32 %s23, 1
        %s1287 = smul.addr %s1286, 1152
        %s1288 = scalar_lea.vmem [#allocation2], %s1287
        // Predicated region
        $region62: #{_stem.3} parent=60 // pred_check
          %p1289 = pneg %p36
        $region63: #{_stem.3} parent=60 // pred_check_branch
          %1291 = sbr.rel (%p1289) target = $region65
        $region64: #{_stem.3} parent=60 // pred_region
          _
        $region65: #{_stem.3} parent=60 // pred_fallthru
          _
        %s1292 = sand.u32 %s23, 1
        %s1293 = sand.u32 %s23, 1
        %s1294 = smul.addr %s1293, 1152
        %s1295 = scalar_lea.vmem [#allocation2], %s1294
        %p1296 = pneg %p36
        %p1297 = pneg %p33
        %p1298 = pneg %p62
        %p1299 = pneg %p59
        %s1300 = sand.u32 %s49, 1
        %s1301 = scalar_lea.sflag [#allocation4], %s1300
        %s1302 = sand.u32 %s49, 1
        %s1303 = smul.addr %s1302, 128
        %s1304 = scalar_lea.vmem [#allocation3], %s1303
        %s1305 = smul.u32 32, %s15
        %s1306 = smul.u32 32, %s15
        %v1308 = vld [vmem:[%s1288] sm:$0xf]
        %v1309 = vld [vmem:[%s1288 + $0x4] sm:$0xf]
        %v1310 = vld [vmem:[%s1288 + $0x8] sm:$0xf]
        %v1311 = vld [vmem:[%s1288 + $0xc] sm:$0xf]
        %v1312 = vld [vmem:[%s1288 + $0x10] sm:$0xf]
        %v1313 = vld [vmem:[%s1288 + $0x14] sm:$0xf]
        %v1314 = vld [vmem:[%s1288 + $0x18] sm:$0xf]
        %v1315 = vld [vmem:[%s1288 + $0x1c] sm:$0xf]
        %v1316 = vld [vmem:[%s1288 + $0x20] sm:$0xf]
        %v1317 = vld [vmem:[%s1288 + $0x24] sm:$0xf]
        %v1318 = vld [vmem:[%s1288 + $0x28] sm:$0xf]
        %v1319 = vld [vmem:[%s1288 + $0x2c] sm:$0xf]
        %v1320 = vld [vmem:[%s1288 + $0x30] sm:$0xf]
        %v1321 = vld [vmem:[%s1288 + $0x34] sm:$0xf]
        %v1322 = vld [vmem:[%s1288 + $0x38] sm:$0xf]
        %v1323 = vld [vmem:[%s1288 + $0x3c] sm:$0xf]
        %v1324 = vld [vmem:[%s1288 + $0x40] sm:$0xf]
        %v1325 = vld [vmem:[%s1288 + $0x44] sm:$0xf]
        %v1326 = vld [vmem:[%s1288 + $0x48] sm:$0xf]
        %v1327 = vld [vmem:[%s1288 + $0x4c] sm:$0xf]
        %v1328 = vld [vmem:[%s1288 + $0x50] sm:$0xf]
        %v1329 = vld [vmem:[%s1288 + $0x54] sm:$0xf]
        %v1330 = vld [vmem:[%s1288 + $0x58] sm:$0xf]
        %v1331 = vld [vmem:[%s1288 + $0x5c] sm:$0xf]
        %v1332 = vld [vmem:[%s1288 + $0x60] sm:$0xf]
        %v1333 = vld [vmem:[%s1288 + $0x64] sm:$0xf]
        %v1334 = vld [vmem:[%s1288 + $0x68] sm:$0xf]
        %v1335 = vld [vmem:[%s1288 + $0x6c] sm:$0xf]
        %v1336 = vld [vmem:[%s1288 + $0x70] sm:$0xf]
        %v1337 = vld [vmem:[%s1288 + $0x74] sm:$0xf]
        %v1338 = vld [vmem:[%s1288 + $0x78] sm:$0xf]
        %v1339 = vld [vmem:[%s1288 + $0x7c] sm:$0xf]
        %v1340 = vld [vmem:[%s1288 + $0x80] sm:$0xf]
        %v1341 = vld [vmem:[%s1288 + $0x84] sm:$0xf]
        %v1342 = vld [vmem:[%s1288 + $0x88] sm:$0xf]
        %v1343 = vld [vmem:[%s1288 + $0x8c] sm:$0xf]
        %v1344 = vld [vmem:[%s1288 + $0x90] sm:$0xf]
        %v1345 = vld [vmem:[%s1288 + $0x94] sm:$0xf]
        %v1346 = vld [vmem:[%s1288 + $0x98] sm:$0xf]
        %v1347 = vld [vmem:[%s1288 + $0x9c] sm:$0xf]
        %v1348 = vld [vmem:[%s1288 + $0xa0] sm:$0xf]
        %v1349 = vld [vmem:[%s1288 + $0xa4] sm:$0xf]
        %v1350 = vld [vmem:[%s1288 + $0xa8] sm:$0xf]
        %v1351 = vld [vmem:[%s1288 + $0xac] sm:$0xf]
        %v1352 = vld [vmem:[%s1288 + $0xb0] sm:$0xf]
        %v1353 = vld [vmem:[%s1288 + $0xb4] sm:$0xf]
        %v1354 = vld [vmem:[%s1288 + $0xb8] sm:$0xf]
        %v1355 = vld [vmem:[%s1288 + $0xbc] sm:$0xf]
        %v1356 = vld [vmem:[%s1288 + $0xc0] sm:$0xf]
        %v1357 = vld [vmem:[%s1288 + $0xc4] sm:$0xf]
        %v1358 = vld [vmem:[%s1288 + $0xc8] sm:$0xf]
        %v1359 = vld [vmem:[%s1288 + $0xcc] sm:$0xf]
        %v1360 = vld [vmem:[%s1288 + $0xd0] sm:$0xf]
        %v1361 = vld [vmem:[%s1288 + $0xd4] sm:$0xf]
        %v1362 = vld [vmem:[%s1288 + $0xd8] sm:$0xf]
        %v1363 = vld [vmem:[%s1288 + $0xdc] sm:$0xf]
        %v1364 = vld [vmem:[%s1288 + $0xe0] sm:$0xf]
        %v1365 = vld [vmem:[%s1288 + $0xe4] sm:$0xf]
        %v1366 = vld [vmem:[%s1288 + $0xe8] sm:$0xf]
        %v1367 = vld [vmem:[%s1288 + $0xec] sm:$0xf]
        %v1368 = vld [vmem:[%s1288 + $0xf0] sm:$0xf]
        %v1369 = vld [vmem:[%s1288 + $0xf4] sm:$0xf]
        %v1370 = vld [vmem:[%s1288 + $0xf8] sm:$0xf]
        %v1371 = vld [vmem:[%s1288 + $0xfc] sm:$0xf]
        %v1372 = vld [vmem:[%s1288 + $0x100] sm:$0xf]
        %v1373 = vld [vmem:[%s1288 + $0x104] sm:$0xf]
        %v1374 = vld [vmem:[%s1288 + $0x108] sm:$0xf]
        %v1375 = vld [vmem:[%s1288 + $0x10c] sm:$0xf]
        %v1376 = vld [vmem:[%s1288 + $0x110] sm:$0xf]
        %v1377 = vld [vmem:[%s1288 + $0x114] sm:$0xf]
        %v1378 = vld [vmem:[%s1288 + $0x118] sm:$0xf]
        %v1379 = vld [vmem:[%s1288 + $0x11c] sm:$0xf]
        %v1380 = vld [vmem:[%s1288 + $0x120] sm:$0xf]
        %v1381 = vld [vmem:[%s1288 + $0x124] sm:$0xf]
        %v1382 = vld [vmem:[%s1288 + $0x128] sm:$0xf]
        %v1383 = vld [vmem:[%s1288 + $0x12c] sm:$0xf]
        %v1384 = vld [vmem:[%s1288 + $0x130] sm:$0xf]
        %v1385 = vld [vmem:[%s1288 + $0x134] sm:$0xf]
        %v1386 = vld [vmem:[%s1288 + $0x138] sm:$0xf]
        %v1387 = vld [vmem:[%s1288 + $0x13c] sm:$0xf]
        %v1388 = vld [vmem:[%s1288 + $0x140] sm:$0xf]
        %v1389 = vld [vmem:[%s1288 + $0x144] sm:$0xf]
        %v1390 = vld [vmem:[%s1288 + $0x148] sm:$0xf]
        %v1391 = vld [vmem:[%s1288 + $0x14c] sm:$0xf]
        %v1392 = vld [vmem:[%s1288 + $0x150] sm:$0xf]
        %v1393 = vld [vmem:[%s1288 + $0x154] sm:$0xf]
        %v1394 = vld [vmem:[%s1288 + $0x158] sm:$0xf]
        %v1395 = vld [vmem:[%s1288 + $0x15c] sm:$0xf]
        %v1396 = vld [vmem:[%s1288 + $0x160] sm:$0xf]
        %v1397 = vld [vmem:[%s1288 + $0x164] sm:$0xf]
        %v1398 = vld [vmem:[%s1288 + $0x168] sm:$0xf]
        %v1399 = vld [vmem:[%s1288 + $0x16c] sm:$0xf]
        %v1400 = vld [vmem:[%s1288 + $0x170] sm:$0xf]
        %v1401 = vld [vmem:[%s1288 + $0x174] sm:$0xf]
        %v1402 = vld [vmem:[%s1288 + $0x178] sm:$0xf]
        %v1403 = vld [vmem:[%s1288 + $0x17c] sm:$0xf]
        %v1404 = vld [vmem:[%s1288 + $0x180] sm:$0xf]
        %v1405 = vld [vmem:[%s1288 + $0x184] sm:$0xf]
        %v1406 = vld [vmem:[%s1288 + $0x188] sm:$0xf]
        %v1407 = vld [vmem:[%s1288 + $0x18c] sm:$0xf]
        %v1408 = vld [vmem:[%s1288 + $0x190] sm:$0xf]
        %v1409 = vld [vmem:[%s1288 + $0x194] sm:$0xf]
        %v1410 = vld [vmem:[%s1288 + $0x198] sm:$0xf]
        %v1411 = vld [vmem:[%s1288 + $0x19c] sm:$0xf]
        %v1412 = vld [vmem:[%s1288 + $0x1a0] sm:$0xf]
        %v1413 = vld [vmem:[%s1288 + $0x1a4] sm:$0xf]
        %v1414 = vld [vmem:[%s1288 + $0x1a8] sm:$0xf]
        %v1415 = vld [vmem:[%s1288 + $0x1ac] sm:$0xf]
        %v1416 = vld [vmem:[%s1288 + $0x1b0] sm:$0xf]
        %v1417 = vld [vmem:[%s1288 + $0x1b4] sm:$0xf]
        %v1418 = vld [vmem:[%s1288 + $0x1b8] sm:$0xf]
        %v1419 = vld [vmem:[%s1288 + $0x1bc] sm:$0xf]
        %v1420 = vld [vmem:[%s1288 + $0x1c0] sm:$0xf]
        %v1421 = vld [vmem:[%s1288 + $0x1c4] sm:$0xf]
        %v1422 = vld [vmem:[%s1288 + $0x1c8] sm:$0xf]
        %v1423 = vld [vmem:[%s1288 + $0x1cc] sm:$0xf]
        %v1424 = vld [vmem:[%s1288 + $0x1d0] sm:$0xf]
        %v1425 = vld [vmem:[%s1288 + $0x1d4] sm:$0xf]
        %v1426 = vld [vmem:[%s1288 + $0x1d8] sm:$0xf]
        %v1427 = vld [vmem:[%s1288 + $0x1dc] sm:$0xf]
        %v1428 = vld [vmem:[%s1288 + $0x1e0] sm:$0xf]
        %v1429 = vld [vmem:[%s1288 + $0x1e4] sm:$0xf]
        %v1430 = vld [vmem:[%s1288 + $0x1e8] sm:$0xf]
        %v1431 = vld [vmem:[%s1288 + $0x1ec] sm:$0xf]
        %v1432 = vld [vmem:[%s1288 + $0x1f0] sm:$0xf]
        %v1433 = vld [vmem:[%s1288 + $0x1f4] sm:$0xf]
        %v1434 = vld [vmem:[%s1288 + $0x1f8] sm:$0xf]
        %v1435 = vld [vmem:[%s1288 + $0x1fc] sm:$0xf]
        %v1436 = vld [vmem:[%s1288 + $0x200] sm:$0xf]
        %v1437 = vld [vmem:[%s1288 + $0x204] sm:$0xf]
        %v1438 = vld [vmem:[%s1288 + $0x208] sm:$0xf]
        %v1439 = vld [vmem:[%s1288 + $0x20c] sm:$0xf]
        %v1440 = vld [vmem:[%s1288 + $0x210] sm:$0xf]
        %v1441 = vld [vmem:[%s1288 + $0x214] sm:$0xf]
        %v1442 = vld [vmem:[%s1288 + $0x218] sm:$0xf]
        %v1443 = vld [vmem:[%s1288 + $0x21c] sm:$0xf]
        %v1444 = vld [vmem:[%s1288 + $0x220] sm:$0xf]
        %v1445 = vld [vmem:[%s1288 + $0x224] sm:$0xf]
        %v1446 = vld [vmem:[%s1288 + $0x228] sm:$0xf]
        %v1447 = vld [vmem:[%s1288 + $0x22c] sm:$0xf]
        %v1448 = vld [vmem:[%s1288 + $0x230] sm:$0xf]
        %v1449 = vld [vmem:[%s1288 + $0x234] sm:$0xf]
        %v1450 = vld [vmem:[%s1288 + $0x238] sm:$0xf]
        %v1451 = vld [vmem:[%s1288 + $0x23c] sm:$0xf]
        %v1452 = vld [vmem:[%s1288 + $0x240] sm:$0xf]
        %v1453 = vld [vmem:[%s1288 + $0x244] sm:$0xf]
        %v1454 = vld [vmem:[%s1288 + $0x248] sm:$0xf]
        %v1455 = vld [vmem:[%s1288 + $0x24c] sm:$0xf]
        %v1456 = vld [vmem:[%s1288 + $0x250] sm:$0xf]
        %v1457 = vld [vmem:[%s1288 + $0x254] sm:$0xf]
        %v1458 = vld [vmem:[%s1288 + $0x258] sm:$0xf]
        %v1459 = vld [vmem:[%s1288 + $0x25c] sm:$0xf]
        %v1460 = vld [vmem:[%s1288 + $0x260] sm:$0xf]
        %v1461 = vld [vmem:[%s1288 + $0x264] sm:$0xf]
        %v1462 = vld [vmem:[%s1288 + $0x268] sm:$0xf]
        %v1463 = vld [vmem:[%s1288 + $0x26c] sm:$0xf]
        %v1464 = vld [vmem:[%s1288 + $0x270] sm:$0xf]
        %v1465 = vld [vmem:[%s1288 + $0x274] sm:$0xf]
        %v1466 = vld [vmem:[%s1288 + $0x278] sm:$0xf]
        %v1467 = vld [vmem:[%s1288 + $0x27c] sm:$0xf]
        %v1468 = vld [vmem:[%s1288 + $0x280] sm:$0xf]
        %v1469 = vld [vmem:[%s1288 + $0x284] sm:$0xf]
        %v1470 = vld [vmem:[%s1288 + $0x288] sm:$0xf]
        %v1471 = vld [vmem:[%s1288 + $0x28c] sm:$0xf]
        %v1472 = vld [vmem:[%s1288 + $0x290] sm:$0xf]
        %v1473 = vld [vmem:[%s1288 + $0x294] sm:$0xf]
        %v1474 = vld [vmem:[%s1288 + $0x298] sm:$0xf]
        %v1475 = vld [vmem:[%s1288 + $0x29c] sm:$0xf]
        %v1476 = vld [vmem:[%s1288 + $0x2a0] sm:$0xf]
        %v1477 = vld [vmem:[%s1288 + $0x2a4] sm:$0xf]
        %v1478 = vld [vmem:[%s1288 + $0x2a8] sm:$0xf]
        %v1479 = vld [vmem:[%s1288 + $0x2ac] sm:$0xf]
        %v1480 = vld [vmem:[%s1288 + $0x2b0] sm:$0xf]
        %v1481 = vld [vmem:[%s1288 + $0x2b4] sm:$0xf]
        %v1482 = vld [vmem:[%s1288 + $0x2b8] sm:$0xf]
        %v1483 = vld [vmem:[%s1288 + $0x2bc] sm:$0xf]
        %v1484 = vld [vmem:[%s1288 + $0x2c0] sm:$0xf]
        %v1485 = vld [vmem:[%s1288 + $0x2c4] sm:$0xf]
        %v1486 = vld [vmem:[%s1288 + $0x2c8] sm:$0xf]
        %v1487 = vld [vmem:[%s1288 + $0x2cc] sm:$0xf]
        %v1488 = vld [vmem:[%s1288 + $0x2d0] sm:$0xf]
        %v1489 = vld [vmem:[%s1288 + $0x2d4] sm:$0xf]
        %v1490 = vld [vmem:[%s1288 + $0x2d8] sm:$0xf]
        %v1491 = vld [vmem:[%s1288 + $0x2dc] sm:$0xf]
        %v1492 = vld [vmem:[%s1288 + $0x2e0] sm:$0xf]
        %v1493 = vld [vmem:[%s1288 + $0x2e4] sm:$0xf]
        %v1494 = vld [vmem:[%s1288 + $0x2e8] sm:$0xf]
        %v1495 = vld [vmem:[%s1288 + $0x2ec] sm:$0xf]
        %v1496 = vld [vmem:[%s1288 + $0x2f0] sm:$0xf]
        %v1497 = vld [vmem:[%s1288 + $0x2f4] sm:$0xf]
        %v1498 = vld [vmem:[%s1288 + $0x2f8] sm:$0xf]
        %v1499 = vld [vmem:[%s1288 + $0x2fc] sm:$0xf]
        %v1500 = vld [vmem:[%s1288 + $0x300] sm:$0xf]
        %v1501 = vld [vmem:[%s1288 + $0x304] sm:$0xf]
        %v1502 = vld [vmem:[%s1288 + $0x308] sm:$0xf]
        %v1503 = vld [vmem:[%s1288 + $0x30c] sm:$0xf]
        %v1504 = vld [vmem:[%s1288 + $0x310] sm:$0xf]
        %v1505 = vld [vmem:[%s1288 + $0x314] sm:$0xf]
        %v1506 = vld [vmem:[%s1288 + $0x318] sm:$0xf]
        %v1507 = vld [vmem:[%s1288 + $0x31c] sm:$0xf]
        %v1508 = vld [vmem:[%s1288 + $0x320] sm:$0xf]
        %v1509 = vld [vmem:[%s1288 + $0x324] sm:$0xf]
        %v1510 = vld [vmem:[%s1288 + $0x328] sm:$0xf]
        %v1511 = vld [vmem:[%s1288 + $0x32c] sm:$0xf]
        %v1512 = vld [vmem:[%s1288 + $0x330] sm:$0xf]
        %v1513 = vld [vmem:[%s1288 + $0x334] sm:$0xf]
        %v1514 = vld [vmem:[%s1288 + $0x338] sm:$0xf]
        %v1515 = vld [vmem:[%s1288 + $0x33c] sm:$0xf]
        %v1516 = vld [vmem:[%s1288 + $0x340] sm:$0xf]
        %v1517 = vld [vmem:[%s1288 + $0x344] sm:$0xf]
        %v1518 = vld [vmem:[%s1288 + $0x348] sm:$0xf]
        %v1519 = vld [vmem:[%s1288 + $0x34c] sm:$0xf]
        %v1520 = vld [vmem:[%s1288 + $0x350] sm:$0xf]
        %v1521 = vld [vmem:[%s1288 + $0x354] sm:$0xf]
        %v1522 = vld [vmem:[%s1288 + $0x358] sm:$0xf]
        %v1523 = vld [vmem:[%s1288 + $0x35c] sm:$0xf]
        %v1524 = vld [vmem:[%s1288 + $0x360] sm:$0xf]
        %v1525 = vld [vmem:[%s1288 + $0x364] sm:$0xf]
        %v1526 = vld [vmem:[%s1288 + $0x368] sm:$0xf]
        %v1527 = vld [vmem:[%s1288 + $0x36c] sm:$0xf]
        %v1528 = vld [vmem:[%s1288 + $0x370] sm:$0xf]
        %v1529 = vld [vmem:[%s1288 + $0x374] sm:$0xf]
        %v1530 = vld [vmem:[%s1288 + $0x378] sm:$0xf]
        %v1531 = vld [vmem:[%s1288 + $0x37c] sm:$0xf]
        %v1532 = vld [vmem:[%s1288 + $0x380] sm:$0xf]
        %v1533 = vld [vmem:[%s1288 + $0x384] sm:$0xf]
        %v1534 = vld [vmem:[%s1288 + $0x388] sm:$0xf]
        %v1535 = vld [vmem:[%s1288 + $0x38c] sm:$0xf]
        %v1536 = vld [vmem:[%s1288 + $0x390] sm:$0xf]
        %v1537 = vld [vmem:[%s1288 + $0x394] sm:$0xf]
        %v1538 = vld [vmem:[%s1288 + $0x398] sm:$0xf]
        %v1539 = vld [vmem:[%s1288 + $0x39c] sm:$0xf]
        %v1540 = vld [vmem:[%s1288 + $0x3a0] sm:$0xf]
        %v1541 = vld [vmem:[%s1288 + $0x3a4] sm:$0xf]
        %v1542 = vld [vmem:[%s1288 + $0x3a8] sm:$0xf]
        %v1543 = vld [vmem:[%s1288 + $0x3ac] sm:$0xf]
        %v1544 = vld [vmem:[%s1288 + $0x3b0] sm:$0xf]
        %v1545 = vld [vmem:[%s1288 + $0x3b4] sm:$0xf]
        %v1546 = vld [vmem:[%s1288 + $0x3b8] sm:$0xf]
        %v1547 = vld [vmem:[%s1288 + $0x3bc] sm:$0xf]
        %v1548 = vld [vmem:[%s1288 + $0x3c0] sm:$0xf]
        %v1549 = vld [vmem:[%s1288 + $0x3c4] sm:$0xf]
        %v1550 = vld [vmem:[%s1288 + $0x3c8] sm:$0xf]
        %v1551 = vld [vmem:[%s1288 + $0x3cc] sm:$0xf]
        %v1552 = vld [vmem:[%s1288 + $0x3d0] sm:$0xf]
        %v1553 = vld [vmem:[%s1288 + $0x3d4] sm:$0xf]
        %v1554 = vld [vmem:[%s1288 + $0x3d8] sm:$0xf]
        %v1555 = vld [vmem:[%s1288 + $0x3dc] sm:$0xf]
        %v1556 = vld [vmem:[%s1288 + $0x3e0] sm:$0xf]
        %v1557 = vld [vmem:[%s1288 + $0x3e4] sm:$0xf]
        %v1558 = vld [vmem:[%s1288 + $0x3e8] sm:$0xf]
        %v1559 = vld [vmem:[%s1288 + $0x3ec] sm:$0xf]
        %v1560 = vld [vmem:[%s1288 + $0x3f0] sm:$0xf]
        %v1561 = vld [vmem:[%s1288 + $0x3f4] sm:$0xf]
        %v1562 = vld [vmem:[%s1288 + $0x3f8] sm:$0xf]
        %v1563 = vld [vmem:[%s1288 + $0x3fc] sm:$0xf]
        %v1564 = vld [vmem:[%s1288 + $0x400] sm:$0xf]
        %v1565 = vld [vmem:[%s1288 + $0x404] sm:$0xf]
        %v1566 = vld [vmem:[%s1288 + $0x408] sm:$0xf]
        %v1567 = vld [vmem:[%s1288 + $0x40c] sm:$0xf]
        %v1568 = vld [vmem:[%s1288 + $0x410] sm:$0xf]
        %v1569 = vld [vmem:[%s1288 + $0x414] sm:$0xf]
        %v1570 = vld [vmem:[%s1288 + $0x418] sm:$0xf]
        %v1571 = vld [vmem:[%s1288 + $0x41c] sm:$0xf]
        %v1572 = vld [vmem:[%s1288 + $0x420] sm:$0xf]
        %v1573 = vld [vmem:[%s1288 + $0x424] sm:$0xf]
        %v1574 = vld [vmem:[%s1288 + $0x428] sm:$0xf]
        %v1575 = vld [vmem:[%s1288 + $0x42c] sm:$0xf]
        %v1576 = vld [vmem:[%s1288 + $0x430] sm:$0xf]
        %v1577 = vld [vmem:[%s1288 + $0x434] sm:$0xf]
        %v1578 = vld [vmem:[%s1288 + $0x438] sm:$0xf]
        %v1579 = vld [vmem:[%s1288 + $0x43c] sm:$0xf]
        %v1580 = vld [vmem:[%s1288 + $0x440] sm:$0xf]
        %v1581 = vld [vmem:[%s1288 + $0x444] sm:$0xf]
        %v1582 = vld [vmem:[%s1288 + $0x448] sm:$0xf]
        %v1583 = vld [vmem:[%s1288 + $0x44c] sm:$0xf]
        %v1584 = vld [vmem:[%s1288 + $0x450] sm:$0xf]
        %v1585 = vld [vmem:[%s1288 + $0x454] sm:$0xf]
        %v1586 = vld [vmem:[%s1288 + $0x458] sm:$0xf]
        %v1587 = vld [vmem:[%s1288 + $0x45c] sm:$0xf]
        %v1588 = vld [vmem:[%s1288 + $0x460] sm:$0xf]
        %v1589 = vld [vmem:[%s1288 + $0x464] sm:$0xf]
        %v1590 = vld [vmem:[%s1288 + $0x468] sm:$0xf]
        %v1591 = vld [vmem:[%s1288 + $0x46c] sm:$0xf]
        %v1592 = vld [vmem:[%s1288 + $0x470] sm:$0xf]
        %v1593 = vld [vmem:[%s1288 + $0x474] sm:$0xf]
        %v1594 = vld [vmem:[%s1288 + $0x478] sm:$0xf]
        %v1595 = vld [vmem:[%s1288 + $0x47c] sm:$0xf]
        %vm1596 = vcmask 519168
        %v1599 = vsel %vm1596, %v1308, 4286644096
        %v1602 = vsel %vm1596, %v1340, 4286644096
        %v1604 = vmax.bf16 %v1599, %v1602
        %v1606 = vsel %vm1596, %v1372, 4286644096
        %v1608 = vmax.bf16 %v1604, %v1606
        %v1610 = vsel %vm1596, %v1404, 4286644096
        %v1612 = vmax.bf16 %v1608, %v1610
        %v1614 = vsel %vm1596, %v1436, 4286644096
        %v1616 = vmax.bf16 %v1612, %v1614
        %v1618 = vsel %vm1596, %v1468, 4286644096
        %v1620 = vmax.bf16 %v1616, %v1618
        %v1622 = vsel %vm1596, %v1500, 4286644096
        %v1624 = vmax.bf16 %v1620, %v1622
        %v1626 = vsel %vm1596, %v1532, 4286644096
        %v1628 = vmax.bf16 %v1624, %v1626
        %v1630 = vsel %vm1596, %v1564, 4286644096
        %v1632 = vmax.bf16 %v1628, %v1630
        %v1634 = vsel %vm1596, %v1309, 4286644096
        %v1637 = vsel %vm1596, %v1341, 4286644096
        %v1639 = vmax.bf16 %v1634, %v1637
        %v1641 = vsel %vm1596, %v1373, 4286644096
        %v1643 = vmax.bf16 %v1639, %v1641
        %v1645 = vsel %vm1596, %v1405, 4286644096
        %v1647 = vmax.bf16 %v1643, %v1645
        %v1649 = vsel %vm1596, %v1437, 4286644096
        %v1651 = vmax.bf16 %v1647, %v1649
        %v1653 = vsel %vm1596, %v1469, 4286644096
        %v1655 = vmax.bf16 %v1651, %v1653
        %v1657 = vsel %vm1596, %v1501, 4286644096
        %v1659 = vmax.bf16 %v1655, %v1657
        %v1661 = vsel %vm1596, %v1533, 4286644096
        %v1663 = vmax.bf16 %v1659, %v1661
        %v1665 = vsel %vm1596, %v1565, 4286644096
        %v1667 = vmax.bf16 %v1663, %v1665
        %v1669 = vsel %vm1596, %v1310, 4286644096
        %v1672 = vsel %vm1596, %v1342, 4286644096
        %v1674 = vmax.bf16 %v1669, %v1672
        %v1676 = vsel %vm1596, %v1374, 4286644096
        %v1678 = vmax.bf16 %v1674, %v1676
        %v1680 = vsel %vm1596, %v1406, 4286644096
        %v1682 = vmax.bf16 %v1678, %v1680
        %v1684 = vsel %vm1596, %v1438, 4286644096
        %v1686 = vmax.bf16 %v1682, %v1684
        %v1688 = vsel %vm1596, %v1470, 4286644096
        %v1690 = vmax.bf16 %v1686, %v1688
        %v1692 = vsel %vm1596, %v1502, 4286644096
        %v1694 = vmax.bf16 %v1690, %v1692
        %v1696 = vsel %vm1596, %v1534, 4286644096
        %v1698 = vmax.bf16 %v1694, %v1696
        %v1700 = vsel %vm1596, %v1566, 4286644096
        %v1702 = vmax.bf16 %v1698, %v1700
        %v1704 = vsel %vm1596, %v1311, 4286644096
        %v1707 = vsel %vm1596, %v1343, 4286644096
        %v1709 = vmax.bf16 %v1704, %v1707
        %v1711 = vsel %vm1596, %v1375, 4286644096
        %v1713 = vmax.bf16 %v1709, %v1711
        %v1715 = vsel %vm1596, %v1407, 4286644096
        %v1717 = vmax.bf16 %v1713, %v1715
        %v1719 = vsel %vm1596, %v1439, 4286644096
        %v1721 = vmax.bf16 %v1717, %v1719
        %v1723 = vsel %vm1596, %v1471, 4286644096
        %v1725 = vmax.bf16 %v1721, %v1723
        %v1727 = vsel %vm1596, %v1503, 4286644096
        %v1729 = vmax.bf16 %v1725, %v1727
        %v1731 = vsel %vm1596, %v1535, 4286644096
        %v1733 = vmax.bf16 %v1729, %v1731
        %v1735 = vsel %vm1596, %v1567, 4286644096
        %v1737 = vmax.bf16 %v1733, %v1735
        %v1739 = vsel %vm1596, %v1312, 4286644096
        %v1742 = vsel %vm1596, %v1344, 4286644096
        %v1744 = vmax.bf16 %v1739, %v1742
        %v1746 = vsel %vm1596, %v1376, 4286644096
        %v1748 = vmax.bf16 %v1744, %v1746
        %v1750 = vsel %vm1596, %v1408, 4286644096
        %v1752 = vmax.bf16 %v1748, %v1750
        %v1754 = vsel %vm1596, %v1440, 4286644096
        %v1756 = vmax.bf16 %v1752, %v1754
        %v1758 = vsel %vm1596, %v1472, 4286644096
        %v1760 = vmax.bf16 %v1756, %v1758
        %v1762 = vsel %vm1596, %v1504, 4286644096
        %v1764 = vmax.bf16 %v1760, %v1762
        %v1766 = vsel %vm1596, %v1536, 4286644096
        %v1768 = vmax.bf16 %v1764, %v1766
        %v1770 = vsel %vm1596, %v1568, 4286644096
        %v1772 = vmax.bf16 %v1768, %v1770
        %v1774 = vsel %vm1596, %v1313, 4286644096
        %v1777 = vsel %vm1596, %v1345, 4286644096
        %v1779 = vmax.bf16 %v1774, %v1777
        %v1781 = vsel %vm1596, %v1377, 4286644096
        %v1783 = vmax.bf16 %v1779, %v1781
        %v1785 = vsel %vm1596, %v1409, 4286644096
        %v1787 = vmax.bf16 %v1783, %v1785
        %v1789 = vsel %vm1596, %v1441, 4286644096
        %v1791 = vmax.bf16 %v1787, %v1789
        %v1793 = vsel %vm1596, %v1473, 4286644096
        %v1795 = vmax.bf16 %v1791, %v1793
        %v1797 = vsel %vm1596, %v1505, 4286644096
        %v1799 = vmax.bf16 %v1795, %v1797
        %v1801 = vsel %vm1596, %v1537, 4286644096
        %v1803 = vmax.bf16 %v1799, %v1801
        %v1805 = vsel %vm1596, %v1569, 4286644096
        %v1807 = vmax.bf16 %v1803, %v1805
        %v1809 = vsel %vm1596, %v1314, 4286644096
        %v1812 = vsel %vm1596, %v1346, 4286644096
        %v1814 = vmax.bf16 %v1809, %v1812
        %v1816 = vsel %vm1596, %v1378, 4286644096
        %v1818 = vmax.bf16 %v1814, %v1816
        %v1820 = vsel %vm1596, %v1410, 4286644096
        %v1822 = vmax.bf16 %v1818, %v1820
        %v1824 = vsel %vm1596, %v1442, 4286644096
        %v1826 = vmax.bf16 %v1822, %v1824
        %v1828 = vsel %vm1596, %v1474, 4286644096
        %v1830 = vmax.bf16 %v1826, %v1828
        %v1832 = vsel %vm1596, %v1506, 4286644096
        %v1834 = vmax.bf16 %v1830, %v1832
        %v1836 = vsel %vm1596, %v1538, 4286644096
        %v1838 = vmax.bf16 %v1834, %v1836
        %v1840 = vsel %vm1596, %v1570, 4286644096
        %v1842 = vmax.bf16 %v1838, %v1840
        %v1844 = vsel %vm1596, %v1315, 4286644096
        %v1847 = vsel %vm1596, %v1347, 4286644096
        %v1849 = vmax.bf16 %v1844, %v1847
        %v1851 = vsel %vm1596, %v1379, 4286644096
        %v1853 = vmax.bf16 %v1849, %v1851
        %v1855 = vsel %vm1596, %v1411, 4286644096
        %v1857 = vmax.bf16 %v1853, %v1855
        %v1859 = vsel %vm1596, %v1443, 4286644096
        %v1861 = vmax.bf16 %v1857, %v1859
        %v1863 = vsel %vm1596, %v1475, 4286644096
        %v1865 = vmax.bf16 %v1861, %v1863
        %v1867 = vsel %vm1596, %v1507, 4286644096
        %v1869 = vmax.bf16 %v1865, %v1867
        %v1871 = vsel %vm1596, %v1539, 4286644096
        %v1873 = vmax.bf16 %v1869, %v1871
        %v1875 = vsel %vm1596, %v1571, 4286644096
        %v1877 = vmax.bf16 %v1873, %v1875
        %v1879 = vsel %vm1596, %v1316, 4286644096
        %v1882 = vsel %vm1596, %v1348, 4286644096
        %v1884 = vmax.bf16 %v1879, %v1882
        %v1886 = vsel %vm1596, %v1380, 4286644096
        %v1888 = vmax.bf16 %v1884, %v1886
        %v1890 = vsel %vm1596, %v1412, 4286644096
        %v1892 = vmax.bf16 %v1888, %v1890
        %v1894 = vsel %vm1596, %v1444, 4286644096
        %v1896 = vmax.bf16 %v1892, %v1894
        %v1898 = vsel %vm1596, %v1476, 4286644096
        %v1900 = vmax.bf16 %v1896, %v1898
        %v1902 = vsel %vm1596, %v1508, 4286644096
        %v1904 = vmax.bf16 %v1900, %v1902
        %v1906 = vsel %vm1596, %v1540, 4286644096
        %v1908 = vmax.bf16 %v1904, %v1906
        %v1910 = vsel %vm1596, %v1572, 4286644096
        %v1912 = vmax.bf16 %v1908, %v1910
        %v1914 = vsel %vm1596, %v1317, 4286644096
        %v1917 = vsel %vm1596, %v1349, 4286644096
        %v1919 = vmax.bf16 %v1914, %v1917
        %v1921 = vsel %vm1596, %v1381, 4286644096
        %v1923 = vmax.bf16 %v1919, %v1921
        %v1925 = vsel %vm1596, %v1413, 4286644096
        %v1927 = vmax.bf16 %v1923, %v1925
        %v1929 = vsel %vm1596, %v1445, 4286644096
        %v1931 = vmax.bf16 %v1927, %v1929
        %v1933 = vsel %vm1596, %v1477, 4286644096
        %v1935 = vmax.bf16 %v1931, %v1933
        %v1937 = vsel %vm1596, %v1509, 4286644096
        %v1939 = vmax.bf16 %v1935, %v1937
        %v1941 = vsel %vm1596, %v1541, 4286644096
        %v1943 = vmax.bf16 %v1939, %v1941
        %v1945 = vsel %vm1596, %v1573, 4286644096
        %v1947 = vmax.bf16 %v1943, %v1945
        %v1949 = vsel %vm1596, %v1318, 4286644096
        %v1952 = vsel %vm1596, %v1350, 4286644096
        %v1954 = vmax.bf16 %v1949, %v1952
        %v1956 = vsel %vm1596, %v1382, 4286644096
        %v1958 = vmax.bf16 %v1954, %v1956
        %v1960 = vsel %vm1596, %v1414, 4286644096
        %v1962 = vmax.bf16 %v1958, %v1960
        %v1964 = vsel %vm1596, %v1446, 4286644096
        %v1966 = vmax.bf16 %v1962, %v1964
        %v1968 = vsel %vm1596, %v1478, 4286644096
        %v1970 = vmax.bf16 %v1966, %v1968
        %v1972 = vsel %vm1596, %v1510, 4286644096
        %v1974 = vmax.bf16 %v1970, %v1972
        %v1976 = vsel %vm1596, %v1542, 4286644096
        %v1978 = vmax.bf16 %v1974, %v1976
        %v1980 = vsel %vm1596, %v1574, 4286644096
        %v1982 = vmax.bf16 %v1978, %v1980
        %v1984 = vsel %vm1596, %v1319, 4286644096
        %v1987 = vsel %vm1596, %v1351, 4286644096
        %v1989 = vmax.bf16 %v1984, %v1987
        %v1991 = vsel %vm1596, %v1383, 4286644096
        %v1993 = vmax.bf16 %v1989, %v1991
        %v1995 = vsel %vm1596, %v1415, 4286644096
        %v1997 = vmax.bf16 %v1993, %v1995
        %v1999 = vsel %vm1596, %v1447, 4286644096
        %v2001 = vmax.bf16 %v1997, %v1999
        %v2003 = vsel %vm1596, %v1479, 4286644096
        %v2005 = vmax.bf16 %v2001, %v2003
        %v2007 = vsel %vm1596, %v1511, 4286644096
        %v2009 = vmax.bf16 %v2005, %v2007
        %v2011 = vsel %vm1596, %v1543, 4286644096
        %v2013 = vmax.bf16 %v2009, %v2011
        %v2015 = vsel %vm1596, %v1575, 4286644096
        %v2017 = vmax.bf16 %v2013, %v2015
        %v2019 = vsel %vm1596, %v1320, 4286644096
        %v2022 = vsel %vm1596, %v1352, 4286644096
        %v2024 = vmax.bf16 %v2019, %v2022
        %v2026 = vsel %vm1596, %v1384, 4286644096
        %v2028 = vmax.bf16 %v2024, %v2026
        %v2030 = vsel %vm1596, %v1416, 4286644096
        %v2032 = vmax.bf16 %v2028, %v2030
        %v2034 = vsel %vm1596, %v1448, 4286644096
        %v2036 = vmax.bf16 %v2032, %v2034
        %v2038 = vsel %vm1596, %v1480, 4286644096
        %v2040 = vmax.bf16 %v2036, %v2038
        %v2042 = vsel %vm1596, %v1512, 4286644096
        %v2044 = vmax.bf16 %v2040, %v2042
        %v2046 = vsel %vm1596, %v1544, 4286644096
        %v2048 = vmax.bf16 %v2044, %v2046
        %v2050 = vsel %vm1596, %v1576, 4286644096
        %v2052 = vmax.bf16 %v2048, %v2050
        %v2054 = vsel %vm1596, %v1321, 4286644096
        %v2057 = vsel %vm1596, %v1353, 4286644096
        %v2059 = vmax.bf16 %v2054, %v2057
        %v2061 = vsel %vm1596, %v1385, 4286644096
        %v2063 = vmax.bf16 %v2059, %v2061
        %v2065 = vsel %vm1596, %v1417, 4286644096
        %v2067 = vmax.bf16 %v2063, %v2065
        %v2069 = vsel %vm1596, %v1449, 4286644096
        %v2071 = vmax.bf16 %v2067, %v2069
        %v2073 = vsel %vm1596, %v1481, 4286644096
        %v2075 = vmax.bf16 %v2071, %v2073
        %v2077 = vsel %vm1596, %v1513, 4286644096
        %v2079 = vmax.bf16 %v2075, %v2077
        %v2081 = vsel %vm1596, %v1545, 4286644096
        %v2083 = vmax.bf16 %v2079, %v2081
        %v2085 = vsel %vm1596, %v1577, 4286644096
        %v2087 = vmax.bf16 %v2083, %v2085
        %v2089 = vsel %vm1596, %v1322, 4286644096
        %v2092 = vsel %vm1596, %v1354, 4286644096
        %v2094 = vmax.bf16 %v2089, %v2092
        %v2096 = vsel %vm1596, %v1386, 4286644096
        %v2098 = vmax.bf16 %v2094, %v2096
        %v2100 = vsel %vm1596, %v1418, 4286644096
        %v2102 = vmax.bf16 %v2098, %v2100
        %v2104 = vsel %vm1596, %v1450, 4286644096
        %v2106 = vmax.bf16 %v2102, %v2104
        %v2108 = vsel %vm1596, %v1482, 4286644096
        %v2110 = vmax.bf16 %v2106, %v2108
        %v2112 = vsel %vm1596, %v1514, 4286644096
        %v2114 = vmax.bf16 %v2110, %v2112
        %v2116 = vsel %vm1596, %v1546, 4286644096
        %v2118 = vmax.bf16 %v2114, %v2116
        %v2120 = vsel %vm1596, %v1578, 4286644096
        %v2122 = vmax.bf16 %v2118, %v2120
        %v2124 = vsel %vm1596, %v1323, 4286644096
        %v2127 = vsel %vm1596, %v1355, 4286644096
        %v2129 = vmax.bf16 %v2124, %v2127
        %v2131 = vsel %vm1596, %v1387, 4286644096
        %v2133 = vmax.bf16 %v2129, %v2131
        %v2135 = vsel %vm1596, %v1419, 4286644096
        %v2137 = vmax.bf16 %v2133, %v2135
        %v2139 = vsel %vm1596, %v1451, 4286644096
        %v2141 = vmax.bf16 %v2137, %v2139
        %v2143 = vsel %vm1596, %v1483, 4286644096
        %v2145 = vmax.bf16 %v2141, %v2143
        %v2147 = vsel %vm1596, %v1515, 4286644096
        %v2149 = vmax.bf16 %v2145, %v2147
        %v2151 = vsel %vm1596, %v1547, 4286644096
        %v2153 = vmax.bf16 %v2149, %v2151
        %v2155 = vsel %vm1596, %v1579, 4286644096
        %v2157 = vmax.bf16 %v2153, %v2155
        %v2159 = vsel %vm1596, %v1324, 4286644096
        %v2162 = vsel %vm1596, %v1356, 4286644096
        %v2164 = vmax.bf16 %v2159, %v2162
        %v2166 = vsel %vm1596, %v1388, 4286644096
        %v2168 = vmax.bf16 %v2164, %v2166
        %v2170 = vsel %vm1596, %v1420, 4286644096
        %v2172 = vmax.bf16 %v2168, %v2170
        %v2174 = vsel %vm1596, %v1452, 4286644096
        %v2176 = vmax.bf16 %v2172, %v2174
        %v2178 = vsel %vm1596, %v1484, 4286644096
        %v2180 = vmax.bf16 %v2176, %v2178
        %v2182 = vsel %vm1596, %v1516, 4286644096
        %v2184 = vmax.bf16 %v2180, %v2182
        %v2186 = vsel %vm1596, %v1548, 4286644096
        %v2188 = vmax.bf16 %v2184, %v2186
        %v2190 = vsel %vm1596, %v1580, 4286644096
        %v2192 = vmax.bf16 %v2188, %v2190
        %v2194 = vsel %vm1596, %v1325, 4286644096
        %v2197 = vsel %vm1596, %v1357, 4286644096
        %v2199 = vmax.bf16 %v2194, %v2197
        %v2201 = vsel %vm1596, %v1389, 4286644096
        %v2203 = vmax.bf16 %v2199, %v2201
        %v2205 = vsel %vm1596, %v1421, 4286644096
        %v2207 = vmax.bf16 %v2203, %v2205
        %v2209 = vsel %vm1596, %v1453, 4286644096
        %v2211 = vmax.bf16 %v2207, %v2209
        %v2213 = vsel %vm1596, %v1485, 4286644096
        %v2215 = vmax.bf16 %v2211, %v2213
        %v2217 = vsel %vm1596, %v1517, 4286644096
        %v2219 = vmax.bf16 %v2215, %v2217
        %v2221 = vsel %vm1596, %v1549, 4286644096
        %v2223 = vmax.bf16 %v2219, %v2221
        %v2225 = vsel %vm1596, %v1581, 4286644096
        %v2227 = vmax.bf16 %v2223, %v2225
        %v2229 = vsel %vm1596, %v1326, 4286644096
        %v2232 = vsel %vm1596, %v1358, 4286644096
        %v2234 = vmax.bf16 %v2229, %v2232
        %v2236 = vsel %vm1596, %v1390, 4286644096
        %v2238 = vmax.bf16 %v2234, %v2236
        %v2240 = vsel %vm1596, %v1422, 4286644096
        %v2242 = vmax.bf16 %v2238, %v2240
        %v2244 = vsel %vm1596, %v1454, 4286644096
        %v2246 = vmax.bf16 %v2242, %v2244
        %v2248 = vsel %vm1596, %v1486, 4286644096
        %v2250 = vmax.bf16 %v2246, %v2248
        %v2252 = vsel %vm1596, %v1518, 4286644096
        %v2254 = vmax.bf16 %v2250, %v2252
        %v2256 = vsel %vm1596, %v1550, 4286644096
        %v2258 = vmax.bf16 %v2254, %v2256
        %v2260 = vsel %vm1596, %v1582, 4286644096
        %v2262 = vmax.bf16 %v2258, %v2260
        %v2264 = vsel %vm1596, %v1327, 4286644096
        %v2267 = vsel %vm1596, %v1359, 4286644096
        %v2269 = vmax.bf16 %v2264, %v2267
        %v2271 = vsel %vm1596, %v1391, 4286644096
        %v2273 = vmax.bf16 %v2269, %v2271
        %v2275 = vsel %vm1596, %v1423, 4286644096
        %v2277 = vmax.bf16 %v2273, %v2275
        %v2279 = vsel %vm1596, %v1455, 4286644096
        %v2281 = vmax.bf16 %v2277, %v2279
        %v2283 = vsel %vm1596, %v1487, 4286644096
        %v2285 = vmax.bf16 %v2281, %v2283
        %v2287 = vsel %vm1596, %v1519, 4286644096
        %v2289 = vmax.bf16 %v2285, %v2287
        %v2291 = vsel %vm1596, %v1551, 4286644096
        %v2293 = vmax.bf16 %v2289, %v2291
        %v2295 = vsel %vm1596, %v1583, 4286644096
        %v2297 = vmax.bf16 %v2293, %v2295
        %v2299 = vsel %vm1596, %v1328, 4286644096
        %v2302 = vsel %vm1596, %v1360, 4286644096
        %v2304 = vmax.bf16 %v2299, %v2302
        %v2306 = vsel %vm1596, %v1392, 4286644096
        %v2308 = vmax.bf16 %v2304, %v2306
        %v2310 = vsel %vm1596, %v1424, 4286644096
        %v2312 = vmax.bf16 %v2308, %v2310
        %v2314 = vsel %vm1596, %v1456, 4286644096
        %v2316 = vmax.bf16 %v2312, %v2314
        %v2318 = vsel %vm1596, %v1488, 4286644096
        %v2320 = vmax.bf16 %v2316, %v2318
        %v2322 = vsel %vm1596, %v1520, 4286644096
        %v2324 = vmax.bf16 %v2320, %v2322
        %v2326 = vsel %vm1596, %v1552, 4286644096
        %v2328 = vmax.bf16 %v2324, %v2326
        %v2330 = vsel %vm1596, %v1584, 4286644096
        %v2332 = vmax.bf16 %v2328, %v2330
        %v2334 = vsel %vm1596, %v1329, 4286644096
        %v2337 = vsel %vm1596, %v1361, 4286644096
        %v2339 = vmax.bf16 %v2334, %v2337
        %v2341 = vsel %vm1596, %v1393, 4286644096
        %v2343 = vmax.bf16 %v2339, %v2341
        %v2345 = vsel %vm1596, %v1425, 4286644096
        %v2347 = vmax.bf16 %v2343, %v2345
        %v2349 = vsel %vm1596, %v1457, 4286644096
        %v2351 = vmax.bf16 %v2347, %v2349
        %v2353 = vsel %vm1596, %v1489, 4286644096
        %v2355 = vmax.bf16 %v2351, %v2353
        %v2357 = vsel %vm1596, %v1521, 4286644096
        %v2359 = vmax.bf16 %v2355, %v2357
        %v2361 = vsel %vm1596, %v1553, 4286644096
        %v2363 = vmax.bf16 %v2359, %v2361
        %v2365 = vsel %vm1596, %v1585, 4286644096
        %v2367 = vmax.bf16 %v2363, %v2365
        %v2369 = vsel %vm1596, %v1330, 4286644096
        %v2372 = vsel %vm1596, %v1362, 4286644096
        %v2374 = vmax.bf16 %v2369, %v2372
        %v2376 = vsel %vm1596, %v1394, 4286644096
        %v2378 = vmax.bf16 %v2374, %v2376
        %v2380 = vsel %vm1596, %v1426, 4286644096
        %v2382 = vmax.bf16 %v2378, %v2380
        %v2384 = vsel %vm1596, %v1458, 4286644096
        %v2386 = vmax.bf16 %v2382, %v2384
        %v2388 = vsel %vm1596, %v1490, 4286644096
        %v2390 = vmax.bf16 %v2386, %v2388
        %v2392 = vsel %vm1596, %v1522, 4286644096
        %v2394 = vmax.bf16 %v2390, %v2392
        %v2396 = vsel %vm1596, %v1554, 4286644096
        %v2398 = vmax.bf16 %v2394, %v2396
        %v2400 = vsel %vm1596, %v1586, 4286644096
        %v2402 = vmax.bf16 %v2398, %v2400
        %v2404 = vsel %vm1596, %v1331, 4286644096
        %v2407 = vsel %vm1596, %v1363, 4286644096
        %v2409 = vmax.bf16 %v2404, %v2407
        %v2411 = vsel %vm1596, %v1395, 4286644096
        %v2413 = vmax.bf16 %v2409, %v2411
        %v2415 = vsel %vm1596, %v1427, 4286644096
        %v2417 = vmax.bf16 %v2413, %v2415
        %v2419 = vsel %vm1596, %v1459, 4286644096
        %v2421 = vmax.bf16 %v2417, %v2419
        %v2423 = vsel %vm1596, %v1491, 4286644096
        %v2425 = vmax.bf16 %v2421, %v2423
        %v2427 = vsel %vm1596, %v1523, 4286644096
        %v2429 = vmax.bf16 %v2425, %v2427
        %v2431 = vsel %vm1596, %v1555, 4286644096
        %v2433 = vmax.bf16 %v2429, %v2431
        %v2435 = vsel %vm1596, %v1587, 4286644096
        %v2437 = vmax.bf16 %v2433, %v2435
        %v2439 = vsel %vm1596, %v1332, 4286644096
        %v2442 = vsel %vm1596, %v1364, 4286644096
        %v2444 = vmax.bf16 %v2439, %v2442
        %v2446 = vsel %vm1596, %v1396, 4286644096
        %v2448 = vmax.bf16 %v2444, %v2446
        %v2450 = vsel %vm1596, %v1428, 4286644096
        %v2452 = vmax.bf16 %v2448, %v2450
        %v2454 = vsel %vm1596, %v1460, 4286644096
        %v2456 = vmax.bf16 %v2452, %v2454
        %v2458 = vsel %vm1596, %v1492, 4286644096
        %v2460 = vmax.bf16 %v2456, %v2458
        %v2462 = vsel %vm1596, %v1524, 4286644096
        %v2464 = vmax.bf16 %v2460, %v2462
        %v2466 = vsel %vm1596, %v1556, 4286644096
        %v2468 = vmax.bf16 %v2464, %v2466
        %v2470 = vsel %vm1596, %v1588, 4286644096
        %v2472 = vmax.bf16 %v2468, %v2470
        %v2474 = vsel %vm1596, %v1333, 4286644096
        %v2477 = vsel %vm1596, %v1365, 4286644096
        %v2479 = vmax.bf16 %v2474, %v2477
        %v2481 = vsel %vm1596, %v1397, 4286644096
        %v2483 = vmax.bf16 %v2479, %v2481
        %v2485 = vsel %vm1596, %v1429, 4286644096
        %v2487 = vmax.bf16 %v2483, %v2485
        %v2489 = vsel %vm1596, %v1461, 4286644096
        %v2491 = vmax.bf16 %v2487, %v2489
        %v2493 = vsel %vm1596, %v1493, 4286644096
        %v2495 = vmax.bf16 %v2491, %v2493
        %v2497 = vsel %vm1596, %v1525, 4286644096
        %v2499 = vmax.bf16 %v2495, %v2497
        %v2501 = vsel %vm1596, %v1557, 4286644096
        %v2503 = vmax.bf16 %v2499, %v2501
        %v2505 = vsel %vm1596, %v1589, 4286644096
        %v2507 = vmax.bf16 %v2503, %v2505
        %v2509 = vsel %vm1596, %v1334, 4286644096
        %v2512 = vsel %vm1596, %v1366, 4286644096
        %v2514 = vmax.bf16 %v2509, %v2512
        %v2516 = vsel %vm1596, %v1398, 4286644096
        %v2518 = vmax.bf16 %v2514, %v2516
        %v2520 = vsel %vm1596, %v1430, 4286644096
        %v2522 = vmax.bf16 %v2518, %v2520
        %v2524 = vsel %vm1596, %v1462, 4286644096
        %v2526 = vmax.bf16 %v2522, %v2524
        %v2528 = vsel %vm1596, %v1494, 4286644096
        %v2530 = vmax.bf16 %v2526, %v2528
        %v2532 = vsel %vm1596, %v1526, 4286644096
        %v2534 = vmax.bf16 %v2530, %v2532
        %v2536 = vsel %vm1596, %v1558, 4286644096
        %v2538 = vmax.bf16 %v2534, %v2536
        %v2540 = vsel %vm1596, %v1590, 4286644096
        %v2542 = vmax.bf16 %v2538, %v2540
        %v2544 = vsel %vm1596, %v1335, 4286644096
        %v2547 = vsel %vm1596, %v1367, 4286644096
        %v2549 = vmax.bf16 %v2544, %v2547
        %v2551 = vsel %vm1596, %v1399, 4286644096
        %v2553 = vmax.bf16 %v2549, %v2551
        %v2555 = vsel %vm1596, %v1431, 4286644096
        %v2557 = vmax.bf16 %v2553, %v2555
        %v2559 = vsel %vm1596, %v1463, 4286644096
        %v2561 = vmax.bf16 %v2557, %v2559
        %v2563 = vsel %vm1596, %v1495, 4286644096
        %v2565 = vmax.bf16 %v2561, %v2563
        %v2567 = vsel %vm1596, %v1527, 4286644096
        %v2569 = vmax.bf16 %v2565, %v2567
        %v2571 = vsel %vm1596, %v1559, 4286644096
        %v2573 = vmax.bf16 %v2569, %v2571
        %v2575 = vsel %vm1596, %v1591, 4286644096
        %v2577 = vmax.bf16 %v2573, %v2575
        %v2579 = vsel %vm1596, %v1336, 4286644096
        %v2582 = vsel %vm1596, %v1368, 4286644096
        %v2584 = vmax.bf16 %v2579, %v2582
        %v2586 = vsel %vm1596, %v1400, 4286644096
        %v2588 = vmax.bf16 %v2584, %v2586
        %v2590 = vsel %vm1596, %v1432, 4286644096
        %v2592 = vmax.bf16 %v2588, %v2590
        %v2594 = vsel %vm1596, %v1464, 4286644096
        %v2596 = vmax.bf16 %v2592, %v2594
        %v2598 = vsel %vm1596, %v1496, 4286644096
        %v2600 = vmax.bf16 %v2596, %v2598
        %v2602 = vsel %vm1596, %v1528, 4286644096
        %v2604 = vmax.bf16 %v2600, %v2602
        %v2606 = vsel %vm1596, %v1560, 4286644096
        %v2608 = vmax.bf16 %v2604, %v2606
        %v2610 = vsel %vm1596, %v1592, 4286644096
        %v2612 = vmax.bf16 %v2608, %v2610
        %v2614 = vsel %vm1596, %v1337, 4286644096
        %v2617 = vsel %vm1596, %v1369, 4286644096
        %v2619 = vmax.bf16 %v2614, %v2617
        %v2621 = vsel %vm1596, %v1401, 4286644096
        %v2623 = vmax.bf16 %v2619, %v2621
        %v2625 = vsel %vm1596, %v1433, 4286644096
        %v2627 = vmax.bf16 %v2623, %v2625
        %v2629 = vsel %vm1596, %v1465, 4286644096
        %v2631 = vmax.bf16 %v2627, %v2629
        %v2633 = vsel %vm1596, %v1497, 4286644096
        %v2635 = vmax.bf16 %v2631, %v2633
        %v2637 = vsel %vm1596, %v1529, 4286644096
        %v2639 = vmax.bf16 %v2635, %v2637
        %v2641 = vsel %vm1596, %v1561, 4286644096
        %v2643 = vmax.bf16 %v2639, %v2641
        %v2645 = vsel %vm1596, %v1593, 4286644096
        %v2647 = vmax.bf16 %v2643, %v2645
        %v2649 = vsel %vm1596, %v1338, 4286644096
        %v2652 = vsel %vm1596, %v1370, 4286644096
        %v2654 = vmax.bf16 %v2649, %v2652
        %v2656 = vsel %vm1596, %v1402, 4286644096
        %v2658 = vmax.bf16 %v2654, %v2656
        %v2660 = vsel %vm1596, %v1434, 4286644096
        %v2662 = vmax.bf16 %v2658, %v2660
        %v2664 = vsel %vm1596, %v1466, 4286644096
        %v2666 = vmax.bf16 %v2662, %v2664
        %v2668 = vsel %vm1596, %v1498, 4286644096
        %v2670 = vmax.bf16 %v2666, %v2668
        %v2672 = vsel %vm1596, %v1530, 4286644096
        %v2674 = vmax.bf16 %v2670, %v2672
        %v2676 = vsel %vm1596, %v1562, 4286644096
        %v2678 = vmax.bf16 %v2674, %v2676
        %v2680 = vsel %vm1596, %v1594, 4286644096
        %v2682 = vmax.bf16 %v2678, %v2680
        %v2684 = vsel %vm1596, %v1339, 4286644096
        %v2687 = vsel %vm1596, %v1371, 4286644096
        %v2689 = vmax.bf16 %v2684, %v2687
        %v2691 = vsel %vm1596, %v1403, 4286644096
        %v2693 = vmax.bf16 %v2689, %v2691
        %v2695 = vsel %vm1596, %v1435, 4286644096
        %v2697 = vmax.bf16 %v2693, %v2695
        %v2699 = vsel %vm1596, %v1467, 4286644096
        %v2701 = vmax.bf16 %v2697, %v2699
        %v2703 = vsel %vm1596, %v1499, 4286644096
        %v2705 = vmax.bf16 %v2701, %v2703
        %v2707 = vsel %vm1596, %v1531, 4286644096
        %v2709 = vmax.bf16 %v2705, %v2707
        %v2711 = vsel %vm1596, %v1563, 4286644096
        %v2713 = vmax.bf16 %v2709, %v2711
        %v2715 = vsel %vm1596, %v1595, 4286644096
        %v2717 = vmax.bf16 %v2713, %v2715
        %2718 = vst.msk [vmem:[%s1304] sm:$0xf] %vm1596, %v1632
        %2719 = vst.msk [vmem:[%s1304 + $0x4] sm:$0xf] %vm1596, %v1667
        %2720 = vst.msk [vmem:[%s1304 + $0x8] sm:$0xf] %vm1596, %v1702
        %2721 = vst.msk [vmem:[%s1304 + $0xc] sm:$0xf] %vm1596, %v1737
        %2722 = vst.msk [vmem:[%s1304 + $0x10] sm:$0xf] %vm1596, %v1772
        %2723 = vst.msk [vmem:[%s1304 + $0x14] sm:$0xf] %vm1596, %v1807
        %2724 = vst.msk [vmem:[%s1304 + $0x18] sm:$0xf] %vm1596, %v1842
        %2725 = vst.msk [vmem:[%s1304 + $0x1c] sm:$0xf] %vm1596, %v1877
        %2726 = vst.msk [vmem:[%s1304 + $0x20] sm:$0xf] %vm1596, %v1912
        %2727 = vst.msk [vmem:[%s1304 + $0x24] sm:$0xf] %vm1596, %v1947
        %2728 = vst.msk [vmem:[%s1304 + $0x28] sm:$0xf] %vm1596, %v1982
        %2729 = vst.msk [vmem:[%s1304 + $0x2c] sm:$0xf] %vm1596, %v2017
        %2730 = vst.msk [vmem:[%s1304 + $0x30] sm:$0xf] %vm1596, %v2052
        %2731 = vst.msk [vmem:[%s1304 + $0x34] sm:$0xf] %vm1596, %v2087
        %2732 = vst.msk [vmem:[%s1304 + $0x38] sm:$0xf] %vm1596, %v2122
        %2733 = vst.msk [vmem:[%s1304 + $0x3c] sm:$0xf] %vm1596, %v2157
        %2734 = vst.msk [vmem:[%s1304 + $0x40] sm:$0xf] %vm1596, %v2192
        %2735 = vst.msk [vmem:[%s1304 + $0x44] sm:$0xf] %vm1596, %v2227
        %2736 = vst.msk [vmem:[%s1304 + $0x48] sm:$0xf] %vm1596, %v2262
        %2737 = vst.msk [vmem:[%s1304 + $0x4c] sm:$0xf] %vm1596, %v2297
        %2738 = vst.msk [vmem:[%s1304 + $0x50] sm:$0xf] %vm1596, %v2332
        %2739 = vst.msk [vmem:[%s1304 + $0x54] sm:$0xf] %vm1596, %v2367
        %2740 = vst.msk [vmem:[%s1304 + $0x58] sm:$0xf] %vm1596, %v2402
        %2741 = vst.msk [vmem:[%s1304 + $0x5c] sm:$0xf] %vm1596, %v2437
        %2742 = vst.msk [vmem:[%s1304 + $0x60] sm:$0xf] %vm1596, %v2472
        %2743 = vst.msk [vmem:[%s1304 + $0x64] sm:$0xf] %vm1596, %v2507
        %2744 = vst.msk [vmem:[%s1304 + $0x68] sm:$0xf] %vm1596, %v2542
        %2745 = vst.msk [vmem:[%s1304 + $0x6c] sm:$0xf] %vm1596, %v2577
        %2746 = vst.msk [vmem:[%s1304 + $0x70] sm:$0xf] %vm1596, %v2612
        %2747 = vst.msk [vmem:[%s1304 + $0x74] sm:$0xf] %vm1596, %v2647
        %2748 = vst.msk [vmem:[%s1304 + $0x78] sm:$0xf] %vm1596, %v2682
        %2749 = vst.msk [vmem:[%s1304 + $0x7c] sm:$0xf] %vm1596, %v2717
        %s2750 = sand.u32 %s49, 1
        %s2751 = scalar_lea.sflag [#allocation4], %s2750
        %s2752 = sand.u32 %s49, 1
        %s2753 = smul.addr %s2752, 128
        %s2754 = scalar_lea.vmem [#allocation3], %s2753
        // Predicated region
        $region66: #{_stem.3} parent=60 // pred_check
          %p2755 = pneg %p59
        $region67: #{_stem.3} parent=60 // pred_check_branch
          %2757 = sbr.rel (%p2755) target = $region69
        $region68: #{_stem.3} parent=60 // pred_region
          %s2758 = smul.u32 32, %s15
          %s2760 = ssub.s32 2048, 2048
          %2761 = vsyncadd %s2751, %s2760
          %s2762 = smul.addr %s2758, 64
          %s2763 = scalar_lea.hbm %s1, %s2762
          %s2764 = sshll.u32 %s2754, 4
          %s2765 = int_to_ptr.vmem [resolvable:$true] %s2764
          %2770 = dma.vmem_to_hbm [thread:$0]  %s2765, 2048, %s2763, %s2751, 64, 64, 4
        $region69: #{_stem.3} parent=60 // pred_fallthru
          _
      $region61: #{_stem.3} parent=5 // pred_fallthru
        _
      %p2771 = scmp.le.s32.totalorder 2, %s10
      // Predicated region
      $region70: #{_stem.3} parent=5 // pred_check
        %p2772 = pneg %p2771
      $region71: #{_stem.3} parent=5 // pred_check_branch
        %2774 = sbr.rel (%p2772) target = $region73
      $region72: #{_stem.3} parent=5 // pred_region
        %s2775 = ssub.s32 %s10, 2
        // Predicated region
        $region74: #{_stem.3} parent=72 // pred_check
          %p2776 = pneg %p65
        $region75: #{_stem.3} parent=72 // pred_check_branch
          %2778 = sbr.rel (%p2776) target = $region77
        $region76: #{_stem.3} parent=72 // pred_region
          %s2779 = sand.u32 %s50, 1
          %s2780 = scalar_lea.sflag [#allocation4], %s2779
          %s2781 = sand.u32 %s50, 1
          %s2782 = smul.addr %s2781, 128
          %s2783 = scalar_lea.vmem [#allocation3], %s2782
          %2784 = dma.done %s2780, 2048
        $region77: #{_stem.3} parent=72 // pred_fallthru
          _
      $region73: #{_stem.3} parent=5 // pred_fallthru
        _
    $region6: #{_stem.3} parent=1 // loop_footer
      %s14 = sadd.s32 1, %s10
    $region7: #{_stem.3} parent=1 // loop_footer_branch
      %9 = sbr.rel target = $region3
    $region8: #{_stem.3} parent=1 // loop_exit
      _
    %2785 = vsyncpa [#allocation4], 1
    %s2786 = scalar_lea.sflag [#allocation4], 1
    %2787 = vsyncpa %s2786, 1

</llo_original>
